<compile_context>
chip_gen: v6e
topology: v6e:2x2x1
jax: 0.10.0
libtpu: 0.0.40
codegen_flags: <defaults>
</compile_context>

<pallas_src>
import math

import jax
import jax.numpy as jnp
from jax import lax
from jax.experimental import pallas as pl
from jax.experimental.pallas import tpu as pltpu

REG_MAX = 16
EPS = 1e-7   # torchvision complete_box_iou eps
LANE = 128
SUB = 8


def _round_up(x, m):
    return ((x + m - 1) // m) * m


def _rcp(x):
    """1/x: EUP approx reciprocal + one Newton-Raphson step (~1e-7 rel err)."""
    r = pl.reciprocal(x, approx=True)
    return r * (2.0 - x * r)


def _atan(x):
    """Cephes-style single-precision arctangent from VPU/EUP-friendly ops
    (jnp.arctan has no guaranteed Mosaic lowering); accurate to ~1e-7."""
    sign = jnp.where(x < 0.0, -1.0, 1.0).astype(x.dtype)
    ax = jnp.abs(x)
    tan3pio8 = 2.414213562373095
    tan_pio8 = 0.41421356237309503
    big = ax > tan3pio8
    mid = jnp.logical_and(ax > tan_pio8, jnp.logical_not(big))
    x_big = -_rcp(jnp.maximum(ax, 1e-30))
    x_mid = (ax - 1.0) * _rcp(ax + 1.0)
    xr = jnp.where(big, x_big, jnp.where(mid, x_mid, ax))
    off = jnp.where(big, math.pi / 2.0,
                    jnp.where(mid, math.pi / 4.0, 0.0)).astype(x.dtype)
    z = xr * xr
    p = ((8.05374449538e-2 * z - 1.38776856032e-1) * z
         + 1.99777106478e-1) * z - 3.33329491539e-1
    return sign * (p * z * xr + xr + off)


def _bbox_loss_kernel(pd_ref, pb_ref, tb_ref, anc_ref, w_ref, out_ref):
    # Every plane below is a fully packed (rows_tile, 128) f32 array.
    px1, py1, px2, py2 = pb_ref[0], pb_ref[1], pb_ref[2], pb_ref[3]
    tx1, ty1, tx2, ty2 = tb_ref[0], tb_ref[1], tb_ref[2], tb_ref[3]
    ax, ay = anc_ref[0], anc_ref[1]
    w = w_ref[...]                          # scores.sum(-1) * fg_mask
    fg = w > 0.0                            # NaN guard: gate zero-weight anchors

    # ------------------- CIoU (complete_box_iou semantics) -------------------
    iw = jnp.maximum(jnp.minimum(px2, tx2) - jnp.maximum(px1, tx1), 0.0)
    ih = jnp.maximum(jnp.minimum(py2, ty2) - jnp.maximum(py1, ty1), 0.0)
    inter = iw * ih
    wp = px2 - px1
    hp = py2 - py1
    wt = tx2 - tx1
    ht = ty2 - ty1
    union = wp * hp + wt * ht - inter
    iou = inter * _rcp(union)
    cw = jnp.maximum(jnp.maximum(px2, tx2) - jnp.minimum(px1, tx1), 0.0)
    ch = jnp.maximum(jnp.maximum(py2, ty2) - jnp.minimum(py1, ty1), 0.0)
    c2 = cw * cw + ch * ch + EPS
    dcx = (px1 + px2) - (tx1 + tx2)         # 2 * (center-x diff)
    dcy = (py1 + py2) - (ty1 + ty2)
    rho2 = 0.25 * (dcx * dcx + dcy * dcy)
    v = (4.0 / (math.pi ** 2)) * (
        _atan(wp * _rcp(hp)) - _atan(wt * _rcp(ht))) ** 2
    # alpha*v is small and insensitive -> plain EUP approx reciprocal.
    alpha = v * pl.reciprocal(1.0 - iou + v + EPS, approx=True)
    ciou = iou - rho2 * _rcp(c2) - alpha * v
    iou_s = jnp.sum(jnp.where(fg, (1.0 - ciou) * w, 0.0), keepdims=True)  # (1,1)

    # ------------------------------- DFL -------------------------------------
    reg_max = pd_ref.shape[1]
    clip_hi = reg_max - 1 - 0.01
    # bbox2dist(targets, anchors, reg_max - 1): ltrb distances, clipped.
    tgts = (jnp.clip(ax - tx1, 0.0, clip_hi),
            jnp.clip(ay - ty1, 0.0, clip_hi),
            jnp.clip(tx2 - ax, 0.0, clip_hi),
            jnp.clip(ty2 - ay, 0.0, clip_hi))

    dfl_acc = jnp.zeros_like(w)
    for s in range(4):                      # static unroll over box sides
        tgt = tgts[s]
        # Pass 1: running max in bf16 (exact for max), one upcast at the end.
        mb = pd_ref[s, 0]
        for j in range(1, reg_max):
            mb = jnp.maximum(mb, pd_ref[s, j])
        m = mb.astype(jnp.float32)
        # Pass 2: sum-exp (logsumexp) and tent-weight projection,
        # one (rows_tile, 128) f32 logits plane live at a time.
        sum_e = jnp.zeros_like(m)
        proj = jnp.zeros_like(m)
        for j in range(reg_max):
            pj = pd_ref[s, j].astype(jnp.float32)
            sum_e = sum_e + jnp.exp(pj - m)
            # relu(1-|j-t|) == wl at floor(t) and wr at floor(t)+1.
            wj = jnp.maximum(1.0 - jnp.abs(tgt - float(j)), 0.0)
            proj = proj + pj * wj
        # cross-entropy at interpolated target = lse - proj
        dfl_acc = dfl_acc + (jnp.log(sum_e) + m - proj)
    dfl_s = jnp.sum(jnp.where(fg, dfl_acc * (0.25 * w), 0.0), keepdims=True)

    # One lane-dense store: lane 0 = IoU partial, lane 1 = DFL partial.
    lanes = lax.broadcasted_iota(jnp.int32, (1, LANE), 1)
    out_ref[0] = jnp.where(lanes == 0, iou_s,
                           jnp.where(lanes == 1, dfl_s, 0.0))


def bbox_loss(pred_dist, pred_bboxes, anchors, targets, scores, total_score,
              fg_mask, reg_max=REG_MAX, tile=None):
    f32 = jnp.float32
    B, N, _ = pred_bboxes.shape
    M = B * N

    # Anchors per grid step; multiple of 8*128 so every plane fills full vregs.
    step = SUB * LANE
    if tile is None:
        tile = min(8192, _round_up(M, step))
    tile = max(step, _round_up(tile, step))
    rows_tile = tile // LANE
    m_pad = _round_up(M, tile)
    rows_pad = m_pad // LANE
    grid = rows_pad // rows_tile

    # Lane-dense layouts: flattened anchor index (b*N + n) is the last axis,
    # then split into (rows, 128) so sublanes are also fully packed.
    pb = jnp.transpose(pred_bboxes.astype(f32), (2, 0, 1)).reshape(4, M)
    tb = jnp.transpose(targets.astype(f32), (2, 0, 1)).reshape(4, M)
    anc = jnp.tile(jnp.transpose(anchors.astype(f32), (1, 0)), (1, B))   # (2, M)
    pd = jnp.transpose(pred_dist.reshape(B, N, 4, reg_max),
                       (2, 3, 0, 1)).reshape(4, reg_max, M).astype(jnp.bfloat16)
    w = (scores.astype(f32).sum(-1) * fg_mask.astype(f32)).reshape(1, M)

    pad = m_pad - M
    if pad:
        # Zero padding is safe: padded anchors have w == 0 and are gated by
        # the in-kernel where(w > 0, ..., 0) guard.
        pb = jnp.pad(pb, ((0, 0), (0, pad)))
        tb = jnp.pad(tb, ((0, 0), (0, pad)))
        anc = jnp.pad(anc, ((0, 0), (0, pad)))
        pd = jnp.pad(pd, ((0, 0), (0, 0), (0, pad)))
        w = jnp.pad(w, ((0, 0), (0, pad)))

    # Free row-major views: split the last axis into (rows, 128).
    pb = pb.reshape(4, rows_pad, LANE)
    tb = tb.reshape(4, rows_pad, LANE)
    anc = anc.reshape(2, rows_pad, LANE)
    pd = pd.reshape(4, reg_max, rows_pad, LANE)
    w = w.reshape(rows_pad, LANE)

    out = pl.pallas_call(
        _bbox_loss_kernel,
        out_shape=jax.ShapeDtypeStruct((grid, 1, LANE), f32),
        grid_spec=pltpu.PrefetchScalarGridSpec(
            num_scalar_prefetch=0,
            grid=(grid,),
            in_specs=[
                pl.BlockSpec((4, reg_max, rows_tile, LANE),
                             lambda g: (0, 0, g, 0)),
                pl.BlockSpec((4, rows_tile, LANE), lambda g: (0, g, 0)),
                pl.BlockSpec((4, rows_tile, LANE), lambda g: (0, g, 0)),
                pl.BlockSpec((2, rows_tile, LANE), lambda g: (0, g, 0)),
                pl.BlockSpec((rows_tile, LANE), lambda g: (g, 0)),
            ],
            out_specs=pl.BlockSpec((1, 1, LANE), lambda g: (g, 0, 0)),
        ),
        compiler_params=pltpu.CompilerParams(
            dimension_semantics=("parallel",)),
    )(pd, pb, tb, anc, w)

    iou_loss = jnp.sum(out[:, 0, 0]) / total_score
    dfl_loss = jnp.sum(out[:, 0, 1]) / total_score
    return iou_loss, dfl_loss


def bbox_loss_ref(pred_dist, pred_bboxes, anchors, targets, scores, total_score,
                  fg_mask, reg_max=REG_MAX):
    """Pure-JAX f32 reference mirroring the PyTorch module (mask-weighted sums)."""
    B, N, _ = pred_bboxes.shape
    fg = fg_mask.astype(jnp.float32)[..., None]
    sw = scores.sum(-1, keepdims=True)
    pb, tb = pred_bboxes, targets
    px1, py1, px2, py2 = [pb[..., i:i + 1] for i in range(4)]
    tx1, ty1, tx2, ty2 = [tb[..., i:i + 1] for i in range(4)]
    inter = jnp.maximum(jnp.minimum(px2, tx2) - jnp.maximum(px1, tx1), 0.0) * \
            jnp.maximum(jnp.minimum(py2, ty2) - jnp.maximum(py1, ty1), 0.0)
    union = (px2 - px1) * (py2 - py1) + (tx2 - tx1) * (ty2 - ty1) - inter
    iou = inter / union
    cw = jnp.maximum(jnp.maximum(px2, tx2) - jnp.minimum(px1, tx1), 0.0)
    ch = jnp.maximum(jnp.maximum(py2, ty2) - jnp.minimum(py1, ty1), 0.0)
    c2 = cw ** 2 + ch ** 2 + EPS
    rho2 = ((px1 + px2) / 2 - (tx1 + tx2) / 2) ** 2 + \
           ((py1 + py2) / 2 - (ty1 + ty2) / 2) ** 2
    v = (4.0 / math.pi ** 2) * (jnp.arctan((px2 - px1) / (py2 - py1)) -
                                jnp.arctan((tx2 - tx1) / (ty2 - ty1))) ** 2
    alpha = v / (1.0 - iou + v + EPS)
    ciou = iou - rho2 / c2 - alpha * v
    iou_loss = jnp.sum((1.0 - ciou) * sw * fg) / total_score

    anc = anchors[None]
    d = jnp.concatenate([anc - tb[..., :2], tb[..., 2:] - anc], axis=-1)
    t = jnp.clip(d, 0.0, reg_max - 1 - 0.01)
    left = jnp.floor(t)
    wl = (left + 1.0) - t
    wr = 1.0 - wl
    logits = pred_dist.reshape(B, N, 4, reg_max)
    lsm = jax.nn.log_softmax(logits, axis=-1)
    ce_l = -jnp.take_along_axis(lsm, left.astype(jnp.int32)[..., None], axis=-1)[..., 0]
    ce_r = -jnp.take_along_axis(lsm, (left + 1.0).astype(jnp.int32)[..., None], axis=-1)[..., 0]
    dfl_per = (ce_l * wl + ce_r * wr).mean(-1, keepdims=True)
    dfl_loss = jnp.sum(dfl_per * sw * fg) / total_score
    return iou_loss, dfl_loss


if __name__ == "__main__":
    def run_case(side, tile):
        B, C, R = 2, 8, REG_MAX
        N = side * side
        key = jax.random.PRNGKey(0)
        keys = jax.random.split(key, 8)

        # anchor points on a stride-2 grid
        gy, gx = jnp.meshgrid(jnp.arange(side) + 0.5, jnp.arange(side) + 0.5,
                              indexing="ij")
        anchors = (jnp.stack([gx.reshape(-1), gy.reshape(-1)], axis=-1) * 2.0
                   ).astype(jnp.float32)

        def make_boxes(kc, kw):
            ctr = anchors[None] + jax.random.uniform(kc, (B, N, 2),
                                                     minval=-1.0, maxval=1.0)
            wh = jax.random.uniform(kw, (B, N, 2), minval=2.0, maxval=10.0)
            return jnp.concatenate([ctr - wh / 2, ctr + wh / 2],
                                   axis=-1).astype(jnp.float32)

        targets = make_boxes(keys[0], keys[1])
        pred_bboxes = make_boxes(keys[2], keys[3])
        pred_dist = jax.random.normal(keys[4], (B, N, 4 * R), dtype=jnp.float32)
        scores = jax.random.uniform(keys[5], (B, N, C), dtype=jnp.float32)
        fg_mask = jax.random.bernoulli(keys[6], 0.5, (B, N))
        total_score = jnp.maximum(jnp.sum(scores.sum(-1) * fg_mask),
                                  1.0).astype(jnp.float32)

        iou_ref, dfl_ref = bbox_loss_ref(pred_dist, pred_bboxes, anchors,
                                         targets, scores, total_score, fg_mask)
        iou_l, dfl_l = jax.block_until_ready(
            bbox_loss(pred_dist, pred_bboxes, anchors, targets, scores,
                      total_score, fg_mask, tile=tile))

        assert bool(jnp.isfinite(iou_l)) and bool(jnp.isfinite(dfl_l))
        assert jnp.allclose(iou_l, iou_ref, rtol=2e-3, atol=2e-3), (iou_l, iou_ref)
        assert jnp.allclose(dfl_l, dfl_ref, rtol=2e-3, atol=2e-3), (dfl_l, dfl_ref)

    # Case 1: B=2, 16x16 anchors -> M=512; single tile with 512 zero-weight
    # pad anchors (exercises the w>0 NaN guard on padding).
    run_case(side=16, tile=None)
    # Case 2: B=2, 24x24 anchors -> M=1152; tile=1024 -> grid=2 exercises the
    # per-block partial sums plus a mostly-padding final block.
    run_case(side=24, tile=1024)

    print("KERNEL_OK")
</pallas_src>

<mosaic_0001>
module attributes {stable_mosaic.version = 11 : i64} {
  func.func @_bbox_loss_kernel(%arg0: i32, %arg1: memref<4x16x8x128xbf16, #tpu.memory_space<vmem>>, %arg2: memref<4x8x128xf32, #tpu.memory_space<vmem>>, %arg3: memref<4x8x128xf32, #tpu.memory_space<vmem>>, %arg4: memref<2x8x128xf32, #tpu.memory_space<vmem>>, %arg5: memref<8x128xf32, #tpu.memory_space<vmem>>, %arg6: memref<1x1x128xf32, #tpu.memory_space<vmem>>) attributes {dimension_semantics = [#tpu.dimension_semantics<parallel>], iteration_bounds = array<i64: 1>, scalar_prefetch = 0 : i64, scratch_operands = 0 : i64, tpu.core_type = #tpu.core_type<tc>, window_params = [{transform_indices = @transform_0, window_bounds = array<i64: 4, 16, 8, 128>}, {transform_indices = @transform_1, window_bounds = array<i64: 4, 8, 128>}, {transform_indices = @transform_2, window_bounds = array<i64: 4, 8, 128>}, {transform_indices = @transform_3, window_bounds = array<i64: 2, 8, 128>}, {transform_indices = @transform_4, window_bounds = array<i64: 8, 128>}, {transform_indices = @transform_5, window_bounds = array<i64: 1, 1, 128>}]} {
    %c0 = arith.constant 0 : index
    %c0_0 = arith.constant 0 : index
    %c0_1 = arith.constant 0 : index
    %0 = vector.load %arg2[%c0, %c0_0, %c0_1] : memref<4x8x128xf32, #tpu.memory_space<vmem>>, vector<1x8x128xf32>
    %1 = vector.shape_cast %0 : vector<1x8x128xf32> to vector<8x128xf32>
    %c1 = arith.constant 1 : index
    %c0_2 = arith.constant 0 : index
    %c0_3 = arith.constant 0 : index
    %2 = vector.load %arg2[%c1, %c0_2, %c0_3] : memref<4x8x128xf32, #tpu.memory_space<vmem>>, vector<1x8x128xf32>
    %3 = vector.shape_cast %2 : vector<1x8x128xf32> to vector<8x128xf32>
    %c2 = arith.constant 2 : index
    %c0_4 = arith.constant 0 : index
    %c0_5 = arith.constant 0 : index
    %4 = vector.load %arg2[%c2, %c0_4, %c0_5] : memref<4x8x128xf32, #tpu.memory_space<vmem>>, vector<1x8x128xf32>
    %5 = vector.shape_cast %4 : vector<1x8x128xf32> to vector<8x128xf32>
    %c3 = arith.constant 3 : index
    %c0_6 = arith.constant 0 : index
    %c0_7 = arith.constant 0 : index
    %6 = vector.load %arg2[%c3, %c0_6, %c0_7] : memref<4x8x128xf32, #tpu.memory_space<vmem>>, vector<1x8x128xf32>
    %7 = vector.shape_cast %6 : vector<1x8x128xf32> to vector<8x128xf32>
    %c0_8 = arith.constant 0 : index
    %c0_9 = arith.constant 0 : index
    %c0_10 = arith.constant 0 : index
    %8 = vector.load %arg3[%c0_8, %c0_9, %c0_10] : memref<4x8x128xf32, #tpu.memory_space<vmem>>, vector<1x8x128xf32>
    %9 = vector.shape_cast %8 : vector<1x8x128xf32> to vector<8x128xf32>
    %c1_11 = arith.constant 1 : index
    %c0_12 = arith.constant 0 : index
    %c0_13 = arith.constant 0 : index
    %10 = vector.load %arg3[%c1_11, %c0_12, %c0_13] : memref<4x8x128xf32, #tpu.memory_space<vmem>>, vector<1x8x128xf32>
    %11 = vector.shape_cast %10 : vector<1x8x128xf32> to vector<8x128xf32>
    %c2_14 = arith.constant 2 : index
    %c0_15 = arith.constant 0 : index
    %c0_16 = arith.constant 0 : index
    %12 = vector.load %arg3[%c2_14, %c0_15, %c0_16] : memref<4x8x128xf32, #tpu.memory_space<vmem>>, vector<1x8x128xf32>
    %13 = vector.shape_cast %12 : vector<1x8x128xf32> to vector<8x128xf32>
    %c3_17 = arith.constant 3 : index
    %c0_18 = arith.constant 0 : index
    %c0_19 = arith.constant 0 : index
    %14 = vector.load %arg3[%c3_17, %c0_18, %c0_19] : memref<4x8x128xf32, #tpu.memory_space<vmem>>, vector<1x8x128xf32>
    %15 = vector.shape_cast %14 : vector<1x8x128xf32> to vector<8x128xf32>
    %c0_20 = arith.constant 0 : index
    %c0_21 = arith.constant 0 : index
    %c0_22 = arith.constant 0 : index
    %16 = vector.load %arg4[%c0_20, %c0_21, %c0_22] : memref<2x8x128xf32, #tpu.memory_space<vmem>>, vector<1x8x128xf32>
    %17 = vector.shape_cast %16 : vector<1x8x128xf32> to vector<8x128xf32>
    %c1_23 = arith.constant 1 : index
    %c0_24 = arith.constant 0 : index
    %c0_25 = arith.constant 0 : index
    %18 = vector.load %arg4[%c1_23, %c0_24, %c0_25] : memref<2x8x128xf32, #tpu.memory_space<vmem>>, vector<1x8x128xf32>
    %19 = vector.shape_cast %18 : vector<1x8x128xf32> to vector<8x128xf32>
    %c0_26 = arith.constant 0 : index
    %c0_27 = arith.constant 0 : index
    %20 = vector.load %arg5[%c0_26, %c0_27] : memref<8x128xf32, #tpu.memory_space<vmem>>, vector<8x128xf32>
    %cst = arith.constant 0.000000e+00 : f32
    %21 = vector.broadcast %cst : f32 to vector<8x128xf32>
    %22 = arith.cmpf ogt, %20, %21 : vector<8x128xf32>
    %23 = arith.minimumf %5, %13 : vector<8x128xf32>
    %24 = arith.maximumf %1, %9 : vector<8x128xf32>
    %25 = arith.subf %23, %24 : vector<8x128xf32>
    %cst_28 = arith.constant 0.000000e+00 : f32
    %26 = vector.broadcast %cst_28 : f32 to vector<8x128xf32>
    %27 = arith.maximumf %25, %26 : vector<8x128xf32>
    %28 = arith.minimumf %7, %15 : vector<8x128xf32>
    %29 = arith.maximumf %3, %11 : vector<8x128xf32>
    %30 = arith.subf %28, %29 : vector<8x128xf32>
    %cst_29 = arith.constant 0.000000e+00 : f32
    %31 = vector.broadcast %cst_29 : f32 to vector<8x128xf32>
    %32 = arith.maximumf %30, %31 : vector<8x128xf32>
    %33 = arith.mulf %27, %32 : vector<8x128xf32>
    %34 = arith.subf %5, %1 : vector<8x128xf32>
    %35 = arith.subf %7, %3 : vector<8x128xf32>
    %36 = arith.subf %13, %9 : vector<8x128xf32>
    %37 = arith.subf %15, %11 : vector<8x128xf32>
    %38 = arith.mulf %34, %35 : vector<8x128xf32>
    %39 = arith.mulf %36, %37 : vector<8x128xf32>
    %40 = arith.addf %38, %39 : vector<8x128xf32>
    %41 = arith.subf %40, %33 : vector<8x128xf32>
    %42 = tpu.reciprocal %41 {approx = true} : vector<8x128xf32> -> vector<8x128xf32>
    %43 = arith.mulf %41, %42 : vector<8x128xf32>
    %cst_30 = arith.constant 2.000000e+00 : f32
    %44 = vector.broadcast %cst_30 : f32 to vector<8x128xf32>
    %45 = arith.subf %44, %43 : vector<8x128xf32>
    %46 = arith.mulf %42, %45 : vector<8x128xf32>
    %47 = arith.mulf %33, %46 : vector<8x128xf32>
    %48 = arith.maximumf %5, %13 : vector<8x128xf32>
    %49 = arith.minimumf %1, %9 : vector<8x128xf32>
    %50 = arith.subf %48, %49 : vector<8x128xf32>
    %cst_31 = arith.constant 0.000000e+00 : f32
    %51 = vector.broadcast %cst_31 : f32 to vector<8x128xf32>
    %52 = arith.maximumf %50, %51 : vector<8x128xf32>
    %53 = arith.maximumf %7, %15 : vector<8x128xf32>
    %54 = arith.minimumf %3, %11 : vector<8x128xf32>
    %55 = arith.subf %53, %54 : vector<8x128xf32>
    %cst_32 = arith.constant 0.000000e+00 : f32
    %56 = vector.broadcast %cst_32 : f32 to vector<8x128xf32>
    %57 = arith.maximumf %55, %56 : vector<8x128xf32>
    %58 = arith.mulf %52, %52 : vector<8x128xf32>
    %59 = arith.mulf %57, %57 : vector<8x128xf32>
    %60 = arith.addf %58, %59 : vector<8x128xf32>
    %cst_33 = arith.constant 1.000000e-07 : f32
    %61 = vector.broadcast %cst_33 : f32 to vector<8x128xf32>
    %62 = arith.addf %60, %61 : vector<8x128xf32>
    %63 = arith.addf %1, %5 : vector<8x128xf32>
    %64 = arith.addf %9, %13 : vector<8x128xf32>
    %65 = arith.subf %63, %64 : vector<8x128xf32>
    %66 = arith.addf %3, %7 : vector<8x128xf32>
    %67 = arith.addf %11, %15 : vector<8x128xf32>
    %68 = arith.subf %66, %67 : vector<8x128xf32>
    %69 = arith.mulf %65, %65 : vector<8x128xf32>
    %70 = arith.mulf %68, %68 : vector<8x128xf32>
    %71 = arith.addf %69, %70 : vector<8x128xf32>
    %cst_34 = arith.constant 2.500000e-01 : f32
    %72 = vector.broadcast %cst_34 : f32 to vector<8x128xf32>
    %73 = arith.mulf %72, %71 : vector<8x128xf32>
    %74 = tpu.reciprocal %35 {approx = true} : vector<8x128xf32> -> vector<8x128xf32>
    %75 = arith.mulf %35, %74 : vector<8x128xf32>
    %cst_35 = arith.constant 2.000000e+00 : f32
    %76 = vector.broadcast %cst_35 : f32 to vector<8x128xf32>
    %77 = arith.subf %76, %75 : vector<8x128xf32>
    %78 = arith.mulf %74, %77 : vector<8x128xf32>
    %79 = arith.mulf %34, %78 : vector<8x128xf32>
    %cst_36 = arith.constant 0.000000e+00 : f32
    %80 = vector.broadcast %cst_36 : f32 to vector<8x128xf32>
    %81 = arith.cmpf olt, %79, %80 : vector<8x128xf32>
    %cst_37 = arith.constant -1.000000e+00 : f32
    %cst_38 = arith.constant 1.000000e+00 : f32
    %82 = vector.broadcast %cst_37 : f32 to vector<8x128xf32>
    %83 = vector.broadcast %cst_38 : f32 to vector<8x128xf32>
    %84 = arith.select %81, %82, %83 : vector<8x128xi1>, vector<8x128xf32>
    %85 = math.absf %79 : vector<8x128xf32>
    %cst_39 = arith.constant 2.41421366 : f32
    %86 = vector.broadcast %cst_39 : f32 to vector<8x128xf32>
    %87 = arith.cmpf ogt, %85, %86 : vector<8x128xf32>
    %cst_40 = arith.constant 0.414213568 : f32
    %88 = vector.broadcast %cst_40 : f32 to vector<8x128xf32>
    %89 = arith.cmpf ogt, %85, %88 : vector<8x128xf32>
    %cst_41 = arith.constant dense<true> : vector<8x128xi1>
    %90 = arith.xori %87, %cst_41 : vector<8x128xi1>
    %91 = arith.andi %89, %90 : vector<8x128xi1>
    %cst_42 = arith.constant 1.000000e-30 : f32
    %92 = vector.broadcast %cst_42 : f32 to vector<8x128xf32>
    %93 = arith.maximumf %85, %92 : vector<8x128xf32>
    %94 = tpu.reciprocal %93 {approx = true} : vector<8x128xf32> -> vector<8x128xf32>
    %95 = arith.mulf %93, %94 : vector<8x128xf32>
    %cst_43 = arith.constant 2.000000e+00 : f32
    %96 = vector.broadcast %cst_43 : f32 to vector<8x128xf32>
    %97 = arith.subf %96, %95 : vector<8x128xf32>
    %98 = arith.mulf %94, %97 : vector<8x128xf32>
    %cst_44 = arith.constant 0.000000e+00 : f32
    %99 = vector.broadcast %cst_44 : f32 to vector<8x128xf32>
    %100 = arith.subf %99, %98 : vector<8x128xf32>
    %cst_45 = arith.constant 1.000000e+00 : f32
    %101 = vector.broadcast %cst_45 : f32 to vector<8x128xf32>
    %102 = arith.subf %85, %101 : vector<8x128xf32>
    %cst_46 = arith.constant 1.000000e+00 : f32
    %103 = vector.broadcast %cst_46 : f32 to vector<8x128xf32>
    %104 = arith.addf %85, %103 : vector<8x128xf32>
    %105 = tpu.reciprocal %104 {approx = true} : vector<8x128xf32> -> vector<8x128xf32>
    %106 = arith.mulf %104, %105 : vector<8x128xf32>
    %cst_47 = arith.constant 2.000000e+00 : f32
    %107 = vector.broadcast %cst_47 : f32 to vector<8x128xf32>
    %108 = arith.subf %107, %106 : vector<8x128xf32>
    %109 = arith.mulf %105, %108 : vector<8x128xf32>
    %110 = arith.mulf %102, %109 : vector<8x128xf32>
    %111 = arith.select %91, %110, %85 : vector<8x128xi1>, vector<8x128xf32>
    %112 = arith.select %87, %100, %111 : vector<8x128xi1>, vector<8x128xf32>
    %cst_48 = arith.constant 0.785398185 : f32
    %cst_49 = arith.constant 0.000000e+00 : f32
    %113 = vector.broadcast %cst_48 : f32 to vector<8x128xf32>
    %114 = vector.broadcast %cst_49 : f32 to vector<8x128xf32>
    %115 = arith.select %91, %113, %114 : vector<8x128xi1>, vector<8x128xf32>
    %cst_50 = arith.constant 1.57079637 : f32
    %116 = vector.broadcast %cst_50 : f32 to vector<8x128xf32>
    %117 = arith.select %87, %116, %115 : vector<8x128xi1>, vector<8x128xf32>
    %118 = arith.mulf %112, %112 : vector<8x128xf32>
    %cst_51 = arith.constant 0.0805374458 : f32
    %119 = vector.broadcast %cst_51 : f32 to vector<8x128xf32>
    %120 = arith.mulf %119, %118 : vector<8x128xf32>
    %cst_52 = arith.constant 0.138776854 : f32
    %121 = vector.broadcast %cst_52 : f32 to vector<8x128xf32>
    %122 = arith.subf %120, %121 : vector<8x128xf32>
    %123 = arith.mulf %122, %118 : vector<8x128xf32>
    %cst_53 = arith.constant 0.199777111 : f32
    %124 = vector.broadcast %cst_53 : f32 to vector<8x128xf32>
    %125 = arith.addf %123, %124 : vector<8x128xf32>
    %126 = arith.mulf %125, %118 : vector<8x128xf32>
    %cst_54 = arith.constant 0.333329499 : f32
    %127 = vector.broadcast %cst_54 : f32 to vector<8x128xf32>
    %128 = arith.subf %126, %127 : vector<8x128xf32>
    %129 = arith.mulf %128, %118 : vector<8x128xf32>
    %130 = arith.mulf %129, %112 : vector<8x128xf32>
    %131 = arith.addf %130, %112 : vector<8x128xf32>
    %132 = arith.addf %131, %117 : vector<8x128xf32>
    %133 = arith.mulf %84, %132 : vector<8x128xf32>
    %134 = tpu.reciprocal %37 {approx = true} : vector<8x128xf32> -> vector<8x128xf32>
    %135 = arith.mulf %37, %134 : vector<8x128xf32>
    %cst_55 = arith.constant 2.000000e+00 : f32
    %136 = vector.broadcast %cst_55 : f32 to vector<8x128xf32>
    %137 = arith.subf %136, %135 : vector<8x128xf32>
    %138 = arith.mulf %134, %137 : vector<8x128xf32>
    %139 = arith.mulf %36, %138 : vector<8x128xf32>
    %cst_56 = arith.constant 0.000000e+00 : f32
    %140 = vector.broadcast %cst_56 : f32 to vector<8x128xf32>
    %141 = arith.cmpf olt, %139, %140 : vector<8x128xf32>
    %cst_57 = arith.constant -1.000000e+00 : f32
    %cst_58 = arith.constant 1.000000e+00 : f32
    %142 = vector.broadcast %cst_57 : f32 to vector<8x128xf32>
    %143 = vector.broadcast %cst_58 : f32 to vector<8x128xf32>
    %144 = arith.select %141, %142, %143 : vector<8x128xi1>, vector<8x128xf32>
    %145 = math.absf %139 : vector<8x128xf32>
    %cst_59 = arith.constant 2.41421366 : f32
    %146 = vector.broadcast %cst_59 : f32 to vector<8x128xf32>
    %147 = arith.cmpf ogt, %145, %146 : vector<8x128xf32>
    %cst_60 = arith.constant 0.414213568 : f32
    %148 = vector.broadcast %cst_60 : f32 to vector<8x128xf32>
    %149 = arith.cmpf ogt, %145, %148 : vector<8x128xf32>
    %cst_61 = arith.constant dense<true> : vector<8x128xi1>
    %150 = arith.xori %147, %cst_61 : vector<8x128xi1>
    %151 = arith.andi %149, %150 : vector<8x128xi1>
    %cst_62 = arith.constant 1.000000e-30 : f32
    %152 = vector.broadcast %cst_62 : f32 to vector<8x128xf32>
    %153 = arith.maximumf %145, %152 : vector<8x128xf32>
    %154 = tpu.reciprocal %153 {approx = true} : vector<8x128xf32> -> vector<8x128xf32>
    %155 = arith.mulf %153, %154 : vector<8x128xf32>
    %cst_63 = arith.constant 2.000000e+00 : f32
    %156 = vector.broadcast %cst_63 : f32 to vector<8x128xf32>
    %157 = arith.subf %156, %155 : vector<8x128xf32>
    %158 = arith.mulf %154, %157 : vector<8x128xf32>
    %cst_64 = arith.constant 0.000000e+00 : f32
    %159 = vector.broadcast %cst_64 : f32 to vector<8x128xf32>
    %160 = arith.subf %159, %158 : vector<8x128xf32>
    %cst_65 = arith.constant 1.000000e+00 : f32
    %161 = vector.broadcast %cst_65 : f32 to vector<8x128xf32>
    %162 = arith.subf %145, %161 : vector<8x128xf32>
    %cst_66 = arith.constant 1.000000e+00 : f32
    %163 = vector.broadcast %cst_66 : f32 to vector<8x128xf32>
    %164 = arith.addf %145, %163 : vector<8x128xf32>
    %165 = tpu.reciprocal %164 {approx = true} : vector<8x128xf32> -> vector<8x128xf32>
    %166 = arith.mulf %164, %165 : vector<8x128xf32>
    %cst_67 = arith.constant 2.000000e+00 : f32
    %167 = vector.broadcast %cst_67 : f32 to vector<8x128xf32>
    %168 = arith.subf %167, %166 : vector<8x128xf32>
    %169 = arith.mulf %165, %168 : vector<8x128xf32>
    %170 = arith.mulf %162, %169 : vector<8x128xf32>
    %171 = arith.select %151, %170, %145 : vector<8x128xi1>, vector<8x128xf32>
    %172 = arith.select %147, %160, %171 : vector<8x128xi1>, vector<8x128xf32>
    %cst_68 = arith.constant 0.785398185 : f32
    %cst_69 = arith.constant 0.000000e+00 : f32
    %173 = vector.broadcast %cst_68 : f32 to vector<8x128xf32>
    %174 = vector.broadcast %cst_69 : f32 to vector<8x128xf32>
    %175 = arith.select %151, %173, %174 : vector<8x128xi1>, vector<8x128xf32>
    %cst_70 = arith.constant 1.57079637 : f32
    %176 = vector.broadcast %cst_70 : f32 to vector<8x128xf32>
    %177 = arith.select %147, %176, %175 : vector<8x128xi1>, vector<8x128xf32>
    %178 = arith.mulf %172, %172 : vector<8x128xf32>
    %cst_71 = arith.constant 0.0805374458 : f32
    %179 = vector.broadcast %cst_71 : f32 to vector<8x128xf32>
    %180 = arith.mulf %179, %178 : vector<8x128xf32>
    %cst_72 = arith.constant 0.138776854 : f32
    %181 = vector.broadcast %cst_72 : f32 to vector<8x128xf32>
    %182 = arith.subf %180, %181 : vector<8x128xf32>
    %183 = arith.mulf %182, %178 : vector<8x128xf32>
    %cst_73 = arith.constant 0.199777111 : f32
    %184 = vector.broadcast %cst_73 : f32 to vector<8x128xf32>
    %185 = arith.addf %183, %184 : vector<8x128xf32>
    %186 = arith.mulf %185, %178 : vector<8x128xf32>
    %cst_74 = arith.constant 0.333329499 : f32
    %187 = vector.broadcast %cst_74 : f32 to vector<8x128xf32>
    %188 = arith.subf %186, %187 : vector<8x128xf32>
    %189 = arith.mulf %188, %178 : vector<8x128xf32>
    %190 = arith.mulf %189, %172 : vector<8x128xf32>
    %191 = arith.addf %190, %172 : vector<8x128xf32>
    %192 = arith.addf %191, %177 : vector<8x128xf32>
    %193 = arith.mulf %144, %192 : vector<8x128xf32>
    %194 = arith.subf %133, %193 : vector<8x128xf32>
    %195 = arith.mulf %194, %194 : vector<8x128xf32>
    %cst_75 = arith.constant 0.405284733 : f32
    %196 = vector.broadcast %cst_75 : f32 to vector<8x128xf32>
    %197 = arith.mulf %196, %195 : vector<8x128xf32>
    %cst_76 = arith.constant 1.000000e+00 : f32
    %198 = vector.broadcast %cst_76 : f32 to vector<8x128xf32>
    %199 = arith.subf %198, %47 : vector<8x128xf32>
    %200 = arith.addf %199, %197 : vector<8x128xf32>
    %cst_77 = arith.constant 1.000000e-07 : f32
    %201 = vector.broadcast %cst_77 : f32 to vector<8x128xf32>
    %202 = arith.addf %200, %201 : vector<8x128xf32>
    %203 = tpu.reciprocal %202 {approx = true} : vector<8x128xf32> -> vector<8x128xf32>
    %204 = arith.mulf %197, %203 : vector<8x128xf32>
    %205 = tpu.reciprocal %62 {approx = true} : vector<8x128xf32> -> vector<8x128xf32>
    %206 = arith.mulf %62, %205 : vector<8x128xf32>
    %cst_78 = arith.constant 2.000000e+00 : f32
    %207 = vector.broadcast %cst_78 : f32 to vector<8x128xf32>
    %208 = arith.subf %207, %206 : vector<8x128xf32>
    %209 = arith.mulf %205, %208 : vector<8x128xf32>
    %210 = arith.mulf %73, %209 : vector<8x128xf32>
    %211 = arith.subf %47, %210 : vector<8x128xf32>
    %212 = arith.mulf %204, %197 : vector<8x128xf32>
    %213 = arith.subf %211, %212 : vector<8x128xf32>
    %cst_79 = arith.constant 1.000000e+00 : f32
    %214 = vector.broadcast %cst_79 : f32 to vector<8x128xf32>
    %215 = arith.subf %214, %213 : vector<8x128xf32>
    %216 = arith.mulf %215, %20 : vector<8x128xf32>
    %cst_80 = arith.constant 0.000000e+00 : f32
    %217 = vector.broadcast %cst_80 : f32 to vector<8x128xf32>
    %218 = arith.select %22, %216, %217 : vector<8x128xi1>, vector<8x128xf32>
    %219 = vector.shape_cast %218 : vector<8x128xf32> to vector<1x8x128xf32>
    %cst_81 = arith.constant dense<0.000000e+00> : vector<1xf32>
    %220 = vector.multi_reduction <add>, %219, %cst_81 [1, 2] : vector<1x8x128xf32> to vector<1xf32>
    %221 = vector.shape_cast %220 : vector<1xf32> to vector<1x1x1xf32>
    %222 = vector.extract %221[0, 0, 0] : f32 from vector<1x1x1xf32>
    %223 = vector.broadcast %222 : f32 to vector<1x1xf32>
    %224 = arith.subf %17, %9 : vector<8x128xf32>
    %cst_82 = arith.constant 0.000000e+00 : f32
    %cst_83 = arith.constant 1.499000e+01 : f32
    %225 = vector.broadcast %cst_82 : f32 to vector<8x128xf32>
    %226 = arith.maximumf %225, %224 : vector<8x128xf32>
    %227 = vector.broadcast %cst_83 : f32 to vector<8x128xf32>
    %228 = arith.minimumf %227, %226 : vector<8x128xf32>
    %229 = arith.subf %19, %11 : vector<8x128xf32>
    %cst_84 = arith.constant 0.000000e+00 : f32
    %cst_85 = arith.constant 1.499000e+01 : f32
    %230 = vector.broadcast %cst_84 : f32 to vector<8x128xf32>
    %231 = arith.maximumf %230, %229 : vector<8x128xf32>
    %232 = vector.broadcast %cst_85 : f32 to vector<8x128xf32>
    %233 = arith.minimumf %232, %231 : vector<8x128xf32>
    %234 = arith.subf %13, %17 : vector<8x128xf32>
    %cst_86 = arith.constant 0.000000e+00 : f32
    %cst_87 = arith.constant 1.499000e+01 : f32
    %235 = vector.broadcast %cst_86 : f32 to vector<8x128xf32>
    %236 = arith.maximumf %235, %234 : vector<8x128xf32>
    %237 = vector.broadcast %cst_87 : f32 to vector<8x128xf32>
    %238 = arith.minimumf %237, %236 : vector<8x128xf32>
    %239 = arith.subf %15, %19 : vector<8x128xf32>
    %cst_88 = arith.constant 0.000000e+00 : f32
    %cst_89 = arith.constant 1.499000e+01 : f32
    %240 = vector.broadcast %cst_88 : f32 to vector<8x128xf32>
    %241 = arith.maximumf %240, %239 : vector<8x128xf32>
    %242 = vector.broadcast %cst_89 : f32 to vector<8x128xf32>
    %243 = arith.minimumf %242, %241 : vector<8x128xf32>
    %cst_90 = arith.constant 0.000000e+00 : f32
    %244 = vector.broadcast %cst_90 : f32 to vector<8x128xf32>
    %c0_91 = arith.constant 0 : index
    %c0_92 = arith.constant 0 : index
    %c0_93 = arith.constant 0 : index
    %c0_94 = arith.constant 0 : index
    %245 = vector.load %arg1[%c0_91, %c0_92, %c0_93, %c0_94] : memref<4x16x8x128xbf16, #tpu.memory_space<vmem>>, vector<1x1x8x128xbf16>
    %246 = vector.shape_cast %245 : vector<1x1x8x128xbf16> to vector<8x128xbf16>
    %c0_95 = arith.constant 0 : index
    %c1_96 = arith.constant 1 : index
    %c0_97 = arith.constant 0 : index
    %c0_98 = arith.constant 0 : index
    %247 = vector.load %arg1[%c0_95, %c1_96, %c0_97, %c0_98] : memref<4x16x8x128xbf16, #tpu.memory_space<vmem>>, vector<1x1x8x128xbf16>
    %248 = vector.shape_cast %247 : vector<1x1x8x128xbf16> to vector<8x128xbf16>
    %249 = arith.maximumf %246, %248 : vector<8x128xbf16>
    %c0_99 = arith.constant 0 : index
    %c2_100 = arith.constant 2 : index
    %c0_101 = arith.constant 0 : index
    %c0_102 = arith.constant 0 : index
    %250 = vector.load %arg1[%c0_99, %c2_100, %c0_101, %c0_102] : memref<4x16x8x128xbf16, #tpu.memory_space<vmem>>, vector<1x1x8x128xbf16>
    %251 = vector.shape_cast %250 : vector<1x1x8x128xbf16> to vector<8x128xbf16>
    %252 = arith.maximumf %249, %251 : vector<8x128xbf16>
    %c0_103 = arith.constant 0 : index
    %c3_104 = arith.constant 3 : index
    %c0_105 = arith.constant 0 : index
    %c0_106 = arith.constant 0 : index
    %253 = vector.load %arg1[%c0_103, %c3_104, %c0_105, %c0_106] : memref<4x16x8x128xbf16, #tpu.memory_space<vmem>>, vector<1x1x8x128xbf16>
    %254 = vector.shape_cast %253 : vector<1x1x8x128xbf16> to vector<8x128xbf16>
    %255 = arith.maximumf %252, %254 : vector<8x128xbf16>
    %c0_107 = arith.constant 0 : index
    %c4 = arith.constant 4 : index
    %c0_108 = arith.constant 0 : index
    %c0_109 = arith.constant 0 : index
    %256 = vector.load %arg1[%c0_107, %c4, %c0_108, %c0_109] : memref<4x16x8x128xbf16, #tpu.memory_space<vmem>>, vector<1x1x8x128xbf16>
    %257 = vector.shape_cast %256 : vector<1x1x8x128xbf16> to vector<8x128xbf16>
    %258 = arith.maximumf %255, %257 : vector<8x128xbf16>
    %c0_110 = arith.constant 0 : index
    %c5 = arith.constant 5 : index
    %c0_111 = arith.constant 0 : index
    %c0_112 = arith.constant 0 : index
    %259 = vector.load %arg1[%c0_110, %c5, %c0_111, %c0_112] : memref<4x16x8x128xbf16, #tpu.memory_space<vmem>>, vector<1x1x8x128xbf16>
    %260 = vector.shape_cast %259 : vector<1x1x8x128xbf16> to vector<8x128xbf16>
    %261 = arith.maximumf %258, %260 : vector<8x128xbf16>
    %c0_113 = arith.constant 0 : index
    %c6 = arith.constant 6 : index
    %c0_114 = arith.constant 0 : index
    %c0_115 = arith.constant 0 : index
    %262 = vector.load %arg1[%c0_113, %c6, %c0_114, %c0_115] : memref<4x16x8x128xbf16, #tpu.memory_space<vmem>>, vector<1x1x8x128xbf16>
    %263 = vector.shape_cast %262 : vector<1x1x8x128xbf16> to vector<8x128xbf16>
    %264 = arith.maximumf %261, %263 : vector<8x128xbf16>
    %c0_116 = arith.constant 0 : index
    %c7 = arith.constant 7 : index
    %c0_117 = arith.constant 0 : index
    %c0_118 = arith.constant 0 : index
    %265 = vector.load %arg1[%c0_116, %c7, %c0_117, %c0_118] : memref<4x16x8x128xbf16, #tpu.memory_space<vmem>>, vector<1x1x8x128xbf16>
    %266 = vector.shape_cast %265 : vector<1x1x8x128xbf16> to vector<8x128xbf16>
    %267 = arith.maximumf %264, %266 : vector<8x128xbf16>
    %c0_119 = arith.constant 0 : index
    %c8 = arith.constant 8 : index
    %c0_120 = arith.constant 0 : index
    %c0_121 = arith.constant 0 : index
    %268 = vector.load %arg1[%c0_119, %c8, %c0_120, %c0_121] : memref<4x16x8x128xbf16, #tpu.memory_space<vmem>>, vector<1x1x8x128xbf16>
    %269 = vector.shape_cast %268 : vector<1x1x8x128xbf16> to vector<8x128xbf16>
    %270 = arith.maximumf %267, %269 : vector<8x128xbf16>
    %c0_122 = arith.constant 0 : index
    %c9 = arith.constant 9 : index
    %c0_123 = arith.constant 0 : index
    %c0_124 = arith.constant 0 : index
    %271 = vector.load %arg1[%c0_122, %c9, %c0_123, %c0_124] : memref<4x16x8x128xbf16, #tpu.memory_space<vmem>>, vector<1x1x8x128xbf16>
    %272 = vector.shape_cast %271 : vector<1x1x8x128xbf16> to vector<8x128xbf16>
    %273 = arith.maximumf %270, %272 : vector<8x128xbf16>
    %c0_125 = arith.constant 0 : index
    %c10 = arith.constant 10 : index
    %c0_126 = arith.constant 0 : index
    %c0_127 = arith.constant 0 : index
    %274 = vector.load %arg1[%c0_125, %c10, %c0_126, %c0_127] : memref<4x16x8x128xbf16, #tpu.memory_space<vmem>>, vector<1x1x8x128xbf16>
    %275 = vector.shape_cast %274 : vector<1x1x8x128xbf16> to vector<8x128xbf16>
    %276 = arith.maximumf %273, %275 : vector<8x128xbf16>
    %c0_128 = arith.constant 0 : index
    %c11 = arith.constant 11 : index
    %c0_129 = arith.constant 0 : index
    %c0_130 = arith.constant 0 : index
    %277 = vector.load %arg1[%c0_128, %c11, %c0_129, %c0_130] : memref<4x16x8x128xbf16, #tpu.memory_space<vmem>>, vector<1x1x8x128xbf16>
    %278 = vector.shape_cast %277 : vector<1x1x8x128xbf16> to vector<8x128xbf16>
    %279 = arith.maximumf %276, %278 : vector<8x128xbf16>
    %c0_131 = arith.constant 0 : index
    %c12 = arith.constant 12 : index
    %c0_132 = arith.constant 0 : index
    %c0_133 = arith.constant 0 : index
    %280 = vector.load %arg1[%c0_131, %c12, %c0_132, %c0_133] : memref<4x16x8x128xbf16, #tpu.memory_space<vmem>>, vector<1x1x8x128xbf16>
    %281 = vector.shape_cast %280 : vector<1x1x8x128xbf16> to vector<8x128xbf16>
    %282 = arith.maximumf %279, %281 : vector<8x128xbf16>
    %c0_134 = arith.constant 0 : index
    %c13 = arith.constant 13 : index
    %c0_135 = arith.constant 0 : index
    %c0_136 = arith.constant 0 : index
    %283 = vector.load %arg1[%c0_134, %c13, %c0_135, %c0_136] : memref<4x16x8x128xbf16, #tpu.memory_space<vmem>>, vector<1x1x8x128xbf16>
    %284 = vector.shape_cast %283 : vector<1x1x8x128xbf16> to vector<8x128xbf16>
    %285 = arith.maximumf %282, %284 : vector<8x128xbf16>
    %c0_137 = arith.constant 0 : index
    %c14 = arith.constant 14 : index
    %c0_138 = arith.constant 0 : index
    %c0_139 = arith.constant 0 : index
    %286 = vector.load %arg1[%c0_137, %c14, %c0_138, %c0_139] : memref<4x16x8x128xbf16, #tpu.memory_space<vmem>>, vector<1x1x8x128xbf16>
    %287 = vector.shape_cast %286 : vector<1x1x8x128xbf16> to vector<8x128xbf16>
    %288 = arith.maximumf %285, %287 : vector<8x128xbf16>
    %c0_140 = arith.constant 0 : index
    %c15 = arith.constant 15 : index
    %c0_141 = arith.constant 0 : index
    %c0_142 = arith.constant 0 : index
    %289 = vector.load %arg1[%c0_140, %c15, %c0_141, %c0_142] : memref<4x16x8x128xbf16, #tpu.memory_space<vmem>>, vector<1x1x8x128xbf16>
    %290 = vector.shape_cast %289 : vector<1x1x8x128xbf16> to vector<8x128xbf16>
    %291 = arith.maximumf %288, %290 : vector<8x128xbf16>
    %292 = arith.extf %291 : vector<8x128xbf16> to vector<8x128xf32>
    %cst_143 = arith.constant 0.000000e+00 : f32
    %293 = vector.broadcast %cst_143 : f32 to vector<8x128xf32>
    %cst_144 = arith.constant 0.000000e+00 : f32
    %294 = vector.broadcast %cst_144 : f32 to vector<8x128xf32>
    %c0_145 = arith.constant 0 : index
    %c0_146 = arith.constant 0 : index
    %c0_147 = arith.constant 0 : index
    %c0_148 = arith.constant 0 : index
    %295 = vector.load %arg1[%c0_145, %c0_146, %c0_147, %c0_148] : memref<4x16x8x128xbf16, #tpu.memory_space<vmem>>, vector<1x1x8x128xbf16>
    %296 = vector.shape_cast %295 : vector<1x1x8x128xbf16> to vector<8x128xbf16>
    %297 = arith.extf %296 : vector<8x128xbf16> to vector<8x128xf32>
    %298 = arith.subf %297, %292 : vector<8x128xf32>
    %299 = math.exp %298 : vector<8x128xf32>
    %300 = arith.addf %293, %299 : vector<8x128xf32>
    %cst_149 = arith.constant 0.000000e+00 : f32
    %301 = vector.broadcast %cst_149 : f32 to vector<8x128xf32>
    %302 = arith.subf %228, %301 : vector<8x128xf32>
    %303 = math.absf %302 : vector<8x128xf32>
    %cst_150 = arith.constant 1.000000e+00 : f32
    %304 = vector.broadcast %cst_150 : f32 to vector<8x128xf32>
    %305 = arith.subf %304, %303 : vector<8x128xf32>
    %cst_151 = arith.constant 0.000000e+00 : f32
    %306 = vector.broadcast %cst_151 : f32 to vector<8x128xf32>
    %307 = arith.maximumf %305, %306 : vector<8x128xf32>
    %308 = arith.mulf %297, %307 : vector<8x128xf32>
    %309 = arith.addf %294, %308 : vector<8x128xf32>
    %c0_152 = arith.constant 0 : index
    %c1_153 = arith.constant 1 : index
    %c0_154 = arith.constant 0 : index
    %c0_155 = arith.constant 0 : index
    %310 = vector.load %arg1[%c0_152, %c1_153, %c0_154, %c0_155] : memref<4x16x8x128xbf16, #tpu.memory_space<vmem>>, vector<1x1x8x128xbf16>
    %311 = vector.shape_cast %310 : vector<1x1x8x128xbf16> to vector<8x128xbf16>
    %312 = arith.extf %311 : vector<8x128xbf16> to vector<8x128xf32>
    %313 = arith.subf %312, %292 : vector<8x128xf32>
    %314 = math.exp %313 : vector<8x128xf32>
    %315 = arith.addf %300, %314 : vector<8x128xf32>
    %cst_156 = arith.constant 1.000000e+00 : f32
    %316 = vector.broadcast %cst_156 : f32 to vector<8x128xf32>
    %317 = arith.subf %228, %316 : vector<8x128xf32>
    %318 = math.absf %317 : vector<8x128xf32>
    %cst_157 = arith.constant 1.000000e+00 : f32
    %319 = vector.broadcast %cst_157 : f32 to vector<8x128xf32>
    %320 = arith.subf %319, %318 : vector<8x128xf32>
    %cst_158 = arith.constant 0.000000e+00 : f32
    %321 = vector.broadcast %cst_158 : f32 to vector<8x128xf32>
    %322 = arith.maximumf %320, %321 : vector<8x128xf32>
    %323 = arith.mulf %312, %322 : vector<8x128xf32>
    %324 = arith.addf %309, %323 : vector<8x128xf32>
    %c0_159 = arith.constant 0 : index
    %c2_160 = arith.constant 2 : index
    %c0_161 = arith.constant 0 : index
    %c0_162 = arith.constant 0 : index
    %325 = vector.load %arg1[%c0_159, %c2_160, %c0_161, %c0_162] : memref<4x16x8x128xbf16, #tpu.memory_space<vmem>>, vector<1x1x8x128xbf16>
    %326 = vector.shape_cast %325 : vector<1x1x8x128xbf16> to vector<8x128xbf16>
    %327 = arith.extf %326 : vector<8x128xbf16> to vector<8x128xf32>
    %328 = arith.subf %327, %292 : vector<8x128xf32>
    %329 = math.exp %328 : vector<8x128xf32>
    %330 = arith.addf %315, %329 : vector<8x128xf32>
    %cst_163 = arith.constant 2.000000e+00 : f32
    %331 = vector.broadcast %cst_163 : f32 to vector<8x128xf32>
    %332 = arith.subf %228, %331 : vector<8x128xf32>
    %333 = math.absf %332 : vector<8x128xf32>
    %cst_164 = arith.constant 1.000000e+00 : f32
    %334 = vector.broadcast %cst_164 : f32 to vector<8x128xf32>
    %335 = arith.subf %334, %333 : vector<8x128xf32>
    %cst_165 = arith.constant 0.000000e+00 : f32
    %336 = vector.broadcast %cst_165 : f32 to vector<8x128xf32>
    %337 = arith.maximumf %335, %336 : vector<8x128xf32>
    %338 = arith.mulf %327, %337 : vector<8x128xf32>
    %339 = arith.addf %324, %338 : vector<8x128xf32>
    %c0_166 = arith.constant 0 : index
    %c3_167 = arith.constant 3 : index
    %c0_168 = arith.constant 0 : index
    %c0_169 = arith.constant 0 : index
    %340 = vector.load %arg1[%c0_166, %c3_167, %c0_168, %c0_169] : memref<4x16x8x128xbf16, #tpu.memory_space<vmem>>, vector<1x1x8x128xbf16>
    %341 = vector.shape_cast %340 : vector<1x1x8x128xbf16> to vector<8x128xbf16>
    %342 = arith.extf %341 : vector<8x128xbf16> to vector<8x128xf32>
    %343 = arith.subf %342, %292 : vector<8x128xf32>
    %344 = math.exp %343 : vector<8x128xf32>
    %345 = arith.addf %330, %344 : vector<8x128xf32>
    %cst_170 = arith.constant 3.000000e+00 : f32
    %346 = vector.broadcast %cst_170 : f32 to vector<8x128xf32>
    %347 = arith.subf %228, %346 : vector<8x128xf32>
    %348 = math.absf %347 : vector<8x128xf32>
    %cst_171 = arith.constant 1.000000e+00 : f32
    %349 = vector.broadcast %cst_171 : f32 to vector<8x128xf32>
    %350 = arith.subf %349, %348 : vector<8x128xf32>
    %cst_172 = arith.constant 0.000000e+00 : f32
    %351 = vector.broadcast %cst_172 : f32 to vector<8x128xf32>
    %352 = arith.maximumf %350, %351 : vector<8x128xf32>
    %353 = arith.mulf %342, %352 : vector<8x128xf32>
    %354 = arith.addf %339, %353 : vector<8x128xf32>
    %c0_173 = arith.constant 0 : index
    %c4_174 = arith.constant 4 : index
    %c0_175 = arith.constant 0 : index
    %c0_176 = arith.constant 0 : index
    %355 = vector.load %arg1[%c0_173, %c4_174, %c0_175, %c0_176] : memref<4x16x8x128xbf16, #tpu.memory_space<vmem>>, vector<1x1x8x128xbf16>
    %356 = vector.shape_cast %355 : vector<1x1x8x128xbf16> to vector<8x128xbf16>
    %357 = arith.extf %356 : vector<8x128xbf16> to vector<8x128xf32>
    %358 = arith.subf %357, %292 : vector<8x128xf32>
    %359 = math.exp %358 : vector<8x128xf32>
    %360 = arith.addf %345, %359 : vector<8x128xf32>
    %cst_177 = arith.constant 4.000000e+00 : f32
    %361 = vector.broadcast %cst_177 : f32 to vector<8x128xf32>
    %362 = arith.subf %228, %361 : vector<8x128xf32>
    %363 = math.absf %362 : vector<8x128xf32>
    %cst_178 = arith.constant 1.000000e+00 : f32
    %364 = vector.broadcast %cst_178 : f32 to vector<8x128xf32>
    %365 = arith.subf %364, %363 : vector<8x128xf32>
    %cst_179 = arith.constant 0.000000e+00 : f32
    %366 = vector.broadcast %cst_179 : f32 to vector<8x128xf32>
    %367 = arith.maximumf %365, %366 : vector<8x128xf32>
    %368 = arith.mulf %357, %367 : vector<8x128xf32>
    %369 = arith.addf %354, %368 : vector<8x128xf32>
    %c0_180 = arith.constant 0 : index
    %c5_181 = arith.constant 5 : index
    %c0_182 = arith.constant 0 : index
    %c0_183 = arith.constant 0 : index
    %370 = vector.load %arg1[%c0_180, %c5_181, %c0_182, %c0_183] : memref<4x16x8x128xbf16, #tpu.memory_space<vmem>>, vector<1x1x8x128xbf16>
    %371 = vector.shape_cast %370 : vector<1x1x8x128xbf16> to vector<8x128xbf16>
    %372 = arith.extf %371 : vector<8x128xbf16> to vector<8x128xf32>
    %373 = arith.subf %372, %292 : vector<8x128xf32>
    %374 = math.exp %373 : vector<8x128xf32>
    %375 = arith.addf %360, %374 : vector<8x128xf32>
    %cst_184 = arith.constant 5.000000e+00 : f32
    %376 = vector.broadcast %cst_184 : f32 to vector<8x128xf32>
    %377 = arith.subf %228, %376 : vector<8x128xf32>
    %378 = math.absf %377 : vector<8x128xf32>
    %cst_185 = arith.constant 1.000000e+00 : f32
    %379 = vector.broadcast %cst_185 : f32 to vector<8x128xf32>
    %380 = arith.subf %379, %378 : vector<8x128xf32>
    %cst_186 = arith.constant 0.000000e+00 : f32
    %381 = vector.broadcast %cst_186 : f32 to vector<8x128xf32>
    %382 = arith.maximumf %380, %381 : vector<8x128xf32>
    %383 = arith.mulf %372, %382 : vector<8x128xf32>
    %384 = arith.addf %369, %383 : vector<8x128xf32>
    %c0_187 = arith.constant 0 : index
    %c6_188 = arith.constant 6 : index
    %c0_189 = arith.constant 0 : index
    %c0_190 = arith.constant 0 : index
    %385 = vector.load %arg1[%c0_187, %c6_188, %c0_189, %c0_190] : memref<4x16x8x128xbf16, #tpu.memory_space<vmem>>, vector<1x1x8x128xbf16>
    %386 = vector.shape_cast %385 : vector<1x1x8x128xbf16> to vector<8x128xbf16>
    %387 = arith.extf %386 : vector<8x128xbf16> to vector<8x128xf32>
    %388 = arith.subf %387, %292 : vector<8x128xf32>
    %389 = math.exp %388 : vector<8x128xf32>
    %390 = arith.addf %375, %389 : vector<8x128xf32>
    %cst_191 = arith.constant 6.000000e+00 : f32
    %391 = vector.broadcast %cst_191 : f32 to vector<8x128xf32>
    %392 = arith.subf %228, %391 : vector<8x128xf32>
    %393 = math.absf %392 : vector<8x128xf32>
    %cst_192 = arith.constant 1.000000e+00 : f32
    %394 = vector.broadcast %cst_192 : f32 to vector<8x128xf32>
    %395 = arith.subf %394, %393 : vector<8x128xf32>
    %cst_193 = arith.constant 0.000000e+00 : f32
    %396 = vector.broadcast %cst_193 : f32 to vector<8x128xf32>
    %397 = arith.maximumf %395, %396 : vector<8x128xf32>
    %398 = arith.mulf %387, %397 : vector<8x128xf32>
    %399 = arith.addf %384, %398 : vector<8x128xf32>
    %c0_194 = arith.constant 0 : index
    %c7_195 = arith.constant 7 : index
    %c0_196 = arith.constant 0 : index
    %c0_197 = arith.constant 0 : index
    %400 = vector.load %arg1[%c0_194, %c7_195, %c0_196, %c0_197] : memref<4x16x8x128xbf16, #tpu.memory_space<vmem>>, vector<1x1x8x128xbf16>
    %401 = vector.shape_cast %400 : vector<1x1x8x128xbf16> to vector<8x128xbf16>
    %402 = arith.extf %401 : vector<8x128xbf16> to vector<8x128xf32>
    %403 = arith.subf %402, %292 : vector<8x128xf32>
    %404 = math.exp %403 : vector<8x128xf32>
    %405 = arith.addf %390, %404 : vector<8x128xf32>
    %cst_198 = arith.constant 7.000000e+00 : f32
    %406 = vector.broadcast %cst_198 : f32 to vector<8x128xf32>
    %407 = arith.subf %228, %406 : vector<8x128xf32>
    %408 = math.absf %407 : vector<8x128xf32>
    %cst_199 = arith.constant 1.000000e+00 : f32
    %409 = vector.broadcast %cst_199 : f32 to vector<8x128xf32>
    %410 = arith.subf %409, %408 : vector<8x128xf32>
    %cst_200 = arith.constant 0.000000e+00 : f32
    %411 = vector.broadcast %cst_200 : f32 to vector<8x128xf32>
    %412 = arith.maximumf %410, %411 : vector<8x128xf32>
    %413 = arith.mulf %402, %412 : vector<8x128xf32>
    %414 = arith.addf %399, %413 : vector<8x128xf32>
    %c0_201 = arith.constant 0 : index
    %c8_202 = arith.constant 8 : index
    %c0_203 = arith.constant 0 : index
    %c0_204 = arith.constant 0 : index
    %415 = vector.load %arg1[%c0_201, %c8_202, %c0_203, %c0_204] : memref<4x16x8x128xbf16, #tpu.memory_space<vmem>>, vector<1x1x8x128xbf16>
    %416 = vector.shape_cast %415 : vector<1x1x8x128xbf16> to vector<8x128xbf16>
    %417 = arith.extf %416 : vector<8x128xbf16> to vector<8x128xf32>
    %418 = arith.subf %417, %292 : vector<8x128xf32>
    %419 = math.exp %418 : vector<8x128xf32>
    %420 = arith.addf %405, %419 : vector<8x128xf32>
    %cst_205 = arith.constant 8.000000e+00 : f32
    %421 = vector.broadcast %cst_205 : f32 to vector<8x128xf32>
    %422 = arith.subf %228, %421 : vector<8x128xf32>
    %423 = math.absf %422 : vector<8x128xf32>
    %cst_206 = arith.constant 1.000000e+00 : f32
    %424 = vector.broadcast %cst_206 : f32 to vector<8x128xf32>
    %425 = arith.subf %424, %423 : vector<8x128xf32>
    %cst_207 = arith.constant 0.000000e+00 : f32
    %426 = vector.broadcast %cst_207 : f32 to vector<8x128xf32>
    %427 = arith.maximumf %425, %426 : vector<8x128xf32>
    %428 = arith.mulf %417, %427 : vector<8x128xf32>
    %429 = arith.addf %414, %428 : vector<8x128xf32>
    %c0_208 = arith.constant 0 : index
    %c9_209 = arith.constant 9 : index
    %c0_210 = arith.constant 0 : index
    %c0_211 = arith.constant 0 : index
    %430 = vector.load %arg1[%c0_208, %c9_209, %c0_210, %c0_211] : memref<4x16x8x128xbf16, #tpu.memory_space<vmem>>, vector<1x1x8x128xbf16>
    %431 = vector.shape_cast %430 : vector<1x1x8x128xbf16> to vector<8x128xbf16>
    %432 = arith.extf %431 : vector<8x128xbf16> to vector<8x128xf32>
    %433 = arith.subf %432, %292 : vector<8x128xf32>
    %434 = math.exp %433 : vector<8x128xf32>
    %435 = arith.addf %420, %434 : vector<8x128xf32>
    %cst_212 = arith.constant 9.000000e+00 : f32
    %436 = vector.broadcast %cst_212 : f32 to vector<8x128xf32>
    %437 = arith.subf %228, %436 : vector<8x128xf32>
    %438 = math.absf %437 : vector<8x128xf32>
    %cst_213 = arith.constant 1.000000e+00 : f32
    %439 = vector.broadcast %cst_213 : f32 to vector<8x128xf32>
    %440 = arith.subf %439, %438 : vector<8x128xf32>
    %cst_214 = arith.constant 0.000000e+00 : f32
    %441 = vector.broadcast %cst_214 : f32 to vector<8x128xf32>
    %442 = arith.maximumf %440, %441 : vector<8x128xf32>
    %443 = arith.mulf %432, %442 : vector<8x128xf32>
    %444 = arith.addf %429, %443 : vector<8x128xf32>
    %c0_215 = arith.constant 0 : index
    %c10_216 = arith.constant 10 : index
    %c0_217 = arith.constant 0 : index
    %c0_218 = arith.constant 0 : index
    %445 = vector.load %arg1[%c0_215, %c10_216, %c0_217, %c0_218] : memref<4x16x8x128xbf16, #tpu.memory_space<vmem>>, vector<1x1x8x128xbf16>
    %446 = vector.shape_cast %445 : vector<1x1x8x128xbf16> to vector<8x128xbf16>
    %447 = arith.extf %446 : vector<8x128xbf16> to vector<8x128xf32>
    %448 = arith.subf %447, %292 : vector<8x128xf32>
    %449 = math.exp %448 : vector<8x128xf32>
    %450 = arith.addf %435, %449 : vector<8x128xf32>
    %cst_219 = arith.constant 1.000000e+01 : f32
    %451 = vector.broadcast %cst_219 : f32 to vector<8x128xf32>
    %452 = arith.subf %228, %451 : vector<8x128xf32>
    %453 = math.absf %452 : vector<8x128xf32>
    %cst_220 = arith.constant 1.000000e+00 : f32
    %454 = vector.broadcast %cst_220 : f32 to vector<8x128xf32>
    %455 = arith.subf %454, %453 : vector<8x128xf32>
    %cst_221 = arith.constant 0.000000e+00 : f32
    %456 = vector.broadcast %cst_221 : f32 to vector<8x128xf32>
    %457 = arith.maximumf %455, %456 : vector<8x128xf32>
    %458 = arith.mulf %447, %457 : vector<8x128xf32>
    %459 = arith.addf %444, %458 : vector<8x128xf32>
    %c0_222 = arith.constant 0 : index
    %c11_223 = arith.constant 11 : index
    %c0_224 = arith.constant 0 : index
    %c0_225 = arith.constant 0 : index
    %460 = vector.load %arg1[%c0_222, %c11_223, %c0_224, %c0_225] : memref<4x16x8x128xbf16, #tpu.memory_space<vmem>>, vector<1x1x8x128xbf16>
    %461 = vector.shape_cast %460 : vector<1x1x8x128xbf16> to vector<8x128xbf16>
    %462 = arith.extf %461 : vector<8x128xbf16> to vector<8x128xf32>
    %463 = arith.subf %462, %292 : vector<8x128xf32>
    %464 = math.exp %463 : vector<8x128xf32>
    %465 = arith.addf %450, %464 : vector<8x128xf32>
    %cst_226 = arith.constant 1.100000e+01 : f32
    %466 = vector.broadcast %cst_226 : f32 to vector<8x128xf32>
    %467 = arith.subf %228, %466 : vector<8x128xf32>
    %468 = math.absf %467 : vector<8x128xf32>
    %cst_227 = arith.constant 1.000000e+00 : f32
    %469 = vector.broadcast %cst_227 : f32 to vector<8x128xf32>
    %470 = arith.subf %469, %468 : vector<8x128xf32>
    %cst_228 = arith.constant 0.000000e+00 : f32
    %471 = vector.broadcast %cst_228 : f32 to vector<8x128xf32>
    %472 = arith.maximumf %470, %471 : vector<8x128xf32>
    %473 = arith.mulf %462, %472 : vector<8x128xf32>
    %474 = arith.addf %459, %473 : vector<8x128xf32>
    %c0_229 = arith.constant 0 : index
    %c12_230 = arith.constant 12 : index
    %c0_231 = arith.constant 0 : index
    %c0_232 = arith.constant 0 : index
    %475 = vector.load %arg1[%c0_229, %c12_230, %c0_231, %c0_232] : memref<4x16x8x128xbf16, #tpu.memory_space<vmem>>, vector<1x1x8x128xbf16>
    %476 = vector.shape_cast %475 : vector<1x1x8x128xbf16> to vector<8x128xbf16>
    %477 = arith.extf %476 : vector<8x128xbf16> to vector<8x128xf32>
    %478 = arith.subf %477, %292 : vector<8x128xf32>
    %479 = math.exp %478 : vector<8x128xf32>
    %480 = arith.addf %465, %479 : vector<8x128xf32>
    %cst_233 = arith.constant 1.200000e+01 : f32
    %481 = vector.broadcast %cst_233 : f32 to vector<8x128xf32>
    %482 = arith.subf %228, %481 : vector<8x128xf32>
    %483 = math.absf %482 : vector<8x128xf32>
    %cst_234 = arith.constant 1.000000e+00 : f32
    %484 = vector.broadcast %cst_234 : f32 to vector<8x128xf32>
    %485 = arith.subf %484, %483 : vector<8x128xf32>
    %cst_235 = arith.constant 0.000000e+00 : f32
    %486 = vector.broadcast %cst_235 : f32 to vector<8x128xf32>
    %487 = arith.maximumf %485, %486 : vector<8x128xf32>
    %488 = arith.mulf %477, %487 : vector<8x128xf32>
    %489 = arith.addf %474, %488 : vector<8x128xf32>
    %c0_236 = arith.constant 0 : index
    %c13_237 = arith.constant 13 : index
    %c0_238 = arith.constant 0 : index
    %c0_239 = arith.constant 0 : index
    %490 = vector.load %arg1[%c0_236, %c13_237, %c0_238, %c0_239] : memref<4x16x8x128xbf16, #tpu.memory_space<vmem>>, vector<1x1x8x128xbf16>
    %491 = vector.shape_cast %490 : vector<1x1x8x128xbf16> to vector<8x128xbf16>
    %492 = arith.extf %491 : vector<8x128xbf16> to vector<8x128xf32>
    %493 = arith.subf %492, %292 : vector<8x128xf32>
    %494 = math.exp %493 : vector<8x128xf32>
    %495 = arith.addf %480, %494 : vector<8x128xf32>
    %cst_240 = arith.constant 1.300000e+01 : f32
    %496 = vector.broadcast %cst_240 : f32 to vector<8x128xf32>
    %497 = arith.subf %228, %496 : vector<8x128xf32>
    %498 = math.absf %497 : vector<8x128xf32>
    %cst_241 = arith.constant 1.000000e+00 : f32
    %499 = vector.broadcast %cst_241 : f32 to vector<8x128xf32>
    %500 = arith.subf %499, %498 : vector<8x128xf32>
    %cst_242 = arith.constant 0.000000e+00 : f32
    %501 = vector.broadcast %cst_242 : f32 to vector<8x128xf32>
    %502 = arith.maximumf %500, %501 : vector<8x128xf32>
    %503 = arith.mulf %492, %502 : vector<8x128xf32>
    %504 = arith.addf %489, %503 : vector<8x128xf32>
    %c0_243 = arith.constant 0 : index
    %c14_244 = arith.constant 14 : index
    %c0_245 = arith.constant 0 : index
    %c0_246 = arith.constant 0 : index
    %505 = vector.load %arg1[%c0_243, %c14_244, %c0_245, %c0_246] : memref<4x16x8x128xbf16, #tpu.memory_space<vmem>>, vector<1x1x8x128xbf16>
    %506 = vector.shape_cast %505 : vector<1x1x8x128xbf16> to vector<8x128xbf16>
    %507 = arith.extf %506 : vector<8x128xbf16> to vector<8x128xf32>
    %508 = arith.subf %507, %292 : vector<8x128xf32>
    %509 = math.exp %508 : vector<8x128xf32>
    %510 = arith.addf %495, %509 : vector<8x128xf32>
    %cst_247 = arith.constant 1.400000e+01 : f32
    %511 = vector.broadcast %cst_247 : f32 to vector<8x128xf32>
    %512 = arith.subf %228, %511 : vector<8x128xf32>
    %513 = math.absf %512 : vector<8x128xf32>
    %cst_248 = arith.constant 1.000000e+00 : f32
    %514 = vector.broadcast %cst_248 : f32 to vector<8x128xf32>
    %515 = arith.subf %514, %513 : vector<8x128xf32>
    %cst_249 = arith.constant 0.000000e+00 : f32
    %516 = vector.broadcast %cst_249 : f32 to vector<8x128xf32>
    %517 = arith.maximumf %515, %516 : vector<8x128xf32>
    %518 = arith.mulf %507, %517 : vector<8x128xf32>
    %519 = arith.addf %504, %518 : vector<8x128xf32>
    %c0_250 = arith.constant 0 : index
    %c15_251 = arith.constant 15 : index
    %c0_252 = arith.constant 0 : index
    %c0_253 = arith.constant 0 : index
    %520 = vector.load %arg1[%c0_250, %c15_251, %c0_252, %c0_253] : memref<4x16x8x128xbf16, #tpu.memory_space<vmem>>, vector<1x1x8x128xbf16>
    %521 = vector.shape_cast %520 : vector<1x1x8x128xbf16> to vector<8x128xbf16>
    %522 = arith.extf %521 : vector<8x128xbf16> to vector<8x128xf32>
    %523 = arith.subf %522, %292 : vector<8x128xf32>
    %524 = math.exp %523 : vector<8x128xf32>
    %525 = arith.addf %510, %524 : vector<8x128xf32>
    %cst_254 = arith.constant 1.500000e+01 : f32
    %526 = vector.broadcast %cst_254 : f32 to vector<8x128xf32>
    %527 = arith.subf %228, %526 : vector<8x128xf32>
    %528 = math.absf %527 : vector<8x128xf32>
    %cst_255 = arith.constant 1.000000e+00 : f32
    %529 = vector.broadcast %cst_255 : f32 to vector<8x128xf32>
    %530 = arith.subf %529, %528 : vector<8x128xf32>
    %cst_256 = arith.constant 0.000000e+00 : f32
    %531 = vector.broadcast %cst_256 : f32 to vector<8x128xf32>
    %532 = arith.maximumf %530, %531 : vector<8x128xf32>
    %533 = arith.mulf %522, %532 : vector<8x128xf32>
    %534 = arith.addf %519, %533 : vector<8x128xf32>
    %535 = math.log %525 : vector<8x128xf32>
    %536 = arith.addf %535, %292 : vector<8x128xf32>
    %537 = arith.subf %536, %534 : vector<8x128xf32>
    %538 = arith.addf %244, %537 : vector<8x128xf32>
    %c1_257 = arith.constant 1 : index
    %c0_258 = arith.constant 0 : index
    %c0_259 = arith.constant 0 : index
    %c0_260 = arith.constant 0 : index
    %539 = vector.load %arg1[%c1_257, %c0_258, %c0_259, %c0_260] : memref<4x16x8x128xbf16, #tpu.memory_space<vmem>>, vector<1x1x8x128xbf16>
    %540 = vector.shape_cast %539 : vector<1x1x8x128xbf16> to vector<8x128xbf16>
    %c1_261 = arith.constant 1 : index
    %c1_262 = arith.constant 1 : index
    %c0_263 = arith.constant 0 : index
    %c0_264 = arith.constant 0 : index
    %541 = vector.load %arg1[%c1_261, %c1_262, %c0_263, %c0_264] : memref<4x16x8x128xbf16, #tpu.memory_space<vmem>>, vector<1x1x8x128xbf16>
    %542 = vector.shape_cast %541 : vector<1x1x8x128xbf16> to vector<8x128xbf16>
    %543 = arith.maximumf %540, %542 : vector<8x128xbf16>
    %c1_265 = arith.constant 1 : index
    %c2_266 = arith.constant 2 : index
    %c0_267 = arith.constant 0 : index
    %c0_268 = arith.constant 0 : index
    %544 = vector.load %arg1[%c1_265, %c2_266, %c0_267, %c0_268] : memref<4x16x8x128xbf16, #tpu.memory_space<vmem>>, vector<1x1x8x128xbf16>
    %545 = vector.shape_cast %544 : vector<1x1x8x128xbf16> to vector<8x128xbf16>
    %546 = arith.maximumf %543, %545 : vector<8x128xbf16>
    %c1_269 = arith.constant 1 : index
    %c3_270 = arith.constant 3 : index
    %c0_271 = arith.constant 0 : index
    %c0_272 = arith.constant 0 : index
    %547 = vector.load %arg1[%c1_269, %c3_270, %c0_271, %c0_272] : memref<4x16x8x128xbf16, #tpu.memory_space<vmem>>, vector<1x1x8x128xbf16>
    %548 = vector.shape_cast %547 : vector<1x1x8x128xbf16> to vector<8x128xbf16>
    %549 = arith.maximumf %546, %548 : vector<8x128xbf16>
    %c1_273 = arith.constant 1 : index
    %c4_274 = arith.constant 4 : index
    %c0_275 = arith.constant 0 : index
    %c0_276 = arith.constant 0 : index
    %550 = vector.load %arg1[%c1_273, %c4_274, %c0_275, %c0_276] : memref<4x16x8x128xbf16, #tpu.memory_space<vmem>>, vector<1x1x8x128xbf16>
    %551 = vector.shape_cast %550 : vector<1x1x8x128xbf16> to vector<8x128xbf16>
    %552 = arith.maximumf %549, %551 : vector<8x128xbf16>
    %c1_277 = arith.constant 1 : index
    %c5_278 = arith.constant 5 : index
    %c0_279 = arith.constant 0 : index
    %c0_280 = arith.constant 0 : index
    %553 = vector.load %arg1[%c1_277, %c5_278, %c0_279, %c0_280] : memref<4x16x8x128xbf16, #tpu.memory_space<vmem>>, vector<1x1x8x128xbf16>
    %554 = vector.shape_cast %553 : vector<1x1x8x128xbf16> to vector<8x128xbf16>
    %555 = arith.maximumf %552, %554 : vector<8x128xbf16>
    %c1_281 = arith.constant 1 : index
    %c6_282 = arith.constant 6 : index
    %c0_283 = arith.constant 0 : index
    %c0_284 = arith.constant 0 : index
    %556 = vector.load %arg1[%c1_281, %c6_282, %c0_283, %c0_284] : memref<4x16x8x128xbf16, #tpu.memory_space<vmem>>, vector<1x1x8x128xbf16>
    %557 = vector.shape_cast %556 : vector<1x1x8x128xbf16> to vector<8x128xbf16>
    %558 = arith.maximumf %555, %557 : vector<8x128xbf16>
    %c1_285 = arith.constant 1 : index
    %c7_286 = arith.constant 7 : index
    %c0_287 = arith.constant 0 : index
    %c0_288 = arith.constant 0 : index
    %559 = vector.load %arg1[%c1_285, %c7_286, %c0_287, %c0_288] : memref<4x16x8x128xbf16, #tpu.memory_space<vmem>>, vector<1x1x8x128xbf16>
    %560 = vector.shape_cast %559 : vector<1x1x8x128xbf16> to vector<8x128xbf16>
    %561 = arith.maximumf %558, %560 : vector<8x128xbf16>
    %c1_289 = arith.constant 1 : index
    %c8_290 = arith.constant 8 : index
    %c0_291 = arith.constant 0 : index
    %c0_292 = arith.constant 0 : index
    %562 = vector.load %arg1[%c1_289, %c8_290, %c0_291, %c0_292] : memref<4x16x8x128xbf16, #tpu.memory_space<vmem>>, vector<1x1x8x128xbf16>
    %563 = vector.shape_cast %562 : vector<1x1x8x128xbf16> to vector<8x128xbf16>
    %564 = arith.maximumf %561, %563 : vector<8x128xbf16>
    %c1_293 = arith.constant 1 : index
    %c9_294 = arith.constant 9 : index
    %c0_295 = arith.constant 0 : index
    %c0_296 = arith.constant 0 : index
    %565 = vector.load %arg1[%c1_293, %c9_294, %c0_295, %c0_296] : memref<4x16x8x128xbf16, #tpu.memory_space<vmem>>, vector<1x1x8x128xbf16>
    %566 = vector.shape_cast %565 : vector<1x1x8x128xbf16> to vector<8x128xbf16>
    %567 = arith.maximumf %564, %566 : vector<8x128xbf16>
    %c1_297 = arith.constant 1 : index
    %c10_298 = arith.constant 10 : index
    %c0_299 = arith.constant 0 : index
    %c0_300 = arith.constant 0 : index
    %568 = vector.load %arg1[%c1_297, %c10_298, %c0_299, %c0_300] : memref<4x16x8x128xbf16, #tpu.memory_space<vmem>>, vector<1x1x8x128xbf16>
    %569 = vector.shape_cast %568 : vector<1x1x8x128xbf16> to vector<8x128xbf16>
    %570 = arith.maximumf %567, %569 : vector<8x128xbf16>
    %c1_301 = arith.constant 1 : index
    %c11_302 = arith.constant 11 : index
    %c0_303 = arith.constant 0 : index
    %c0_304 = arith.constant 0 : index
    %571 = vector.load %arg1[%c1_301, %c11_302, %c0_303, %c0_304] : memref<4x16x8x128xbf16, #tpu.memory_space<vmem>>, vector<1x1x8x128xbf16>
    %572 = vector.shape_cast %571 : vector<1x1x8x128xbf16> to vector<8x128xbf16>
    %573 = arith.maximumf %570, %572 : vector<8x128xbf16>
    %c1_305 = arith.constant 1 : index
    %c12_306 = arith.constant 12 : index
    %c0_307 = arith.constant 0 : index
    %c0_308 = arith.constant 0 : index
    %574 = vector.load %arg1[%c1_305, %c12_306, %c0_307, %c0_308] : memref<4x16x8x128xbf16, #tpu.memory_space<vmem>>, vector<1x1x8x128xbf16>
    %575 = vector.shape_cast %574 : vector<1x1x8x128xbf16> to vector<8x128xbf16>
    %576 = arith.maximumf %573, %575 : vector<8x128xbf16>
    %c1_309 = arith.constant 1 : index
    %c13_310 = arith.constant 13 : index
    %c0_311 = arith.constant 0 : index
    %c0_312 = arith.constant 0 : index
    %577 = vector.load %arg1[%c1_309, %c13_310, %c0_311, %c0_312] : memref<4x16x8x128xbf16, #tpu.memory_space<vmem>>, vector<1x1x8x128xbf16>
    %578 = vector.shape_cast %577 : vector<1x1x8x128xbf16> to vector<8x128xbf16>
    %579 = arith.maximumf %576, %578 : vector<8x128xbf16>
    %c1_313 = arith.constant 1 : index
    %c14_314 = arith.constant 14 : index
    %c0_315 = arith.constant 0 : index
    %c0_316 = arith.constant 0 : index
    %580 = vector.load %arg1[%c1_313, %c14_314, %c0_315, %c0_316] : memref<4x16x8x128xbf16, #tpu.memory_space<vmem>>, vector<1x1x8x128xbf16>
    %581 = vector.shape_cast %580 : vector<1x1x8x128xbf16> to vector<8x128xbf16>
    %582 = arith.maximumf %579, %581 : vector<8x128xbf16>
    %c1_317 = arith.constant 1 : index
    %c15_318 = arith.constant 15 : index
    %c0_319 = arith.constant 0 : index
    %c0_320 = arith.constant 0 : index
    %583 = vector.load %arg1[%c1_317, %c15_318, %c0_319, %c0_320] : memref<4x16x8x128xbf16, #tpu.memory_space<vmem>>, vector<1x1x8x128xbf16>
    %584 = vector.shape_cast %583 : vector<1x1x8x128xbf16> to vector<8x128xbf16>
    %585 = arith.maximumf %582, %584 : vector<8x128xbf16>
    %586 = arith.extf %585 : vector<8x128xbf16> to vector<8x128xf32>
    %cst_321 = arith.constant 0.000000e+00 : f32
    %587 = vector.broadcast %cst_321 : f32 to vector<8x128xf32>
    %cst_322 = arith.constant 0.000000e+00 : f32
    %588 = vector.broadcast %cst_322 : f32 to vector<8x128xf32>
    %c1_323 = arith.constant 1 : index
    %c0_324 = arith.constant 0 : index
    %c0_325 = arith.constant 0 : index
    %c0_326 = arith.constant 0 : index
    %589 = vector.load %arg1[%c1_323, %c0_324, %c0_325, %c0_326] : memref<4x16x8x128xbf16, #tpu.memory_space<vmem>>, vector<1x1x8x128xbf16>
    %590 = vector.shape_cast %589 : vector<1x1x8x128xbf16> to vector<8x128xbf16>
    %591 = arith.extf %590 : vector<8x128xbf16> to vector<8x128xf32>
    %592 = arith.subf %591, %586 : vector<8x128xf32>
    %593 = math.exp %592 : vector<8x128xf32>
    %594 = arith.addf %587, %593 : vector<8x128xf32>
    %cst_327 = arith.constant 0.000000e+00 : f32
    %595 = vector.broadcast %cst_327 : f32 to vector<8x128xf32>
    %596 = arith.subf %233, %595 : vector<8x128xf32>
    %597 = math.absf %596 : vector<8x128xf32>
    %cst_328 = arith.constant 1.000000e+00 : f32
    %598 = vector.broadcast %cst_328 : f32 to vector<8x128xf32>
    %599 = arith.subf %598, %597 : vector<8x128xf32>
    %cst_329 = arith.constant 0.000000e+00 : f32
    %600 = vector.broadcast %cst_329 : f32 to vector<8x128xf32>
    %601 = arith.maximumf %599, %600 : vector<8x128xf32>
    %602 = arith.mulf %591, %601 : vector<8x128xf32>
    %603 = arith.addf %588, %602 : vector<8x128xf32>
    %c1_330 = arith.constant 1 : index
    %c1_331 = arith.constant 1 : index
    %c0_332 = arith.constant 0 : index
    %c0_333 = arith.constant 0 : index
    %604 = vector.load %arg1[%c1_330, %c1_331, %c0_332, %c0_333] : memref<4x16x8x128xbf16, #tpu.memory_space<vmem>>, vector<1x1x8x128xbf16>
    %605 = vector.shape_cast %604 : vector<1x1x8x128xbf16> to vector<8x128xbf16>
    %606 = arith.extf %605 : vector<8x128xbf16> to vector<8x128xf32>
    %607 = arith.subf %606, %586 : vector<8x128xf32>
    %608 = math.exp %607 : vector<8x128xf32>
    %609 = arith.addf %594, %608 : vector<8x128xf32>
    %cst_334 = arith.constant 1.000000e+00 : f32
    %610 = vector.broadcast %cst_334 : f32 to vector<8x128xf32>
    %611 = arith.subf %233, %610 : vector<8x128xf32>
    %612 = math.absf %611 : vector<8x128xf32>
    %cst_335 = arith.constant 1.000000e+00 : f32
    %613 = vector.broadcast %cst_335 : f32 to vector<8x128xf32>
    %614 = arith.subf %613, %612 : vector<8x128xf32>
    %cst_336 = arith.constant 0.000000e+00 : f32
    %615 = vector.broadcast %cst_336 : f32 to vector<8x128xf32>
    %616 = arith.maximumf %614, %615 : vector<8x128xf32>
    %617 = arith.mulf %606, %616 : vector<8x128xf32>
    %618 = arith.addf %603, %617 : vector<8x128xf32>
    %c1_337 = arith.constant 1 : index
    %c2_338 = arith.constant 2 : index
    %c0_339 = arith.constant 0 : index
    %c0_340 = arith.constant 0 : index
    %619 = vector.load %arg1[%c1_337, %c2_338, %c0_339, %c0_340] : memref<4x16x8x128xbf16, #tpu.memory_space<vmem>>, vector<1x1x8x128xbf16>
    %620 = vector.shape_cast %619 : vector<1x1x8x128xbf16> to vector<8x128xbf16>
    %621 = arith.extf %620 : vector<8x128xbf16> to vector<8x128xf32>
    %622 = arith.subf %621, %586 : vector<8x128xf32>
    %623 = math.exp %622 : vector<8x128xf32>
    %624 = arith.addf %609, %623 : vector<8x128xf32>
    %cst_341 = arith.constant 2.000000e+00 : f32
    %625 = vector.broadcast %cst_341 : f32 to vector<8x128xf32>
    %626 = arith.subf %233, %625 : vector<8x128xf32>
    %627 = math.absf %626 : vector<8x128xf32>
    %cst_342 = arith.constant 1.000000e+00 : f32
    %628 = vector.broadcast %cst_342 : f32 to vector<8x128xf32>
    %629 = arith.subf %628, %627 : vector<8x128xf32>
    %cst_343 = arith.constant 0.000000e+00 : f32
    %630 = vector.broadcast %cst_343 : f32 to vector<8x128xf32>
    %631 = arith.maximumf %629, %630 : vector<8x128xf32>
    %632 = arith.mulf %621, %631 : vector<8x128xf32>
    %633 = arith.addf %618, %632 : vector<8x128xf32>
    %c1_344 = arith.constant 1 : index
    %c3_345 = arith.constant 3 : index
    %c0_346 = arith.constant 0 : index
    %c0_347 = arith.constant 0 : index
    %634 = vector.load %arg1[%c1_344, %c3_345, %c0_346, %c0_347] : memref<4x16x8x128xbf16, #tpu.memory_space<vmem>>, vector<1x1x8x128xbf16>
    %635 = vector.shape_cast %634 : vector<1x1x8x128xbf16> to vector<8x128xbf16>
    %636 = arith.extf %635 : vector<8x128xbf16> to vector<8x128xf32>
    %637 = arith.subf %636, %586 : vector<8x128xf32>
    %638 = math.exp %637 : vector<8x128xf32>
    %639 = arith.addf %624, %638 : vector<8x128xf32>
    %cst_348 = arith.constant 3.000000e+00 : f32
    %640 = vector.broadcast %cst_348 : f32 to vector<8x128xf32>
    %641 = arith.subf %233, %640 : vector<8x128xf32>
    %642 = math.absf %641 : vector<8x128xf32>
    %cst_349 = arith.constant 1.000000e+00 : f32
    %643 = vector.broadcast %cst_349 : f32 to vector<8x128xf32>
    %644 = arith.subf %643, %642 : vector<8x128xf32>
    %cst_350 = arith.constant 0.000000e+00 : f32
    %645 = vector.broadcast %cst_350 : f32 to vector<8x128xf32>
    %646 = arith.maximumf %644, %645 : vector<8x128xf32>
    %647 = arith.mulf %636, %646 : vector<8x128xf32>
    %648 = arith.addf %633, %647 : vector<8x128xf32>
    %c1_351 = arith.constant 1 : index
    %c4_352 = arith.constant 4 : index
    %c0_353 = arith.constant 0 : index
    %c0_354 = arith.constant 0 : index
    %649 = vector.load %arg1[%c1_351, %c4_352, %c0_353, %c0_354] : memref<4x16x8x128xbf16, #tpu.memory_space<vmem>>, vector<1x1x8x128xbf16>
    %650 = vector.shape_cast %649 : vector<1x1x8x128xbf16> to vector<8x128xbf16>
    %651 = arith.extf %650 : vector<8x128xbf16> to vector<8x128xf32>
    %652 = arith.subf %651, %586 : vector<8x128xf32>
    %653 = math.exp %652 : vector<8x128xf32>
    %654 = arith.addf %639, %653 : vector<8x128xf32>
    %cst_355 = arith.constant 4.000000e+00 : f32
    %655 = vector.broadcast %cst_355 : f32 to vector<8x128xf32>
    %656 = arith.subf %233, %655 : vector<8x128xf32>
    %657 = math.absf %656 : vector<8x128xf32>
    %cst_356 = arith.constant 1.000000e+00 : f32
    %658 = vector.broadcast %cst_356 : f32 to vector<8x128xf32>
    %659 = arith.subf %658, %657 : vector<8x128xf32>
    %cst_357 = arith.constant 0.000000e+00 : f32
    %660 = vector.broadcast %cst_357 : f32 to vector<8x128xf32>
    %661 = arith.maximumf %659, %660 : vector<8x128xf32>
    %662 = arith.mulf %651, %661 : vector<8x128xf32>
    %663 = arith.addf %648, %662 : vector<8x128xf32>
    %c1_358 = arith.constant 1 : index
    %c5_359 = arith.constant 5 : index
    %c0_360 = arith.constant 0 : index
    %c0_361 = arith.constant 0 : index
    %664 = vector.load %arg1[%c1_358, %c5_359, %c0_360, %c0_361] : memref<4x16x8x128xbf16, #tpu.memory_space<vmem>>, vector<1x1x8x128xbf16>
    %665 = vector.shape_cast %664 : vector<1x1x8x128xbf16> to vector<8x128xbf16>
    %666 = arith.extf %665 : vector<8x128xbf16> to vector<8x128xf32>
    %667 = arith.subf %666, %586 : vector<8x128xf32>
    %668 = math.exp %667 : vector<8x128xf32>
    %669 = arith.addf %654, %668 : vector<8x128xf32>
    %cst_362 = arith.constant 5.000000e+00 : f32
    %670 = vector.broadcast %cst_362 : f32 to vector<8x128xf32>
    %671 = arith.subf %233, %670 : vector<8x128xf32>
    %672 = math.absf %671 : vector<8x128xf32>
    %cst_363 = arith.constant 1.000000e+00 : f32
    %673 = vector.broadcast %cst_363 : f32 to vector<8x128xf32>
    %674 = arith.subf %673, %672 : vector<8x128xf32>
    %cst_364 = arith.constant 0.000000e+00 : f32
    %675 = vector.broadcast %cst_364 : f32 to vector<8x128xf32>
    %676 = arith.maximumf %674, %675 : vector<8x128xf32>
    %677 = arith.mulf %666, %676 : vector<8x128xf32>
    %678 = arith.addf %663, %677 : vector<8x128xf32>
    %c1_365 = arith.constant 1 : index
    %c6_366 = arith.constant 6 : index
    %c0_367 = arith.constant 0 : index
    %c0_368 = arith.constant 0 : index
    %679 = vector.load %arg1[%c1_365, %c6_366, %c0_367, %c0_368] : memref<4x16x8x128xbf16, #tpu.memory_space<vmem>>, vector<1x1x8x128xbf16>
    %680 = vector.shape_cast %679 : vector<1x1x8x128xbf16> to vector<8x128xbf16>
    %681 = arith.extf %680 : vector<8x128xbf16> to vector<8x128xf32>
    %682 = arith.subf %681, %586 : vector<8x128xf32>
    %683 = math.exp %682 : vector<8x128xf32>
    %684 = arith.addf %669, %683 : vector<8x128xf32>
    %cst_369 = arith.constant 6.000000e+00 : f32
    %685 = vector.broadcast %cst_369 : f32 to vector<8x128xf32>
    %686 = arith.subf %233, %685 : vector<8x128xf32>
    %687 = math.absf %686 : vector<8x128xf32>
    %cst_370 = arith.constant 1.000000e+00 : f32
    %688 = vector.broadcast %cst_370 : f32 to vector<8x128xf32>
    %689 = arith.subf %688, %687 : vector<8x128xf32>
    %cst_371 = arith.constant 0.000000e+00 : f32
    %690 = vector.broadcast %cst_371 : f32 to vector<8x128xf32>
    %691 = arith.maximumf %689, %690 : vector<8x128xf32>
    %692 = arith.mulf %681, %691 : vector<8x128xf32>
    %693 = arith.addf %678, %692 : vector<8x128xf32>
    %c1_372 = arith.constant 1 : index
    %c7_373 = arith.constant 7 : index
    %c0_374 = arith.constant 0 : index
    %c0_375 = arith.constant 0 : index
    %694 = vector.load %arg1[%c1_372, %c7_373, %c0_374, %c0_375] : memref<4x16x8x128xbf16, #tpu.memory_space<vmem>>, vector<1x1x8x128xbf16>
    %695 = vector.shape_cast %694 : vector<1x1x8x128xbf16> to vector<8x128xbf16>
    %696 = arith.extf %695 : vector<8x128xbf16> to vector<8x128xf32>
    %697 = arith.subf %696, %586 : vector<8x128xf32>
    %698 = math.exp %697 : vector<8x128xf32>
    %699 = arith.addf %684, %698 : vector<8x128xf32>
    %cst_376 = arith.constant 7.000000e+00 : f32
    %700 = vector.broadcast %cst_376 : f32 to vector<8x128xf32>
    %701 = arith.subf %233, %700 : vector<8x128xf32>
    %702 = math.absf %701 : vector<8x128xf32>
    %cst_377 = arith.constant 1.000000e+00 : f32
    %703 = vector.broadcast %cst_377 : f32 to vector<8x128xf32>
    %704 = arith.subf %703, %702 : vector<8x128xf32>
    %cst_378 = arith.constant 0.000000e+00 : f32
    %705 = vector.broadcast %cst_378 : f32 to vector<8x128xf32>
    %706 = arith.maximumf %704, %705 : vector<8x128xf32>
    %707 = arith.mulf %696, %706 : vector<8x128xf32>
    %708 = arith.addf %693, %707 : vector<8x128xf32>
    %c1_379 = arith.constant 1 : index
    %c8_380 = arith.constant 8 : index
    %c0_381 = arith.constant 0 : index
    %c0_382 = arith.constant 0 : index
    %709 = vector.load %arg1[%c1_379, %c8_380, %c0_381, %c0_382] : memref<4x16x8x128xbf16, #tpu.memory_space<vmem>>, vector<1x1x8x128xbf16>
    %710 = vector.shape_cast %709 : vector<1x1x8x128xbf16> to vector<8x128xbf16>
    %711 = arith.extf %710 : vector<8x128xbf16> to vector<8x128xf32>
    %712 = arith.subf %711, %586 : vector<8x128xf32>
    %713 = math.exp %712 : vector<8x128xf32>
    %714 = arith.addf %699, %713 : vector<8x128xf32>
    %cst_383 = arith.constant 8.000000e+00 : f32
    %715 = vector.broadcast %cst_383 : f32 to vector<8x128xf32>
    %716 = arith.subf %233, %715 : vector<8x128xf32>
    %717 = math.absf %716 : vector<8x128xf32>
    %cst_384 = arith.constant 1.000000e+00 : f32
    %718 = vector.broadcast %cst_384 : f32 to vector<8x128xf32>
    %719 = arith.subf %718, %717 : vector<8x128xf32>
    %cst_385 = arith.constant 0.000000e+00 : f32
    %720 = vector.broadcast %cst_385 : f32 to vector<8x128xf32>
    %721 = arith.maximumf %719, %720 : vector<8x128xf32>
    %722 = arith.mulf %711, %721 : vector<8x128xf32>
    %723 = arith.addf %708, %722 : vector<8x128xf32>
    %c1_386 = arith.constant 1 : index
    %c9_387 = arith.constant 9 : index
    %c0_388 = arith.constant 0 : index
    %c0_389 = arith.constant 0 : index
    %724 = vector.load %arg1[%c1_386, %c9_387, %c0_388, %c0_389] : memref<4x16x8x128xbf16, #tpu.memory_space<vmem>>, vector<1x1x8x128xbf16>
    %725 = vector.shape_cast %724 : vector<1x1x8x128xbf16> to vector<8x128xbf16>
    %726 = arith.extf %725 : vector<8x128xbf16> to vector<8x128xf32>
    %727 = arith.subf %726, %586 : vector<8x128xf32>
    %728 = math.exp %727 : vector<8x128xf32>
    %729 = arith.addf %714, %728 : vector<8x128xf32>
    %cst_390 = arith.constant 9.000000e+00 : f32
    %730 = vector.broadcast %cst_390 : f32 to vector<8x128xf32>
    %731 = arith.subf %233, %730 : vector<8x128xf32>
    %732 = math.absf %731 : vector<8x128xf32>
    %cst_391 = arith.constant 1.000000e+00 : f32
    %733 = vector.broadcast %cst_391 : f32 to vector<8x128xf32>
    %734 = arith.subf %733, %732 : vector<8x128xf32>
    %cst_392 = arith.constant 0.000000e+00 : f32
    %735 = vector.broadcast %cst_392 : f32 to vector<8x128xf32>
    %736 = arith.maximumf %734, %735 : vector<8x128xf32>
    %737 = arith.mulf %726, %736 : vector<8x128xf32>
    %738 = arith.addf %723, %737 : vector<8x128xf32>
    %c1_393 = arith.constant 1 : index
    %c10_394 = arith.constant 10 : index
    %c0_395 = arith.constant 0 : index
    %c0_396 = arith.constant 0 : index
    %739 = vector.load %arg1[%c1_393, %c10_394, %c0_395, %c0_396] : memref<4x16x8x128xbf16, #tpu.memory_space<vmem>>, vector<1x1x8x128xbf16>
    %740 = vector.shape_cast %739 : vector<1x1x8x128xbf16> to vector<8x128xbf16>
    %741 = arith.extf %740 : vector<8x128xbf16> to vector<8x128xf32>
    %742 = arith.subf %741, %586 : vector<8x128xf32>
    %743 = math.exp %742 : vector<8x128xf32>
    %744 = arith.addf %729, %743 : vector<8x128xf32>
    %cst_397 = arith.constant 1.000000e+01 : f32
    %745 = vector.broadcast %cst_397 : f32 to vector<8x128xf32>
    %746 = arith.subf %233, %745 : vector<8x128xf32>
    %747 = math.absf %746 : vector<8x128xf32>
    %cst_398 = arith.constant 1.000000e+00 : f32
    %748 = vector.broadcast %cst_398 : f32 to vector<8x128xf32>
    %749 = arith.subf %748, %747 : vector<8x128xf32>
    %cst_399 = arith.constant 0.000000e+00 : f32
    %750 = vector.broadcast %cst_399 : f32 to vector<8x128xf32>
    %751 = arith.maximumf %749, %750 : vector<8x128xf32>
    %752 = arith.mulf %741, %751 : vector<8x128xf32>
    %753 = arith.addf %738, %752 : vector<8x128xf32>
    %c1_400 = arith.constant 1 : index
    %c11_401 = arith.constant 11 : index
    %c0_402 = arith.constant 0 : index
    %c0_403 = arith.constant 0 : index
    %754 = vector.load %arg1[%c1_400, %c11_401, %c0_402, %c0_403] : memref<4x16x8x128xbf16, #tpu.memory_space<vmem>>, vector<1x1x8x128xbf16>
    %755 = vector.shape_cast %754 : vector<1x1x8x128xbf16> to vector<8x128xbf16>
    %756 = arith.extf %755 : vector<8x128xbf16> to vector<8x128xf32>
    %757 = arith.subf %756, %586 : vector<8x128xf32>
    %758 = math.exp %757 : vector<8x128xf32>
    %759 = arith.addf %744, %758 : vector<8x128xf32>
    %cst_404 = arith.constant 1.100000e+01 : f32
    %760 = vector.broadcast %cst_404 : f32 to vector<8x128xf32>
    %761 = arith.subf %233, %760 : vector<8x128xf32>
    %762 = math.absf %761 : vector<8x128xf32>
    %cst_405 = arith.constant 1.000000e+00 : f32
    %763 = vector.broadcast %cst_405 : f32 to vector<8x128xf32>
    %764 = arith.subf %763, %762 : vector<8x128xf32>
    %cst_406 = arith.constant 0.000000e+00 : f32
    %765 = vector.broadcast %cst_406 : f32 to vector<8x128xf32>
    %766 = arith.maximumf %764, %765 : vector<8x128xf32>
    %767 = arith.mulf %756, %766 : vector<8x128xf32>
    %768 = arith.addf %753, %767 : vector<8x128xf32>
    %c1_407 = arith.constant 1 : index
    %c12_408 = arith.constant 12 : index
    %c0_409 = arith.constant 0 : index
    %c0_410 = arith.constant 0 : index
    %769 = vector.load %arg1[%c1_407, %c12_408, %c0_409, %c0_410] : memref<4x16x8x128xbf16, #tpu.memory_space<vmem>>, vector<1x1x8x128xbf16>
    %770 = vector.shape_cast %769 : vector<1x1x8x128xbf16> to vector<8x128xbf16>
    %771 = arith.extf %770 : vector<8x128xbf16> to vector<8x128xf32>
    %772 = arith.subf %771, %586 : vector<8x128xf32>
    %773 = math.exp %772 : vector<8x128xf32>
    %774 = arith.addf %759, %773 : vector<8x128xf32>
    %cst_411 = arith.constant 1.200000e+01 : f32
    %775 = vector.broadcast %cst_411 : f32 to vector<8x128xf32>
    %776 = arith.subf %233, %775 : vector<8x128xf32>
    %777 = math.absf %776 : vector<8x128xf32>
    %cst_412 = arith.constant 1.000000e+00 : f32
    %778 = vector.broadcast %cst_412 : f32 to vector<8x128xf32>
    %779 = arith.subf %778, %777 : vector<8x128xf32>
    %cst_413 = arith.constant 0.000000e+00 : f32
    %780 = vector.broadcast %cst_413 : f32 to vector<8x128xf32>
    %781 = arith.maximumf %779, %780 : vector<8x128xf32>
    %782 = arith.mulf %771, %781 : vector<8x128xf32>
    %783 = arith.addf %768, %782 : vector<8x128xf32>
    %c1_414 = arith.constant 1 : index
    %c13_415 = arith.constant 13 : index
    %c0_416 = arith.constant 0 : index
    %c0_417 = arith.constant 0 : index
    %784 = vector.load %arg1[%c1_414, %c13_415, %c0_416, %c0_417] : memref<4x16x8x128xbf16, #tpu.memory_space<vmem>>, vector<1x1x8x128xbf16>
    %785 = vector.shape_cast %784 : vector<1x1x8x128xbf16> to vector<8x128xbf16>
    %786 = arith.extf %785 : vector<8x128xbf16> to vector<8x128xf32>
    %787 = arith.subf %786, %586 : vector<8x128xf32>
    %788 = math.exp %787 : vector<8x128xf32>
    %789 = arith.addf %774, %788 : vector<8x128xf32>
    %cst_418 = arith.constant 1.300000e+01 : f32
    %790 = vector.broadcast %cst_418 : f32 to vector<8x128xf32>
    %791 = arith.subf %233, %790 : vector<8x128xf32>
    %792 = math.absf %791 : vector<8x128xf32>
    %cst_419 = arith.constant 1.000000e+00 : f32
    %793 = vector.broadcast %cst_419 : f32 to vector<8x128xf32>
    %794 = arith.subf %793, %792 : vector<8x128xf32>
    %cst_420 = arith.constant 0.000000e+00 : f32
    %795 = vector.broadcast %cst_420 : f32 to vector<8x128xf32>
    %796 = arith.maximumf %794, %795 : vector<8x128xf32>
    %797 = arith.mulf %786, %796 : vector<8x128xf32>
    %798 = arith.addf %783, %797 : vector<8x128xf32>
    %c1_421 = arith.constant 1 : index
    %c14_422 = arith.constant 14 : index
    %c0_423 = arith.constant 0 : index
    %c0_424 = arith.constant 0 : index
    %799 = vector.load %arg1[%c1_421, %c14_422, %c0_423, %c0_424] : memref<4x16x8x128xbf16, #tpu.memory_space<vmem>>, vector<1x1x8x128xbf16>
    %800 = vector.shape_cast %799 : vector<1x1x8x128xbf16> to vector<8x128xbf16>
    %801 = arith.extf %800 : vector<8x128xbf16> to vector<8x128xf32>
    %802 = arith.subf %801, %586 : vector<8x128xf32>
    %803 = math.exp %802 : vector<8x128xf32>
    %804 = arith.addf %789, %803 : vector<8x128xf32>
    %cst_425 = arith.constant 1.400000e+01 : f32
    %805 = vector.broadcast %cst_425 : f32 to vector<8x128xf32>
    %806 = arith.subf %233, %805 : vector<8x128xf32>
    %807 = math.absf %806 : vector<8x128xf32>
    %cst_426 = arith.constant 1.000000e+00 : f32
    %808 = vector.broadcast %cst_426 : f32 to vector<8x128xf32>
    %809 = arith.subf %808, %807 : vector<8x128xf32>
    %cst_427 = arith.constant 0.000000e+00 : f32
    %810 = vector.broadcast %cst_427 : f32 to vector<8x128xf32>
    %811 = arith.maximumf %809, %810 : vector<8x128xf32>
    %812 = arith.mulf %801, %811 : vector<8x128xf32>
    %813 = arith.addf %798, %812 : vector<8x128xf32>
    %c1_428 = arith.constant 1 : index
    %c15_429 = arith.constant 15 : index
    %c0_430 = arith.constant 0 : index
    %c0_431 = arith.constant 0 : index
    %814 = vector.load %arg1[%c1_428, %c15_429, %c0_430, %c0_431] : memref<4x16x8x128xbf16, #tpu.memory_space<vmem>>, vector<1x1x8x128xbf16>
    %815 = vector.shape_cast %814 : vector<1x1x8x128xbf16> to vector<8x128xbf16>
    %816 = arith.extf %815 : vector<8x128xbf16> to vector<8x128xf32>
    %817 = arith.subf %816, %586 : vector<8x128xf32>
    %818 = math.exp %817 : vector<8x128xf32>
    %819 = arith.addf %804, %818 : vector<8x128xf32>
    %cst_432 = arith.constant 1.500000e+01 : f32
    %820 = vector.broadcast %cst_432 : f32 to vector<8x128xf32>
    %821 = arith.subf %233, %820 : vector<8x128xf32>
    %822 = math.absf %821 : vector<8x128xf32>
    %cst_433 = arith.constant 1.000000e+00 : f32
    %823 = vector.broadcast %cst_433 : f32 to vector<8x128xf32>
    %824 = arith.subf %823, %822 : vector<8x128xf32>
    %cst_434 = arith.constant 0.000000e+00 : f32
    %825 = vector.broadcast %cst_434 : f32 to vector<8x128xf32>
    %826 = arith.maximumf %824, %825 : vector<8x128xf32>
    %827 = arith.mulf %816, %826 : vector<8x128xf32>
    %828 = arith.addf %813, %827 : vector<8x128xf32>
    %829 = math.log %819 : vector<8x128xf32>
    %830 = arith.addf %829, %586 : vector<8x128xf32>
    %831 = arith.subf %830, %828 : vector<8x128xf32>
    %832 = arith.addf %538, %831 : vector<8x128xf32>
    %c2_435 = arith.constant 2 : index
    %c0_436 = arith.constant 0 : index
    %c0_437 = arith.constant 0 : index
    %c0_438 = arith.constant 0 : index
    %833 = vector.load %arg1[%c2_435, %c0_436, %c0_437, %c0_438] : memref<4x16x8x128xbf16, #tpu.memory_space<vmem>>, vector<1x1x8x128xbf16>
    %834 = vector.shape_cast %833 : vector<1x1x8x128xbf16> to vector<8x128xbf16>
    %c2_439 = arith.constant 2 : index
    %c1_440 = arith.constant 1 : index
    %c0_441 = arith.constant 0 : index
    %c0_442 = arith.constant 0 : index
    %835 = vector.load %arg1[%c2_439, %c1_440, %c0_441, %c0_442] : memref<4x16x8x128xbf16, #tpu.memory_space<vmem>>, vector<1x1x8x128xbf16>
    %836 = vector.shape_cast %835 : vector<1x1x8x128xbf16> to vector<8x128xbf16>
    %837 = arith.maximumf %834, %836 : vector<8x128xbf16>
    %c2_443 = arith.constant 2 : index
    %c2_444 = arith.constant 2 : index
    %c0_445 = arith.constant 0 : index
    %c0_446 = arith.constant 0 : index
    %838 = vector.load %arg1[%c2_443, %c2_444, %c0_445, %c0_446] : memref<4x16x8x128xbf16, #tpu.memory_space<vmem>>, vector<1x1x8x128xbf16>
    %839 = vector.shape_cast %838 : vector<1x1x8x128xbf16> to vector<8x128xbf16>
    %840 = arith.maximumf %837, %839 : vector<8x128xbf16>
    %c2_447 = arith.constant 2 : index
    %c3_448 = arith.constant 3 : index
    %c0_449 = arith.constant 0 : index
    %c0_450 = arith.constant 0 : index
    %841 = vector.load %arg1[%c2_447, %c3_448, %c0_449, %c0_450] : memref<4x16x8x128xbf16, #tpu.memory_space<vmem>>, vector<1x1x8x128xbf16>
    %842 = vector.shape_cast %841 : vector<1x1x8x128xbf16> to vector<8x128xbf16>
    %843 = arith.maximumf %840, %842 : vector<8x128xbf16>
    %c2_451 = arith.constant 2 : index
    %c4_452 = arith.constant 4 : index
    %c0_453 = arith.constant 0 : index
    %c0_454 = arith.constant 0 : index
    %844 = vector.load %arg1[%c2_451, %c4_452, %c0_453, %c0_454] : memref<4x16x8x128xbf16, #tpu.memory_space<vmem>>, vector<1x1x8x128xbf16>
    %845 = vector.shape_cast %844 : vector<1x1x8x128xbf16> to vector<8x128xbf16>
    %846 = arith.maximumf %843, %845 : vector<8x128xbf16>
    %c2_455 = arith.constant 2 : index
    %c5_456 = arith.constant 5 : index
    %c0_457 = arith.constant 0 : index
    %c0_458 = arith.constant 0 : index
    %847 = vector.load %arg1[%c2_455, %c5_456, %c0_457, %c0_458] : memref<4x16x8x128xbf16, #tpu.memory_space<vmem>>, vector<1x1x8x128xbf16>
    %848 = vector.shape_cast %847 : vector<1x1x8x128xbf16> to vector<8x128xbf16>
    %849 = arith.maximumf %846, %848 : vector<8x128xbf16>
    %c2_459 = arith.constant 2 : index
    %c6_460 = arith.constant 6 : index
    %c0_461 = arith.constant 0 : index
    %c0_462 = arith.constant 0 : index
    %850 = vector.load %arg1[%c2_459, %c6_460, %c0_461, %c0_462] : memref<4x16x8x128xbf16, #tpu.memory_space<vmem>>, vector<1x1x8x128xbf16>
    %851 = vector.shape_cast %850 : vector<1x1x8x128xbf16> to vector<8x128xbf16>
    %852 = arith.maximumf %849, %851 : vector<8x128xbf16>
    %c2_463 = arith.constant 2 : index
    %c7_464 = arith.constant 7 : index
    %c0_465 = arith.constant 0 : index
    %c0_466 = arith.constant 0 : index
    %853 = vector.load %arg1[%c2_463, %c7_464, %c0_465, %c0_466] : memref<4x16x8x128xbf16, #tpu.memory_space<vmem>>, vector<1x1x8x128xbf16>
    %854 = vector.shape_cast %853 : vector<1x1x8x128xbf16> to vector<8x128xbf16>
    %855 = arith.maximumf %852, %854 : vector<8x128xbf16>
    %c2_467 = arith.constant 2 : index
    %c8_468 = arith.constant 8 : index
    %c0_469 = arith.constant 0 : index
    %c0_470 = arith.constant 0 : index
    %856 = vector.load %arg1[%c2_467, %c8_468, %c0_469, %c0_470] : memref<4x16x8x128xbf16, #tpu.memory_space<vmem>>, vector<1x1x8x128xbf16>
    %857 = vector.shape_cast %856 : vector<1x1x8x128xbf16> to vector<8x128xbf16>
    %858 = arith.maximumf %855, %857 : vector<8x128xbf16>
    %c2_471 = arith.constant 2 : index
    %c9_472 = arith.constant 9 : index
    %c0_473 = arith.constant 0 : index
    %c0_474 = arith.constant 0 : index
    %859 = vector.load %arg1[%c2_471, %c9_472, %c0_473, %c0_474] : memref<4x16x8x128xbf16, #tpu.memory_space<vmem>>, vector<1x1x8x128xbf16>
    %860 = vector.shape_cast %859 : vector<1x1x8x128xbf16> to vector<8x128xbf16>
    %861 = arith.maximumf %858, %860 : vector<8x128xbf16>
    %c2_475 = arith.constant 2 : index
    %c10_476 = arith.constant 10 : index
    %c0_477 = arith.constant 0 : index
    %c0_478 = arith.constant 0 : index
    %862 = vector.load %arg1[%c2_475, %c10_476, %c0_477, %c0_478] : memref<4x16x8x128xbf16, #tpu.memory_space<vmem>>, vector<1x1x8x128xbf16>
    %863 = vector.shape_cast %862 : vector<1x1x8x128xbf16> to vector<8x128xbf16>
    %864 = arith.maximumf %861, %863 : vector<8x128xbf16>
    %c2_479 = arith.constant 2 : index
    %c11_480 = arith.constant 11 : index
    %c0_481 = arith.constant 0 : index
    %c0_482 = arith.constant 0 : index
    %865 = vector.load %arg1[%c2_479, %c11_480, %c0_481, %c0_482] : memref<4x16x8x128xbf16, #tpu.memory_space<vmem>>, vector<1x1x8x128xbf16>
    %866 = vector.shape_cast %865 : vector<1x1x8x128xbf16> to vector<8x128xbf16>
    %867 = arith.maximumf %864, %866 : vector<8x128xbf16>
    %c2_483 = arith.constant 2 : index
    %c12_484 = arith.constant 12 : index
    %c0_485 = arith.constant 0 : index
    %c0_486 = arith.constant 0 : index
    %868 = vector.load %arg1[%c2_483, %c12_484, %c0_485, %c0_486] : memref<4x16x8x128xbf16, #tpu.memory_space<vmem>>, vector<1x1x8x128xbf16>
    %869 = vector.shape_cast %868 : vector<1x1x8x128xbf16> to vector<8x128xbf16>
    %870 = arith.maximumf %867, %869 : vector<8x128xbf16>
    %c2_487 = arith.constant 2 : index
    %c13_488 = arith.constant 13 : index
    %c0_489 = arith.constant 0 : index
    %c0_490 = arith.constant 0 : index
    %871 = vector.load %arg1[%c2_487, %c13_488, %c0_489, %c0_490] : memref<4x16x8x128xbf16, #tpu.memory_space<vmem>>, vector<1x1x8x128xbf16>
    %872 = vector.shape_cast %871 : vector<1x1x8x128xbf16> to vector<8x128xbf16>
    %873 = arith.maximumf %870, %872 : vector<8x128xbf16>
    %c2_491 = arith.constant 2 : index
    %c14_492 = arith.constant 14 : index
    %c0_493 = arith.constant 0 : index
    %c0_494 = arith.constant 0 : index
    %874 = vector.load %arg1[%c2_491, %c14_492, %c0_493, %c0_494] : memref<4x16x8x128xbf16, #tpu.memory_space<vmem>>, vector<1x1x8x128xbf16>
    %875 = vector.shape_cast %874 : vector<1x1x8x128xbf16> to vector<8x128xbf16>
    %876 = arith.maximumf %873, %875 : vector<8x128xbf16>
    %c2_495 = arith.constant 2 : index
    %c15_496 = arith.constant 15 : index
    %c0_497 = arith.constant 0 : index
    %c0_498 = arith.constant 0 : index
    %877 = vector.load %arg1[%c2_495, %c15_496, %c0_497, %c0_498] : memref<4x16x8x128xbf16, #tpu.memory_space<vmem>>, vector<1x1x8x128xbf16>
    %878 = vector.shape_cast %877 : vector<1x1x8x128xbf16> to vector<8x128xbf16>
    %879 = arith.maximumf %876, %878 : vector<8x128xbf16>
    %880 = arith.extf %879 : vector<8x128xbf16> to vector<8x128xf32>
    %cst_499 = arith.constant 0.000000e+00 : f32
    %881 = vector.broadcast %cst_499 : f32 to vector<8x128xf32>
    %cst_500 = arith.constant 0.000000e+00 : f32
    %882 = vector.broadcast %cst_500 : f32 to vector<8x128xf32>
    %c2_501 = arith.constant 2 : index
    %c0_502 = arith.constant 0 : index
    %c0_503 = arith.constant 0 : index
    %c0_504 = arith.constant 0 : index
    %883 = vector.load %arg1[%c2_501, %c0_502, %c0_503, %c0_504] : memref<4x16x8x128xbf16, #tpu.memory_space<vmem>>, vector<1x1x8x128xbf16>
    %884 = vector.shape_cast %883 : vector<1x1x8x128xbf16> to vector<8x128xbf16>
    %885 = arith.extf %884 : vector<8x128xbf16> to vector<8x128xf32>
    %886 = arith.subf %885, %880 : vector<8x128xf32>
    %887 = math.exp %886 : vector<8x128xf32>
    %888 = arith.addf %881, %887 : vector<8x128xf32>
    %cst_505 = arith.constant 0.000000e+00 : f32
    %889 = vector.broadcast %cst_505 : f32 to vector<8x128xf32>
    %890 = arith.subf %238, %889 : vector<8x128xf32>
    %891 = math.absf %890 : vector<8x128xf32>
    %cst_506 = arith.constant 1.000000e+00 : f32
    %892 = vector.broadcast %cst_506 : f32 to vector<8x128xf32>
    %893 = arith.subf %892, %891 : vector<8x128xf32>
    %cst_507 = arith.constant 0.000000e+00 : f32
    %894 = vector.broadcast %cst_507 : f32 to vector<8x128xf32>
    %895 = arith.maximumf %893, %894 : vector<8x128xf32>
    %896 = arith.mulf %885, %895 : vector<8x128xf32>
    %897 = arith.addf %882, %896 : vector<8x128xf32>
    %c2_508 = arith.constant 2 : index
    %c1_509 = arith.constant 1 : index
    %c0_510 = arith.constant 0 : index
    %c0_511 = arith.constant 0 : index
    %898 = vector.load %arg1[%c2_508, %c1_509, %c0_510, %c0_511] : memref<4x16x8x128xbf16, #tpu.memory_space<vmem>>, vector<1x1x8x128xbf16>
    %899 = vector.shape_cast %898 : vector<1x1x8x128xbf16> to vector<8x128xbf16>
    %900 = arith.extf %899 : vector<8x128xbf16> to vector<8x128xf32>
    %901 = arith.subf %900, %880 : vector<8x128xf32>
    %902 = math.exp %901 : vector<8x128xf32>
    %903 = arith.addf %888, %902 : vector<8x128xf32>
    %cst_512 = arith.constant 1.000000e+00 : f32
    %904 = vector.broadcast %cst_512 : f32 to vector<8x128xf32>
    %905 = arith.subf %238, %904 : vector<8x128xf32>
    %906 = math.absf %905 : vector<8x128xf32>
    %cst_513 = arith.constant 1.000000e+00 : f32
    %907 = vector.broadcast %cst_513 : f32 to vector<8x128xf32>
    %908 = arith.subf %907, %906 : vector<8x128xf32>
    %cst_514 = arith.constant 0.000000e+00 : f32
    %909 = vector.broadcast %cst_514 : f32 to vector<8x128xf32>
    %910 = arith.maximumf %908, %909 : vector<8x128xf32>
    %911 = arith.mulf %900, %910 : vector<8x128xf32>
    %912 = arith.addf %897, %911 : vector<8x128xf32>
    %c2_515 = arith.constant 2 : index
    %c2_516 = arith.constant 2 : index
    %c0_517 = arith.constant 0 : index
    %c0_518 = arith.constant 0 : index
    %913 = vector.load %arg1[%c2_515, %c2_516, %c0_517, %c0_518] : memref<4x16x8x128xbf16, #tpu.memory_space<vmem>>, vector<1x1x8x128xbf16>
    %914 = vector.shape_cast %913 : vector<1x1x8x128xbf16> to vector<8x128xbf16>
    %915 = arith.extf %914 : vector<8x128xbf16> to vector<8x128xf32>
    %916 = arith.subf %915, %880 : vector<8x128xf32>
    %917 = math.exp %916 : vector<8x128xf32>
    %918 = arith.addf %903, %917 : vector<8x128xf32>
    %cst_519 = arith.constant 2.000000e+00 : f32
    %919 = vector.broadcast %cst_519 : f32 to vector<8x128xf32>
    %920 = arith.subf %238, %919 : vector<8x128xf32>
    %921 = math.absf %920 : vector<8x128xf32>
    %cst_520 = arith.constant 1.000000e+00 : f32
    %922 = vector.broadcast %cst_520 : f32 to vector<8x128xf32>
    %923 = arith.subf %922, %921 : vector<8x128xf32>
    %cst_521 = arith.constant 0.000000e+00 : f32
    %924 = vector.broadcast %cst_521 : f32 to vector<8x128xf32>
    %925 = arith.maximumf %923, %924 : vector<8x128xf32>
    %926 = arith.mulf %915, %925 : vector<8x128xf32>
    %927 = arith.addf %912, %926 : vector<8x128xf32>
    %c2_522 = arith.constant 2 : index
    %c3_523 = arith.constant 3 : index
    %c0_524 = arith.constant 0 : index
    %c0_525 = arith.constant 0 : index
    %928 = vector.load %arg1[%c2_522, %c3_523, %c0_524, %c0_525] : memref<4x16x8x128xbf16, #tpu.memory_space<vmem>>, vector<1x1x8x128xbf16>
    %929 = vector.shape_cast %928 : vector<1x1x8x128xbf16> to vector<8x128xbf16>
    %930 = arith.extf %929 : vector<8x128xbf16> to vector<8x128xf32>
    %931 = arith.subf %930, %880 : vector<8x128xf32>
    %932 = math.exp %931 : vector<8x128xf32>
    %933 = arith.addf %918, %932 : vector<8x128xf32>
    %cst_526 = arith.constant 3.000000e+00 : f32
    %934 = vector.broadcast %cst_526 : f32 to vector<8x128xf32>
    %935 = arith.subf %238, %934 : vector<8x128xf32>
    %936 = math.absf %935 : vector<8x128xf32>
    %cst_527 = arith.constant 1.000000e+00 : f32
    %937 = vector.broadcast %cst_527 : f32 to vector<8x128xf32>
    %938 = arith.subf %937, %936 : vector<8x128xf32>
    %cst_528 = arith.constant 0.000000e+00 : f32
    %939 = vector.broadcast %cst_528 : f32 to vector<8x128xf32>
    %940 = arith.maximumf %938, %939 : vector<8x128xf32>
    %941 = arith.mulf %930, %940 : vector<8x128xf32>
    %942 = arith.addf %927, %941 : vector<8x128xf32>
    %c2_529 = arith.constant 2 : index
    %c4_530 = arith.constant 4 : index
    %c0_531 = arith.constant 0 : index
    %c0_532 = arith.constant 0 : index
    %943 = vector.load %arg1[%c2_529, %c4_530, %c0_531, %c0_532] : memref<4x16x8x128xbf16, #tpu.memory_space<vmem>>, vector<1x1x8x128xbf16>
    %944 = vector.shape_cast %943 : vector<1x1x8x128xbf16> to vector<8x128xbf16>
    %945 = arith.extf %944 : vector<8x128xbf16> to vector<8x128xf32>
    %946 = arith.subf %945, %880 : vector<8x128xf32>
    %947 = math.exp %946 : vector<8x128xf32>
    %948 = arith.addf %933, %947 : vector<8x128xf32>
    %cst_533 = arith.constant 4.000000e+00 : f32
    %949 = vector.broadcast %cst_533 : f32 to vector<8x128xf32>
    %950 = arith.subf %238, %949 : vector<8x128xf32>
    %951 = math.absf %950 : vector<8x128xf32>
    %cst_534 = arith.constant 1.000000e+00 : f32
    %952 = vector.broadcast %cst_534 : f32 to vector<8x128xf32>
    %953 = arith.subf %952, %951 : vector<8x128xf32>
    %cst_535 = arith.constant 0.000000e+00 : f32
    %954 = vector.broadcast %cst_535 : f32 to vector<8x128xf32>
    %955 = arith.maximumf %953, %954 : vector<8x128xf32>
    %956 = arith.mulf %945, %955 : vector<8x128xf32>
    %957 = arith.addf %942, %956 : vector<8x128xf32>
    %c2_536 = arith.constant 2 : index
    %c5_537 = arith.constant 5 : index
    %c0_538 = arith.constant 0 : index
    %c0_539 = arith.constant 0 : index
    %958 = vector.load %arg1[%c2_536, %c5_537, %c0_538, %c0_539] : memref<4x16x8x128xbf16, #tpu.memory_space<vmem>>, vector<1x1x8x128xbf16>
    %959 = vector.shape_cast %958 : vector<1x1x8x128xbf16> to vector<8x128xbf16>
    %960 = arith.extf %959 : vector<8x128xbf16> to vector<8x128xf32>
    %961 = arith.subf %960, %880 : vector<8x128xf32>
    %962 = math.exp %961 : vector<8x128xf32>
    %963 = arith.addf %948, %962 : vector<8x128xf32>
    %cst_540 = arith.constant 5.000000e+00 : f32
    %964 = vector.broadcast %cst_540 : f32 to vector<8x128xf32>
    %965 = arith.subf %238, %964 : vector<8x128xf32>
    %966 = math.absf %965 : vector<8x128xf32>
    %cst_541 = arith.constant 1.000000e+00 : f32
    %967 = vector.broadcast %cst_541 : f32 to vector<8x128xf32>
    %968 = arith.subf %967, %966 : vector<8x128xf32>
    %cst_542 = arith.constant 0.000000e+00 : f32
    %969 = vector.broadcast %cst_542 : f32 to vector<8x128xf32>
    %970 = arith.maximumf %968, %969 : vector<8x128xf32>
    %971 = arith.mulf %960, %970 : vector<8x128xf32>
    %972 = arith.addf %957, %971 : vector<8x128xf32>
    %c2_543 = arith.constant 2 : index
    %c6_544 = arith.constant 6 : index
    %c0_545 = arith.constant 0 : index
    %c0_546 = arith.constant 0 : index
    %973 = vector.load %arg1[%c2_543, %c6_544, %c0_545, %c0_546] : memref<4x16x8x128xbf16, #tpu.memory_space<vmem>>, vector<1x1x8x128xbf16>
    %974 = vector.shape_cast %973 : vector<1x1x8x128xbf16> to vector<8x128xbf16>
    %975 = arith.extf %974 : vector<8x128xbf16> to vector<8x128xf32>
    %976 = arith.subf %975, %880 : vector<8x128xf32>
    %977 = math.exp %976 : vector<8x128xf32>
    %978 = arith.addf %963, %977 : vector<8x128xf32>
    %cst_547 = arith.constant 6.000000e+00 : f32
    %979 = vector.broadcast %cst_547 : f32 to vector<8x128xf32>
    %980 = arith.subf %238, %979 : vector<8x128xf32>
    %981 = math.absf %980 : vector<8x128xf32>
    %cst_548 = arith.constant 1.000000e+00 : f32
    %982 = vector.broadcast %cst_548 : f32 to vector<8x128xf32>
    %983 = arith.subf %982, %981 : vector<8x128xf32>
    %cst_549 = arith.constant 0.000000e+00 : f32
    %984 = vector.broadcast %cst_549 : f32 to vector<8x128xf32>
    %985 = arith.maximumf %983, %984 : vector<8x128xf32>
    %986 = arith.mulf %975, %985 : vector<8x128xf32>
    %987 = arith.addf %972, %986 : vector<8x128xf32>
    %c2_550 = arith.constant 2 : index
    %c7_551 = arith.constant 7 : index
    %c0_552 = arith.constant 0 : index
    %c0_553 = arith.constant 0 : index
    %988 = vector.load %arg1[%c2_550, %c7_551, %c0_552, %c0_553] : memref<4x16x8x128xbf16, #tpu.memory_space<vmem>>, vector<1x1x8x128xbf16>
    %989 = vector.shape_cast %988 : vector<1x1x8x128xbf16> to vector<8x128xbf16>
    %990 = arith.extf %989 : vector<8x128xbf16> to vector<8x128xf32>
    %991 = arith.subf %990, %880 : vector<8x128xf32>
    %992 = math.exp %991 : vector<8x128xf32>
    %993 = arith.addf %978, %992 : vector<8x128xf32>
    %cst_554 = arith.constant 7.000000e+00 : f32
    %994 = vector.broadcast %cst_554 : f32 to vector<8x128xf32>
    %995 = arith.subf %238, %994 : vector<8x128xf32>
    %996 = math.absf %995 : vector<8x128xf32>
    %cst_555 = arith.constant 1.000000e+00 : f32
    %997 = vector.broadcast %cst_555 : f32 to vector<8x128xf32>
    %998 = arith.subf %997, %996 : vector<8x128xf32>
    %cst_556 = arith.constant 0.000000e+00 : f32
    %999 = vector.broadcast %cst_556 : f32 to vector<8x128xf32>
    %1000 = arith.maximumf %998, %999 : vector<8x128xf32>
    %1001 = arith.mulf %990, %1000 : vector<8x128xf32>
    %1002 = arith.addf %987, %1001 : vector<8x128xf32>
    %c2_557 = arith.constant 2 : index
    %c8_558 = arith.constant 8 : index
    %c0_559 = arith.constant 0 : index
    %c0_560 = arith.constant 0 : index
    %1003 = vector.load %arg1[%c2_557, %c8_558, %c0_559, %c0_560] : memref<4x16x8x128xbf16, #tpu.memory_space<vmem>>, vector<1x1x8x128xbf16>
    %1004 = vector.shape_cast %1003 : vector<1x1x8x128xbf16> to vector<8x128xbf16>
    %1005 = arith.extf %1004 : vector<8x128xbf16> to vector<8x128xf32>
    %1006 = arith.subf %1005, %880 : vector<8x128xf32>
    %1007 = math.exp %1006 : vector<8x128xf32>
    %1008 = arith.addf %993, %1007 : vector<8x128xf32>
    %cst_561 = arith.constant 8.000000e+00 : f32
    %1009 = vector.broadcast %cst_561 : f32 to vector<8x128xf32>
    %1010 = arith.subf %238, %1009 : vector<8x128xf32>
    %1011 = math.absf %1010 : vector<8x128xf32>
    %cst_562 = arith.constant 1.000000e+00 : f32
    %1012 = vector.broadcast %cst_562 : f32 to vector<8x128xf32>
    %1013 = arith.subf %1012, %1011 : vector<8x128xf32>
    %cst_563 = arith.constant 0.000000e+00 : f32
    %1014 = vector.broadcast %cst_563 : f32 to vector<8x128xf32>
    %1015 = arith.maximumf %1013, %1014 : vector<8x128xf32>
    %1016 = arith.mulf %1005, %1015 : vector<8x128xf32>
    %1017 = arith.addf %1002, %1016 : vector<8x128xf32>
    %c2_564 = arith.constant 2 : index
    %c9_565 = arith.constant 9 : index
    %c0_566 = arith.constant 0 : index
    %c0_567 = arith.constant 0 : index
    %1018 = vector.load %arg1[%c2_564, %c9_565, %c0_566, %c0_567] : memref<4x16x8x128xbf16, #tpu.memory_space<vmem>>, vector<1x1x8x128xbf16>
    %1019 = vector.shape_cast %1018 : vector<1x1x8x128xbf16> to vector<8x128xbf16>
    %1020 = arith.extf %1019 : vector<8x128xbf16> to vector<8x128xf32>
    %1021 = arith.subf %1020, %880 : vector<8x128xf32>
    %1022 = math.exp %1021 : vector<8x128xf32>
    %1023 = arith.addf %1008, %1022 : vector<8x128xf32>
    %cst_568 = arith.constant 9.000000e+00 : f32
    %1024 = vector.broadcast %cst_568 : f32 to vector<8x128xf32>
    %1025 = arith.subf %238, %1024 : vector<8x128xf32>
    %1026 = math.absf %1025 : vector<8x128xf32>
    %cst_569 = arith.constant 1.000000e+00 : f32
    %1027 = vector.broadcast %cst_569 : f32 to vector<8x128xf32>
    %1028 = arith.subf %1027, %1026 : vector<8x128xf32>
    %cst_570 = arith.constant 0.000000e+00 : f32
    %1029 = vector.broadcast %cst_570 : f32 to vector<8x128xf32>
    %1030 = arith.maximumf %1028, %1029 : vector<8x128xf32>
    %1031 = arith.mulf %1020, %1030 : vector<8x128xf32>
    %1032 = arith.addf %1017, %1031 : vector<8x128xf32>
    %c2_571 = arith.constant 2 : index
    %c10_572 = arith.constant 10 : index
    %c0_573 = arith.constant 0 : index
    %c0_574 = arith.constant 0 : index
    %1033 = vector.load %arg1[%c2_571, %c10_572, %c0_573, %c0_574] : memref<4x16x8x128xbf16, #tpu.memory_space<vmem>>, vector<1x1x8x128xbf16>
    %1034 = vector.shape_cast %1033 : vector<1x1x8x128xbf16> to vector<8x128xbf16>
    %1035 = arith.extf %1034 : vector<8x128xbf16> to vector<8x128xf32>
    %1036 = arith.subf %1035, %880 : vector<8x128xf32>
    %1037 = math.exp %1036 : vector<8x128xf32>
    %1038 = arith.addf %1023, %1037 : vector<8x128xf32>
    %cst_575 = arith.constant 1.000000e+01 : f32
    %1039 = vector.broadcast %cst_575 : f32 to vector<8x128xf32>
    %1040 = arith.subf %238, %1039 : vector<8x128xf32>
    %1041 = math.absf %1040 : vector<8x128xf32>
    %cst_576 = arith.constant 1.000000e+00 : f32
    %1042 = vector.broadcast %cst_576 : f32 to vector<8x128xf32>
    %1043 = arith.subf %1042, %1041 : vector<8x128xf32>
    %cst_577 = arith.constant 0.000000e+00 : f32
    %1044 = vector.broadcast %cst_577 : f32 to vector<8x128xf32>
    %1045 = arith.maximumf %1043, %1044 : vector<8x128xf32>
    %1046 = arith.mulf %1035, %1045 : vector<8x128xf32>
    %1047 = arith.addf %1032, %1046 : vector<8x128xf32>
    %c2_578 = arith.constant 2 : index
    %c11_579 = arith.constant 11 : index
    %c0_580 = arith.constant 0 : index
    %c0_581 = arith.constant 0 : index
    %1048 = vector.load %arg1[%c2_578, %c11_579, %c0_580, %c0_581] : memref<4x16x8x128xbf16, #tpu.memory_space<vmem>>, vector<1x1x8x128xbf16>
    %1049 = vector.shape_cast %1048 : vector<1x1x8x128xbf16> to vector<8x128xbf16>
    %1050 = arith.extf %1049 : vector<8x128xbf16> to vector<8x128xf32>
    %1051 = arith.subf %1050, %880 : vector<8x128xf32>
    %1052 = math.exp %1051 : vector<8x128xf32>
    %1053 = arith.addf %1038, %1052 : vector<8x128xf32>
    %cst_582 = arith.constant 1.100000e+01 : f32
    %1054 = vector.broadcast %cst_582 : f32 to vector<8x128xf32>
    %1055 = arith.subf %238, %1054 : vector<8x128xf32>
    %1056 = math.absf %1055 : vector<8x128xf32>
    %cst_583 = arith.constant 1.000000e+00 : f32
    %1057 = vector.broadcast %cst_583 : f32 to vector<8x128xf32>
    %1058 = arith.subf %1057, %1056 : vector<8x128xf32>
    %cst_584 = arith.constant 0.000000e+00 : f32
    %1059 = vector.broadcast %cst_584 : f32 to vector<8x128xf32>
    %1060 = arith.maximumf %1058, %1059 : vector<8x128xf32>
    %1061 = arith.mulf %1050, %1060 : vector<8x128xf32>
    %1062 = arith.addf %1047, %1061 : vector<8x128xf32>
    %c2_585 = arith.constant 2 : index
    %c12_586 = arith.constant 12 : index
    %c0_587 = arith.constant 0 : index
    %c0_588 = arith.constant 0 : index
    %1063 = vector.load %arg1[%c2_585, %c12_586, %c0_587, %c0_588] : memref<4x16x8x128xbf16, #tpu.memory_space<vmem>>, vector<1x1x8x128xbf16>
    %1064 = vector.shape_cast %1063 : vector<1x1x8x128xbf16> to vector<8x128xbf16>
    %1065 = arith.extf %1064 : vector<8x128xbf16> to vector<8x128xf32>
    %1066 = arith.subf %1065, %880 : vector<8x128xf32>
    %1067 = math.exp %1066 : vector<8x128xf32>
    %1068 = arith.addf %1053, %1067 : vector<8x128xf32>
    %cst_589 = arith.constant 1.200000e+01 : f32
    %1069 = vector.broadcast %cst_589 : f32 to vector<8x128xf32>
    %1070 = arith.subf %238, %1069 : vector<8x128xf32>
    %1071 = math.absf %1070 : vector<8x128xf32>
    %cst_590 = arith.constant 1.000000e+00 : f32
    %1072 = vector.broadcast %cst_590 : f32 to vector<8x128xf32>
    %1073 = arith.subf %1072, %1071 : vector<8x128xf32>
    %cst_591 = arith.constant 0.000000e+00 : f32
    %1074 = vector.broadcast %cst_591 : f32 to vector<8x128xf32>
    %1075 = arith.maximumf %1073, %1074 : vector<8x128xf32>
    %1076 = arith.mulf %1065, %1075 : vector<8x128xf32>
    %1077 = arith.addf %1062, %1076 : vector<8x128xf32>
    %c2_592 = arith.constant 2 : index
    %c13_593 = arith.constant 13 : index
    %c0_594 = arith.constant 0 : index
    %c0_595 = arith.constant 0 : index
    %1078 = vector.load %arg1[%c2_592, %c13_593, %c0_594, %c0_595] : memref<4x16x8x128xbf16, #tpu.memory_space<vmem>>, vector<1x1x8x128xbf16>
    %1079 = vector.shape_cast %1078 : vector<1x1x8x128xbf16> to vector<8x128xbf16>
    %1080 = arith.extf %1079 : vector<8x128xbf16> to vector<8x128xf32>
    %1081 = arith.subf %1080, %880 : vector<8x128xf32>
    %1082 = math.exp %1081 : vector<8x128xf32>
    %1083 = arith.addf %1068, %1082 : vector<8x128xf32>
    %cst_596 = arith.constant 1.300000e+01 : f32
    %1084 = vector.broadcast %cst_596 : f32 to vector<8x128xf32>
    %1085 = arith.subf %238, %1084 : vector<8x128xf32>
    %1086 = math.absf %1085 : vector<8x128xf32>
    %cst_597 = arith.constant 1.000000e+00 : f32
    %1087 = vector.broadcast %cst_597 : f32 to vector<8x128xf32>
    %1088 = arith.subf %1087, %1086 : vector<8x128xf32>
    %cst_598 = arith.constant 0.000000e+00 : f32
    %1089 = vector.broadcast %cst_598 : f32 to vector<8x128xf32>
    %1090 = arith.maximumf %1088, %1089 : vector<8x128xf32>
    %1091 = arith.mulf %1080, %1090 : vector<8x128xf32>
    %1092 = arith.addf %1077, %1091 : vector<8x128xf32>
    %c2_599 = arith.constant 2 : index
    %c14_600 = arith.constant 14 : index
    %c0_601 = arith.constant 0 : index
    %c0_602 = arith.constant 0 : index
    %1093 = vector.load %arg1[%c2_599, %c14_600, %c0_601, %c0_602] : memref<4x16x8x128xbf16, #tpu.memory_space<vmem>>, vector<1x1x8x128xbf16>
    %1094 = vector.shape_cast %1093 : vector<1x1x8x128xbf16> to vector<8x128xbf16>
    %1095 = arith.extf %1094 : vector<8x128xbf16> to vector<8x128xf32>
    %1096 = arith.subf %1095, %880 : vector<8x128xf32>
    %1097 = math.exp %1096 : vector<8x128xf32>
    %1098 = arith.addf %1083, %1097 : vector<8x128xf32>
    %cst_603 = arith.constant 1.400000e+01 : f32
    %1099 = vector.broadcast %cst_603 : f32 to vector<8x128xf32>
    %1100 = arith.subf %238, %1099 : vector<8x128xf32>
    %1101 = math.absf %1100 : vector<8x128xf32>
    %cst_604 = arith.constant 1.000000e+00 : f32
    %1102 = vector.broadcast %cst_604 : f32 to vector<8x128xf32>
    %1103 = arith.subf %1102, %1101 : vector<8x128xf32>
    %cst_605 = arith.constant 0.000000e+00 : f32
    %1104 = vector.broadcast %cst_605 : f32 to vector<8x128xf32>
    %1105 = arith.maximumf %1103, %1104 : vector<8x128xf32>
    %1106 = arith.mulf %1095, %1105 : vector<8x128xf32>
    %1107 = arith.addf %1092, %1106 : vector<8x128xf32>
    %c2_606 = arith.constant 2 : index
    %c15_607 = arith.constant 15 : index
    %c0_608 = arith.constant 0 : index
    %c0_609 = arith.constant 0 : index
    %1108 = vector.load %arg1[%c2_606, %c15_607, %c0_608, %c0_609] : memref<4x16x8x128xbf16, #tpu.memory_space<vmem>>, vector<1x1x8x128xbf16>
    %1109 = vector.shape_cast %1108 : vector<1x1x8x128xbf16> to vector<8x128xbf16>
    %1110 = arith.extf %1109 : vector<8x128xbf16> to vector<8x128xf32>
    %1111 = arith.subf %1110, %880 : vector<8x128xf32>
    %1112 = math.exp %1111 : vector<8x128xf32>
    %1113 = arith.addf %1098, %1112 : vector<8x128xf32>
    %cst_610 = arith.constant 1.500000e+01 : f32
    %1114 = vector.broadcast %cst_610 : f32 to vector<8x128xf32>
    %1115 = arith.subf %238, %1114 : vector<8x128xf32>
    %1116 = math.absf %1115 : vector<8x128xf32>
    %cst_611 = arith.constant 1.000000e+00 : f32
    %1117 = vector.broadcast %cst_611 : f32 to vector<8x128xf32>
    %1118 = arith.subf %1117, %1116 : vector<8x128xf32>
    %cst_612 = arith.constant 0.000000e+00 : f32
    %1119 = vector.broadcast %cst_612 : f32 to vector<8x128xf32>
    %1120 = arith.maximumf %1118, %1119 : vector<8x128xf32>
    %1121 = arith.mulf %1110, %1120 : vector<8x128xf32>
    %1122 = arith.addf %1107, %1121 : vector<8x128xf32>
    %1123 = math.log %1113 : vector<8x128xf32>
    %1124 = arith.addf %1123, %880 : vector<8x128xf32>
    %1125 = arith.subf %1124, %1122 : vector<8x128xf32>
    %1126 = arith.addf %832, %1125 : vector<8x128xf32>
    %c3_613 = arith.constant 3 : index
    %c0_614 = arith.constant 0 : index
    %c0_615 = arith.constant 0 : index
    %c0_616 = arith.constant 0 : index
    %1127 = vector.load %arg1[%c3_613, %c0_614, %c0_615, %c0_616] : memref<4x16x8x128xbf16, #tpu.memory_space<vmem>>, vector<1x1x8x128xbf16>
    %1128 = vector.shape_cast %1127 : vector<1x1x8x128xbf16> to vector<8x128xbf16>
    %c3_617 = arith.constant 3 : index
    %c1_618 = arith.constant 1 : index
    %c0_619 = arith.constant 0 : index
    %c0_620 = arith.constant 0 : index
    %1129 = vector.load %arg1[%c3_617, %c1_618, %c0_619, %c0_620] : memref<4x16x8x128xbf16, #tpu.memory_space<vmem>>, vector<1x1x8x128xbf16>
    %1130 = vector.shape_cast %1129 : vector<1x1x8x128xbf16> to vector<8x128xbf16>
    %1131 = arith.maximumf %1128, %1130 : vector<8x128xbf16>
    %c3_621 = arith.constant 3 : index
    %c2_622 = arith.constant 2 : index
    %c0_623 = arith.constant 0 : index
    %c0_624 = arith.constant 0 : index
    %1132 = vector.load %arg1[%c3_621, %c2_622, %c0_623, %c0_624] : memref<4x16x8x128xbf16, #tpu.memory_space<vmem>>, vector<1x1x8x128xbf16>
    %1133 = vector.shape_cast %1132 : vector<1x1x8x128xbf16> to vector<8x128xbf16>
    %1134 = arith.maximumf %1131, %1133 : vector<8x128xbf16>
    %c3_625 = arith.constant 3 : index
    %c3_626 = arith.constant 3 : index
    %c0_627 = arith.constant 0 : index
    %c0_628 = arith.constant 0 : index
    %1135 = vector.load %arg1[%c3_625, %c3_626, %c0_627, %c0_628] : memref<4x16x8x128xbf16, #tpu.memory_space<vmem>>, vector<1x1x8x128xbf16>
    %1136 = vector.shape_cast %1135 : vector<1x1x8x128xbf16> to vector<8x128xbf16>
    %1137 = arith.maximumf %1134, %1136 : vector<8x128xbf16>
    %c3_629 = arith.constant 3 : index
    %c4_630 = arith.constant 4 : index
    %c0_631 = arith.constant 0 : index
    %c0_632 = arith.constant 0 : index
    %1138 = vector.load %arg1[%c3_629, %c4_630, %c0_631, %c0_632] : memref<4x16x8x128xbf16, #tpu.memory_space<vmem>>, vector<1x1x8x128xbf16>
    %1139 = vector.shape_cast %1138 : vector<1x1x8x128xbf16> to vector<8x128xbf16>
    %1140 = arith.maximumf %1137, %1139 : vector<8x128xbf16>
    %c3_633 = arith.constant 3 : index
    %c5_634 = arith.constant 5 : index
    %c0_635 = arith.constant 0 : index
    %c0_636 = arith.constant 0 : index
    %1141 = vector.load %arg1[%c3_633, %c5_634, %c0_635, %c0_636] : memref<4x16x8x128xbf16, #tpu.memory_space<vmem>>, vector<1x1x8x128xbf16>
    %1142 = vector.shape_cast %1141 : vector<1x1x8x128xbf16> to vector<8x128xbf16>
    %1143 = arith.maximumf %1140, %1142 : vector<8x128xbf16>
    %c3_637 = arith.constant 3 : index
    %c6_638 = arith.constant 6 : index
    %c0_639 = arith.constant 0 : index
    %c0_640 = arith.constant 0 : index
    %1144 = vector.load %arg1[%c3_637, %c6_638, %c0_639, %c0_640] : memref<4x16x8x128xbf16, #tpu.memory_space<vmem>>, vector<1x1x8x128xbf16>
    %1145 = vector.shape_cast %1144 : vector<1x1x8x128xbf16> to vector<8x128xbf16>
    %1146 = arith.maximumf %1143, %1145 : vector<8x128xbf16>
    %c3_641 = arith.constant 3 : index
    %c7_642 = arith.constant 7 : index
    %c0_643 = arith.constant 0 : index
    %c0_644 = arith.constant 0 : index
    %1147 = vector.load %arg1[%c3_641, %c7_642, %c0_643, %c0_644] : memref<4x16x8x128xbf16, #tpu.memory_space<vmem>>, vector<1x1x8x128xbf16>
    %1148 = vector.shape_cast %1147 : vector<1x1x8x128xbf16> to vector<8x128xbf16>
    %1149 = arith.maximumf %1146, %1148 : vector<8x128xbf16>
    %c3_645 = arith.constant 3 : index
    %c8_646 = arith.constant 8 : index
    %c0_647 = arith.constant 0 : index
    %c0_648 = arith.constant 0 : index
    %1150 = vector.load %arg1[%c3_645, %c8_646, %c0_647, %c0_648] : memref<4x16x8x128xbf16, #tpu.memory_space<vmem>>, vector<1x1x8x128xbf16>
    %1151 = vector.shape_cast %1150 : vector<1x1x8x128xbf16> to vector<8x128xbf16>
    %1152 = arith.maximumf %1149, %1151 : vector<8x128xbf16>
    %c3_649 = arith.constant 3 : index
    %c9_650 = arith.constant 9 : index
    %c0_651 = arith.constant 0 : index
    %c0_652 = arith.constant 0 : index
    %1153 = vector.load %arg1[%c3_649, %c9_650, %c0_651, %c0_652] : memref<4x16x8x128xbf16, #tpu.memory_space<vmem>>, vector<1x1x8x128xbf16>
    %1154 = vector.shape_cast %1153 : vector<1x1x8x128xbf16> to vector<8x128xbf16>
    %1155 = arith.maximumf %1152, %1154 : vector<8x128xbf16>
    %c3_653 = arith.constant 3 : index
    %c10_654 = arith.constant 10 : index
    %c0_655 = arith.constant 0 : index
    %c0_656 = arith.constant 0 : index
    %1156 = vector.load %arg1[%c3_653, %c10_654, %c0_655, %c0_656] : memref<4x16x8x128xbf16, #tpu.memory_space<vmem>>, vector<1x1x8x128xbf16>
    %1157 = vector.shape_cast %1156 : vector<1x1x8x128xbf16> to vector<8x128xbf16>
    %1158 = arith.maximumf %1155, %1157 : vector<8x128xbf16>
    %c3_657 = arith.constant 3 : index
    %c11_658 = arith.constant 11 : index
    %c0_659 = arith.constant 0 : index
    %c0_660 = arith.constant 0 : index
    %1159 = vector.load %arg1[%c3_657, %c11_658, %c0_659, %c0_660] : memref<4x16x8x128xbf16, #tpu.memory_space<vmem>>, vector<1x1x8x128xbf16>
    %1160 = vector.shape_cast %1159 : vector<1x1x8x128xbf16> to vector<8x128xbf16>
    %1161 = arith.maximumf %1158, %1160 : vector<8x128xbf16>
    %c3_661 = arith.constant 3 : index
    %c12_662 = arith.constant 12 : index
    %c0_663 = arith.constant 0 : index
    %c0_664 = arith.constant 0 : index
    %1162 = vector.load %arg1[%c3_661, %c12_662, %c0_663, %c0_664] : memref<4x16x8x128xbf16, #tpu.memory_space<vmem>>, vector<1x1x8x128xbf16>
    %1163 = vector.shape_cast %1162 : vector<1x1x8x128xbf16> to vector<8x128xbf16>
    %1164 = arith.maximumf %1161, %1163 : vector<8x128xbf16>
    %c3_665 = arith.constant 3 : index
    %c13_666 = arith.constant 13 : index
    %c0_667 = arith.constant 0 : index
    %c0_668 = arith.constant 0 : index
    %1165 = vector.load %arg1[%c3_665, %c13_666, %c0_667, %c0_668] : memref<4x16x8x128xbf16, #tpu.memory_space<vmem>>, vector<1x1x8x128xbf16>
    %1166 = vector.shape_cast %1165 : vector<1x1x8x128xbf16> to vector<8x128xbf16>
    %1167 = arith.maximumf %1164, %1166 : vector<8x128xbf16>
    %c3_669 = arith.constant 3 : index
    %c14_670 = arith.constant 14 : index
    %c0_671 = arith.constant 0 : index
    %c0_672 = arith.constant 0 : index
    %1168 = vector.load %arg1[%c3_669, %c14_670, %c0_671, %c0_672] : memref<4x16x8x128xbf16, #tpu.memory_space<vmem>>, vector<1x1x8x128xbf16>
    %1169 = vector.shape_cast %1168 : vector<1x1x8x128xbf16> to vector<8x128xbf16>
    %1170 = arith.maximumf %1167, %1169 : vector<8x128xbf16>
    %c3_673 = arith.constant 3 : index
    %c15_674 = arith.constant 15 : index
    %c0_675 = arith.constant 0 : index
    %c0_676 = arith.constant 0 : index
    %1171 = vector.load %arg1[%c3_673, %c15_674, %c0_675, %c0_676] : memref<4x16x8x128xbf16, #tpu.memory_space<vmem>>, vector<1x1x8x128xbf16>
    %1172 = vector.shape_cast %1171 : vector<1x1x8x128xbf16> to vector<8x128xbf16>
    %1173 = arith.maximumf %1170, %1172 : vector<8x128xbf16>
    %1174 = arith.extf %1173 : vector<8x128xbf16> to vector<8x128xf32>
    %cst_677 = arith.constant 0.000000e+00 : f32
    %1175 = vector.broadcast %cst_677 : f32 to vector<8x128xf32>
    %cst_678 = arith.constant 0.000000e+00 : f32
    %1176 = vector.broadcast %cst_678 : f32 to vector<8x128xf32>
    %c3_679 = arith.constant 3 : index
    %c0_680 = arith.constant 0 : index
    %c0_681 = arith.constant 0 : index
    %c0_682 = arith.constant 0 : index
    %1177 = vector.load %arg1[%c3_679, %c0_680, %c0_681, %c0_682] : memref<4x16x8x128xbf16, #tpu.memory_space<vmem>>, vector<1x1x8x128xbf16>
    %1178 = vector.shape_cast %1177 : vector<1x1x8x128xbf16> to vector<8x128xbf16>
    %1179 = arith.extf %1178 : vector<8x128xbf16> to vector<8x128xf32>
    %1180 = arith.subf %1179, %1174 : vector<8x128xf32>
    %1181 = math.exp %1180 : vector<8x128xf32>
    %1182 = arith.addf %1175, %1181 : vector<8x128xf32>
    %cst_683 = arith.constant 0.000000e+00 : f32
    %1183 = vector.broadcast %cst_683 : f32 to vector<8x128xf32>
    %1184 = arith.subf %243, %1183 : vector<8x128xf32>
    %1185 = math.absf %1184 : vector<8x128xf32>
    %cst_684 = arith.constant 1.000000e+00 : f32
    %1186 = vector.broadcast %cst_684 : f32 to vector<8x128xf32>
    %1187 = arith.subf %1186, %1185 : vector<8x128xf32>
    %cst_685 = arith.constant 0.000000e+00 : f32
    %1188 = vector.broadcast %cst_685 : f32 to vector<8x128xf32>
    %1189 = arith.maximumf %1187, %1188 : vector<8x128xf32>
    %1190 = arith.mulf %1179, %1189 : vector<8x128xf32>
    %1191 = arith.addf %1176, %1190 : vector<8x128xf32>
    %c3_686 = arith.constant 3 : index
    %c1_687 = arith.constant 1 : index
    %c0_688 = arith.constant 0 : index
    %c0_689 = arith.constant 0 : index
    %1192 = vector.load %arg1[%c3_686, %c1_687, %c0_688, %c0_689] : memref<4x16x8x128xbf16, #tpu.memory_space<vmem>>, vector<1x1x8x128xbf16>
    %1193 = vector.shape_cast %1192 : vector<1x1x8x128xbf16> to vector<8x128xbf16>
    %1194 = arith.extf %1193 : vector<8x128xbf16> to vector<8x128xf32>
    %1195 = arith.subf %1194, %1174 : vector<8x128xf32>
    %1196 = math.exp %1195 : vector<8x128xf32>
    %1197 = arith.addf %1182, %1196 : vector<8x128xf32>
    %cst_690 = arith.constant 1.000000e+00 : f32
    %1198 = vector.broadcast %cst_690 : f32 to vector<8x128xf32>
    %1199 = arith.subf %243, %1198 : vector<8x128xf32>
    %1200 = math.absf %1199 : vector<8x128xf32>
    %cst_691 = arith.constant 1.000000e+00 : f32
    %1201 = vector.broadcast %cst_691 : f32 to vector<8x128xf32>
    %1202 = arith.subf %1201, %1200 : vector<8x128xf32>
    %cst_692 = arith.constant 0.000000e+00 : f32
    %1203 = vector.broadcast %cst_692 : f32 to vector<8x128xf32>
    %1204 = arith.maximumf %1202, %1203 : vector<8x128xf32>
    %1205 = arith.mulf %1194, %1204 : vector<8x128xf32>
    %1206 = arith.addf %1191, %1205 : vector<8x128xf32>
    %c3_693 = arith.constant 3 : index
    %c2_694 = arith.constant 2 : index
    %c0_695 = arith.constant 0 : index
    %c0_696 = arith.constant 0 : index
    %1207 = vector.load %arg1[%c3_693, %c2_694, %c0_695, %c0_696] : memref<4x16x8x128xbf16, #tpu.memory_space<vmem>>, vector<1x1x8x128xbf16>
    %1208 = vector.shape_cast %1207 : vector<1x1x8x128xbf16> to vector<8x128xbf16>
    %1209 = arith.extf %1208 : vector<8x128xbf16> to vector<8x128xf32>
    %1210 = arith.subf %1209, %1174 : vector<8x128xf32>
    %1211 = math.exp %1210 : vector<8x128xf32>
    %1212 = arith.addf %1197, %1211 : vector<8x128xf32>
    %cst_697 = arith.constant 2.000000e+00 : f32
    %1213 = vector.broadcast %cst_697 : f32 to vector<8x128xf32>
    %1214 = arith.subf %243, %1213 : vector<8x128xf32>
    %1215 = math.absf %1214 : vector<8x128xf32>
    %cst_698 = arith.constant 1.000000e+00 : f32
    %1216 = vector.broadcast %cst_698 : f32 to vector<8x128xf32>
    %1217 = arith.subf %1216, %1215 : vector<8x128xf32>
    %cst_699 = arith.constant 0.000000e+00 : f32
    %1218 = vector.broadcast %cst_699 : f32 to vector<8x128xf32>
    %1219 = arith.maximumf %1217, %1218 : vector<8x128xf32>
    %1220 = arith.mulf %1209, %1219 : vector<8x128xf32>
    %1221 = arith.addf %1206, %1220 : vector<8x128xf32>
    %c3_700 = arith.constant 3 : index
    %c3_701 = arith.constant 3 : index
    %c0_702 = arith.constant 0 : index
    %c0_703 = arith.constant 0 : index
    %1222 = vector.load %arg1[%c3_700, %c3_701, %c0_702, %c0_703] : memref<4x16x8x128xbf16, #tpu.memory_space<vmem>>, vector<1x1x8x128xbf16>
    %1223 = vector.shape_cast %1222 : vector<1x1x8x128xbf16> to vector<8x128xbf16>
    %1224 = arith.extf %1223 : vector<8x128xbf16> to vector<8x128xf32>
    %1225 = arith.subf %1224, %1174 : vector<8x128xf32>
    %1226 = math.exp %1225 : vector<8x128xf32>
    %1227 = arith.addf %1212, %1226 : vector<8x128xf32>
    %cst_704 = arith.constant 3.000000e+00 : f32
    %1228 = vector.broadcast %cst_704 : f32 to vector<8x128xf32>
    %1229 = arith.subf %243, %1228 : vector<8x128xf32>
    %1230 = math.absf %1229 : vector<8x128xf32>
    %cst_705 = arith.constant 1.000000e+00 : f32
    %1231 = vector.broadcast %cst_705 : f32 to vector<8x128xf32>
    %1232 = arith.subf %1231, %1230 : vector<8x128xf32>
    %cst_706 = arith.constant 0.000000e+00 : f32
    %1233 = vector.broadcast %cst_706 : f32 to vector<8x128xf32>
    %1234 = arith.maximumf %1232, %1233 : vector<8x128xf32>
    %1235 = arith.mulf %1224, %1234 : vector<8x128xf32>
    %1236 = arith.addf %1221, %1235 : vector<8x128xf32>
    %c3_707 = arith.constant 3 : index
    %c4_708 = arith.constant 4 : index
    %c0_709 = arith.constant 0 : index
    %c0_710 = arith.constant 0 : index
    %1237 = vector.load %arg1[%c3_707, %c4_708, %c0_709, %c0_710] : memref<4x16x8x128xbf16, #tpu.memory_space<vmem>>, vector<1x1x8x128xbf16>
    %1238 = vector.shape_cast %1237 : vector<1x1x8x128xbf16> to vector<8x128xbf16>
    %1239 = arith.extf %1238 : vector<8x128xbf16> to vector<8x128xf32>
    %1240 = arith.subf %1239, %1174 : vector<8x128xf32>
    %1241 = math.exp %1240 : vector<8x128xf32>
    %1242 = arith.addf %1227, %1241 : vector<8x128xf32>
    %cst_711 = arith.constant 4.000000e+00 : f32
    %1243 = vector.broadcast %cst_711 : f32 to vector<8x128xf32>
    %1244 = arith.subf %243, %1243 : vector<8x128xf32>
    %1245 = math.absf %1244 : vector<8x128xf32>
    %cst_712 = arith.constant 1.000000e+00 : f32
    %1246 = vector.broadcast %cst_712 : f32 to vector<8x128xf32>
    %1247 = arith.subf %1246, %1245 : vector<8x128xf32>
    %cst_713 = arith.constant 0.000000e+00 : f32
    %1248 = vector.broadcast %cst_713 : f32 to vector<8x128xf32>
    %1249 = arith.maximumf %1247, %1248 : vector<8x128xf32>
    %1250 = arith.mulf %1239, %1249 : vector<8x128xf32>
    %1251 = arith.addf %1236, %1250 : vector<8x128xf32>
    %c3_714 = arith.constant 3 : index
    %c5_715 = arith.constant 5 : index
    %c0_716 = arith.constant 0 : index
    %c0_717 = arith.constant 0 : index
    %1252 = vector.load %arg1[%c3_714, %c5_715, %c0_716, %c0_717] : memref<4x16x8x128xbf16, #tpu.memory_space<vmem>>, vector<1x1x8x128xbf16>
    %1253 = vector.shape_cast %1252 : vector<1x1x8x128xbf16> to vector<8x128xbf16>
    %1254 = arith.extf %1253 : vector<8x128xbf16> to vector<8x128xf32>
    %1255 = arith.subf %1254, %1174 : vector<8x128xf32>
    %1256 = math.exp %1255 : vector<8x128xf32>
    %1257 = arith.addf %1242, %1256 : vector<8x128xf32>
    %cst_718 = arith.constant 5.000000e+00 : f32
    %1258 = vector.broadcast %cst_718 : f32 to vector<8x128xf32>
    %1259 = arith.subf %243, %1258 : vector<8x128xf32>
    %1260 = math.absf %1259 : vector<8x128xf32>
    %cst_719 = arith.constant 1.000000e+00 : f32
    %1261 = vector.broadcast %cst_719 : f32 to vector<8x128xf32>
    %1262 = arith.subf %1261, %1260 : vector<8x128xf32>
    %cst_720 = arith.constant 0.000000e+00 : f32
    %1263 = vector.broadcast %cst_720 : f32 to vector<8x128xf32>
    %1264 = arith.maximumf %1262, %1263 : vector<8x128xf32>
    %1265 = arith.mulf %1254, %1264 : vector<8x128xf32>
    %1266 = arith.addf %1251, %1265 : vector<8x128xf32>
    %c3_721 = arith.constant 3 : index
    %c6_722 = arith.constant 6 : index
    %c0_723 = arith.constant 0 : index
    %c0_724 = arith.constant 0 : index
    %1267 = vector.load %arg1[%c3_721, %c6_722, %c0_723, %c0_724] : memref<4x16x8x128xbf16, #tpu.memory_space<vmem>>, vector<1x1x8x128xbf16>
    %1268 = vector.shape_cast %1267 : vector<1x1x8x128xbf16> to vector<8x128xbf16>
    %1269 = arith.extf %1268 : vector<8x128xbf16> to vector<8x128xf32>
    %1270 = arith.subf %1269, %1174 : vector<8x128xf32>
    %1271 = math.exp %1270 : vector<8x128xf32>
    %1272 = arith.addf %1257, %1271 : vector<8x128xf32>
    %cst_725 = arith.constant 6.000000e+00 : f32
    %1273 = vector.broadcast %cst_725 : f32 to vector<8x128xf32>
    %1274 = arith.subf %243, %1273 : vector<8x128xf32>
    %1275 = math.absf %1274 : vector<8x128xf32>
    %cst_726 = arith.constant 1.000000e+00 : f32
    %1276 = vector.broadcast %cst_726 : f32 to vector<8x128xf32>
    %1277 = arith.subf %1276, %1275 : vector<8x128xf32>
    %cst_727 = arith.constant 0.000000e+00 : f32
    %1278 = vector.broadcast %cst_727 : f32 to vector<8x128xf32>
    %1279 = arith.maximumf %1277, %1278 : vector<8x128xf32>
    %1280 = arith.mulf %1269, %1279 : vector<8x128xf32>
    %1281 = arith.addf %1266, %1280 : vector<8x128xf32>
    %c3_728 = arith.constant 3 : index
    %c7_729 = arith.constant 7 : index
    %c0_730 = arith.constant 0 : index
    %c0_731 = arith.constant 0 : index
    %1282 = vector.load %arg1[%c3_728, %c7_729, %c0_730, %c0_731] : memref<4x16x8x128xbf16, #tpu.memory_space<vmem>>, vector<1x1x8x128xbf16>
    %1283 = vector.shape_cast %1282 : vector<1x1x8x128xbf16> to vector<8x128xbf16>
    %1284 = arith.extf %1283 : vector<8x128xbf16> to vector<8x128xf32>
    %1285 = arith.subf %1284, %1174 : vector<8x128xf32>
    %1286 = math.exp %1285 : vector<8x128xf32>
    %1287 = arith.addf %1272, %1286 : vector<8x128xf32>
    %cst_732 = arith.constant 7.000000e+00 : f32
    %1288 = vector.broadcast %cst_732 : f32 to vector<8x128xf32>
    %1289 = arith.subf %243, %1288 : vector<8x128xf32>
    %1290 = math.absf %1289 : vector<8x128xf32>
    %cst_733 = arith.constant 1.000000e+00 : f32
    %1291 = vector.broadcast %cst_733 : f32 to vector<8x128xf32>
    %1292 = arith.subf %1291, %1290 : vector<8x128xf32>
    %cst_734 = arith.constant 0.000000e+00 : f32
    %1293 = vector.broadcast %cst_734 : f32 to vector<8x128xf32>
    %1294 = arith.maximumf %1292, %1293 : vector<8x128xf32>
    %1295 = arith.mulf %1284, %1294 : vector<8x128xf32>
    %1296 = arith.addf %1281, %1295 : vector<8x128xf32>
    %c3_735 = arith.constant 3 : index
    %c8_736 = arith.constant 8 : index
    %c0_737 = arith.constant 0 : index
    %c0_738 = arith.constant 0 : index
    %1297 = vector.load %arg1[%c3_735, %c8_736, %c0_737, %c0_738] : memref<4x16x8x128xbf16, #tpu.memory_space<vmem>>, vector<1x1x8x128xbf16>
    %1298 = vector.shape_cast %1297 : vector<1x1x8x128xbf16> to vector<8x128xbf16>
    %1299 = arith.extf %1298 : vector<8x128xbf16> to vector<8x128xf32>
    %1300 = arith.subf %1299, %1174 : vector<8x128xf32>
    %1301 = math.exp %1300 : vector<8x128xf32>
    %1302 = arith.addf %1287, %1301 : vector<8x128xf32>
    %cst_739 = arith.constant 8.000000e+00 : f32
    %1303 = vector.broadcast %cst_739 : f32 to vector<8x128xf32>
    %1304 = arith.subf %243, %1303 : vector<8x128xf32>
    %1305 = math.absf %1304 : vector<8x128xf32>
    %cst_740 = arith.constant 1.000000e+00 : f32
    %1306 = vector.broadcast %cst_740 : f32 to vector<8x128xf32>
    %1307 = arith.subf %1306, %1305 : vector<8x128xf32>
    %cst_741 = arith.constant 0.000000e+00 : f32
    %1308 = vector.broadcast %cst_741 : f32 to vector<8x128xf32>
    %1309 = arith.maximumf %1307, %1308 : vector<8x128xf32>
    %1310 = arith.mulf %1299, %1309 : vector<8x128xf32>
    %1311 = arith.addf %1296, %1310 : vector<8x128xf32>
    %c3_742 = arith.constant 3 : index
    %c9_743 = arith.constant 9 : index
    %c0_744 = arith.constant 0 : index
    %c0_745 = arith.constant 0 : index
    %1312 = vector.load %arg1[%c3_742, %c9_743, %c0_744, %c0_745] : memref<4x16x8x128xbf16, #tpu.memory_space<vmem>>, vector<1x1x8x128xbf16>
    %1313 = vector.shape_cast %1312 : vector<1x1x8x128xbf16> to vector<8x128xbf16>
    %1314 = arith.extf %1313 : vector<8x128xbf16> to vector<8x128xf32>
    %1315 = arith.subf %1314, %1174 : vector<8x128xf32>
    %1316 = math.exp %1315 : vector<8x128xf32>
    %1317 = arith.addf %1302, %1316 : vector<8x128xf32>
    %cst_746 = arith.constant 9.000000e+00 : f32
    %1318 = vector.broadcast %cst_746 : f32 to vector<8x128xf32>
    %1319 = arith.subf %243, %1318 : vector<8x128xf32>
    %1320 = math.absf %1319 : vector<8x128xf32>
    %cst_747 = arith.constant 1.000000e+00 : f32
    %1321 = vector.broadcast %cst_747 : f32 to vector<8x128xf32>
    %1322 = arith.subf %1321, %1320 : vector<8x128xf32>
    %cst_748 = arith.constant 0.000000e+00 : f32
    %1323 = vector.broadcast %cst_748 : f32 to vector<8x128xf32>
    %1324 = arith.maximumf %1322, %1323 : vector<8x128xf32>
    %1325 = arith.mulf %1314, %1324 : vector<8x128xf32>
    %1326 = arith.addf %1311, %1325 : vector<8x128xf32>
    %c3_749 = arith.constant 3 : index
    %c10_750 = arith.constant 10 : index
    %c0_751 = arith.constant 0 : index
    %c0_752 = arith.constant 0 : index
    %1327 = vector.load %arg1[%c3_749, %c10_750, %c0_751, %c0_752] : memref<4x16x8x128xbf16, #tpu.memory_space<vmem>>, vector<1x1x8x128xbf16>
    %1328 = vector.shape_cast %1327 : vector<1x1x8x128xbf16> to vector<8x128xbf16>
    %1329 = arith.extf %1328 : vector<8x128xbf16> to vector<8x128xf32>
    %1330 = arith.subf %1329, %1174 : vector<8x128xf32>
    %1331 = math.exp %1330 : vector<8x128xf32>
    %1332 = arith.addf %1317, %1331 : vector<8x128xf32>
    %cst_753 = arith.constant 1.000000e+01 : f32
    %1333 = vector.broadcast %cst_753 : f32 to vector<8x128xf32>
    %1334 = arith.subf %243, %1333 : vector<8x128xf32>
    %1335 = math.absf %1334 : vector<8x128xf32>
    %cst_754 = arith.constant 1.000000e+00 : f32
    %1336 = vector.broadcast %cst_754 : f32 to vector<8x128xf32>
    %1337 = arith.subf %1336, %1335 : vector<8x128xf32>
    %cst_755 = arith.constant 0.000000e+00 : f32
    %1338 = vector.broadcast %cst_755 : f32 to vector<8x128xf32>
    %1339 = arith.maximumf %1337, %1338 : vector<8x128xf32>
    %1340 = arith.mulf %1329, %1339 : vector<8x128xf32>
    %1341 = arith.addf %1326, %1340 : vector<8x128xf32>
    %c3_756 = arith.constant 3 : index
    %c11_757 = arith.constant 11 : index
    %c0_758 = arith.constant 0 : index
    %c0_759 = arith.constant 0 : index
    %1342 = vector.load %arg1[%c3_756, %c11_757, %c0_758, %c0_759] : memref<4x16x8x128xbf16, #tpu.memory_space<vmem>>, vector<1x1x8x128xbf16>
    %1343 = vector.shape_cast %1342 : vector<1x1x8x128xbf16> to vector<8x128xbf16>
    %1344 = arith.extf %1343 : vector<8x128xbf16> to vector<8x128xf32>
    %1345 = arith.subf %1344, %1174 : vector<8x128xf32>
    %1346 = math.exp %1345 : vector<8x128xf32>
    %1347 = arith.addf %1332, %1346 : vector<8x128xf32>
    %cst_760 = arith.constant 1.100000e+01 : f32
    %1348 = vector.broadcast %cst_760 : f32 to vector<8x128xf32>
    %1349 = arith.subf %243, %1348 : vector<8x128xf32>
    %1350 = math.absf %1349 : vector<8x128xf32>
    %cst_761 = arith.constant 1.000000e+00 : f32
    %1351 = vector.broadcast %cst_761 : f32 to vector<8x128xf32>
    %1352 = arith.subf %1351, %1350 : vector<8x128xf32>
    %cst_762 = arith.constant 0.000000e+00 : f32
    %1353 = vector.broadcast %cst_762 : f32 to vector<8x128xf32>
    %1354 = arith.maximumf %1352, %1353 : vector<8x128xf32>
    %1355 = arith.mulf %1344, %1354 : vector<8x128xf32>
    %1356 = arith.addf %1341, %1355 : vector<8x128xf32>
    %c3_763 = arith.constant 3 : index
    %c12_764 = arith.constant 12 : index
    %c0_765 = arith.constant 0 : index
    %c0_766 = arith.constant 0 : index
    %1357 = vector.load %arg1[%c3_763, %c12_764, %c0_765, %c0_766] : memref<4x16x8x128xbf16, #tpu.memory_space<vmem>>, vector<1x1x8x128xbf16>
    %1358 = vector.shape_cast %1357 : vector<1x1x8x128xbf16> to vector<8x128xbf16>
    %1359 = arith.extf %1358 : vector<8x128xbf16> to vector<8x128xf32>
    %1360 = arith.subf %1359, %1174 : vector<8x128xf32>
    %1361 = math.exp %1360 : vector<8x128xf32>
    %1362 = arith.addf %1347, %1361 : vector<8x128xf32>
    %cst_767 = arith.constant 1.200000e+01 : f32
    %1363 = vector.broadcast %cst_767 : f32 to vector<8x128xf32>
    %1364 = arith.subf %243, %1363 : vector<8x128xf32>
    %1365 = math.absf %1364 : vector<8x128xf32>
    %cst_768 = arith.constant 1.000000e+00 : f32
    %1366 = vector.broadcast %cst_768 : f32 to vector<8x128xf32>
    %1367 = arith.subf %1366, %1365 : vector<8x128xf32>
    %cst_769 = arith.constant 0.000000e+00 : f32
    %1368 = vector.broadcast %cst_769 : f32 to vector<8x128xf32>
    %1369 = arith.maximumf %1367, %1368 : vector<8x128xf32>
    %1370 = arith.mulf %1359, %1369 : vector<8x128xf32>
    %1371 = arith.addf %1356, %1370 : vector<8x128xf32>
    %c3_770 = arith.constant 3 : index
    %c13_771 = arith.constant 13 : index
    %c0_772 = arith.constant 0 : index
    %c0_773 = arith.constant 0 : index
    %1372 = vector.load %arg1[%c3_770, %c13_771, %c0_772, %c0_773] : memref<4x16x8x128xbf16, #tpu.memory_space<vmem>>, vector<1x1x8x128xbf16>
    %1373 = vector.shape_cast %1372 : vector<1x1x8x128xbf16> to vector<8x128xbf16>
    %1374 = arith.extf %1373 : vector<8x128xbf16> to vector<8x128xf32>
    %1375 = arith.subf %1374, %1174 : vector<8x128xf32>
    %1376 = math.exp %1375 : vector<8x128xf32>
    %1377 = arith.addf %1362, %1376 : vector<8x128xf32>
    %cst_774 = arith.constant 1.300000e+01 : f32
    %1378 = vector.broadcast %cst_774 : f32 to vector<8x128xf32>
    %1379 = arith.subf %243, %1378 : vector<8x128xf32>
    %1380 = math.absf %1379 : vector<8x128xf32>
    %cst_775 = arith.constant 1.000000e+00 : f32
    %1381 = vector.broadcast %cst_775 : f32 to vector<8x128xf32>
    %1382 = arith.subf %1381, %1380 : vector<8x128xf32>
    %cst_776 = arith.constant 0.000000e+00 : f32
    %1383 = vector.broadcast %cst_776 : f32 to vector<8x128xf32>
    %1384 = arith.maximumf %1382, %1383 : vector<8x128xf32>
    %1385 = arith.mulf %1374, %1384 : vector<8x128xf32>
    %1386 = arith.addf %1371, %1385 : vector<8x128xf32>
    %c3_777 = arith.constant 3 : index
    %c14_778 = arith.constant 14 : index
    %c0_779 = arith.constant 0 : index
    %c0_780 = arith.constant 0 : index
    %1387 = vector.load %arg1[%c3_777, %c14_778, %c0_779, %c0_780] : memref<4x16x8x128xbf16, #tpu.memory_space<vmem>>, vector<1x1x8x128xbf16>
    %1388 = vector.shape_cast %1387 : vector<1x1x8x128xbf16> to vector<8x128xbf16>
    %1389 = arith.extf %1388 : vector<8x128xbf16> to vector<8x128xf32>
    %1390 = arith.subf %1389, %1174 : vector<8x128xf32>
    %1391 = math.exp %1390 : vector<8x128xf32>
    %1392 = arith.addf %1377, %1391 : vector<8x128xf32>
    %cst_781 = arith.constant 1.400000e+01 : f32
    %1393 = vector.broadcast %cst_781 : f32 to vector<8x128xf32>
    %1394 = arith.subf %243, %1393 : vector<8x128xf32>
    %1395 = math.absf %1394 : vector<8x128xf32>
    %cst_782 = arith.constant 1.000000e+00 : f32
    %1396 = vector.broadcast %cst_782 : f32 to vector<8x128xf32>
    %1397 = arith.subf %1396, %1395 : vector<8x128xf32>
    %cst_783 = arith.constant 0.000000e+00 : f32
    %1398 = vector.broadcast %cst_783 : f32 to vector<8x128xf32>
    %1399 = arith.maximumf %1397, %1398 : vector<8x128xf32>
    %1400 = arith.mulf %1389, %1399 : vector<8x128xf32>
    %1401 = arith.addf %1386, %1400 : vector<8x128xf32>
    %c3_784 = arith.constant 3 : index
    %c15_785 = arith.constant 15 : index
    %c0_786 = arith.constant 0 : index
    %c0_787 = arith.constant 0 : index
    %1402 = vector.load %arg1[%c3_784, %c15_785, %c0_786, %c0_787] : memref<4x16x8x128xbf16, #tpu.memory_space<vmem>>, vector<1x1x8x128xbf16>
    %1403 = vector.shape_cast %1402 : vector<1x1x8x128xbf16> to vector<8x128xbf16>
    %1404 = arith.extf %1403 : vector<8x128xbf16> to vector<8x128xf32>
    %1405 = arith.subf %1404, %1174 : vector<8x128xf32>
    %1406 = math.exp %1405 : vector<8x128xf32>
    %1407 = arith.addf %1392, %1406 : vector<8x128xf32>
    %cst_788 = arith.constant 1.500000e+01 : f32
    %1408 = vector.broadcast %cst_788 : f32 to vector<8x128xf32>
    %1409 = arith.subf %243, %1408 : vector<8x128xf32>
    %1410 = math.absf %1409 : vector<8x128xf32>
    %cst_789 = arith.constant 1.000000e+00 : f32
    %1411 = vector.broadcast %cst_789 : f32 to vector<8x128xf32>
    %1412 = arith.subf %1411, %1410 : vector<8x128xf32>
    %cst_790 = arith.constant 0.000000e+00 : f32
    %1413 = vector.broadcast %cst_790 : f32 to vector<8x128xf32>
    %1414 = arith.maximumf %1412, %1413 : vector<8x128xf32>
    %1415 = arith.mulf %1404, %1414 : vector<8x128xf32>
    %1416 = arith.addf %1401, %1415 : vector<8x128xf32>
    %1417 = math.log %1407 : vector<8x128xf32>
    %1418 = arith.addf %1417, %1174 : vector<8x128xf32>
    %1419 = arith.subf %1418, %1416 : vector<8x128xf32>
    %1420 = arith.addf %1126, %1419 : vector<8x128xf32>
    %cst_791 = arith.constant 2.500000e-01 : f32
    %1421 = vector.broadcast %cst_791 : f32 to vector<8x128xf32>
    %1422 = arith.mulf %1421, %20 : vector<8x128xf32>
    %1423 = arith.mulf %1420, %1422 : vector<8x128xf32>
    %cst_792 = arith.constant 0.000000e+00 : f32
    %1424 = vector.broadcast %cst_792 : f32 to vector<8x128xf32>
    %1425 = arith.select %22, %1423, %1424 : vector<8x128xi1>, vector<8x128xf32>
    %1426 = vector.shape_cast %1425 : vector<8x128xf32> to vector<1x8x128xf32>
    %cst_793 = arith.constant dense<0.000000e+00> : vector<1xf32>
    %1427 = vector.multi_reduction <add>, %1426, %cst_793 [1, 2] : vector<1x8x128xf32> to vector<1xf32>
    %1428 = vector.shape_cast %1427 : vector<1xf32> to vector<1x1x1xf32>
    %1429 = vector.extract %1428[0, 0, 0] : f32 from vector<1x1x1xf32>
    %1430 = vector.broadcast %1429 : f32 to vector<1x1xf32>
    %1431 = tpu.iota {dimensions = array<i32: 1>} : vector<1x128xi32>
    %c0_i32 = arith.constant 0 : i32
    %1432 = vector.broadcast %c0_i32 : i32 to vector<1x128xi32>
    %1433 = arith.cmpi eq, %1431, %1432 : vector<1x128xi32>
    %c1_i32 = arith.constant 1 : i32
    %1434 = vector.broadcast %c1_i32 : i32 to vector<1x128xi32>
    %1435 = arith.cmpi eq, %1431, %1434 : vector<1x128xi32>
    %cst_794 = arith.constant 0.000000e+00 : f32
    %1436 = vector.shape_cast %1430 : vector<1x1xf32> to vector<1x1xf32>
    %1437 = vector.broadcast %1436 : vector<1x1xf32> to vector<1x128xf32>
    %1438 = vector.broadcast %cst_794 : f32 to vector<1x128xf32>
    %1439 = arith.select %1435, %1437, %1438 : vector<1x128xi1>, vector<1x128xf32>
    %1440 = vector.shape_cast %223 : vector<1x1xf32> to vector<1x1xf32>
    %1441 = vector.broadcast %1440 : vector<1x1xf32> to vector<1x128xf32>
    %1442 = arith.select %1433, %1441, %1439 : vector<1x128xi1>, vector<1x128xf32>
    %c0_795 = arith.constant 0 : index
    %c0_796 = arith.constant 0 : index
    %c0_797 = arith.constant 0 : index
    %1443 = vector.load %arg6[%c0_795, %c0_796, %c0_797] : memref<1x1x128xf32, #tpu.memory_space<vmem>>, vector<1x1x128xf32>
    %1444 = vector.shape_cast %1443 : vector<1x1x128xf32> to vector<1x128xf32>
    %1445 = vector.shape_cast %1442 : vector<1x128xf32> to vector<1x1x128xf32>
    tpu.vector_store %arg6[%c0_795, %c0_796, %c0_797], %1445 {strides = array<i32>} : memref<1x1x128xf32, #tpu.memory_space<vmem>>, vector<1x1x128xf32>,
    return
  }
  func.func @transform_0(%arg0: i32) -> (i32, i32, i32, i32) {
    %c0_i32 = arith.constant 0 : i32
    %c0_i32_0 = arith.constant 0 : i32
    %c0_i32_1 = arith.constant 0 : i32
    %c0_i32_2 = arith.constant 0 : i32
    return %c0_i32, %c0_i32_0, %arg0, %c0_i32_1 : i32, i32, i32, i32
  }
  func.func @transform_1(%arg0: i32) -> (i32, i32, i32) {
    %c0_i32 = arith.constant 0 : i32
    %c0_i32_0 = arith.constant 0 : i32
    %c0_i32_1 = arith.constant 0 : i32
    return %c0_i32, %arg0, %c0_i32_0 : i32, i32, i32
  }
  func.func @transform_2(%arg0: i32) -> (i32, i32, i32) {
    %c0_i32 = arith.constant 0 : i32
    %c0_i32_0 = arith.constant 0 : i32
    %c0_i32_1 = arith.constant 0 : i32
    return %c0_i32, %arg0, %c0_i32_0 : i32, i32, i32
  }
  func.func @transform_3(%arg0: i32) -> (i32, i32, i32) {
    %c0_i32 = arith.constant 0 : i32
    %c0_i32_0 = arith.constant 0 : i32
    %c0_i32_1 = arith.constant 0 : i32
    return %c0_i32, %arg0, %c0_i32_0 : i32, i32, i32
  }
  func.func @transform_4(%arg0: i32) -> (i32, i32) {
    %c0_i32 = arith.constant 0 : i32
    %c0_i32_0 = arith.constant 0 : i32
    return %arg0, %c0_i32 : i32, i32
  }
  func.func @transform_5(%arg0: i32) -> (i32, i32, i32) {
    %c0_i32 = arith.constant 0 : i32
    %c0_i32_0 = arith.constant 0 : i32
    %c0_i32_1 = arith.constant 0 : i32
    return %arg0, %c0_i32, %c0_i32_0 : i32, i32, i32
  }
}

</mosaic_0001>

<llo_original>
// kernel: tpu_custom_call.1
$region0: #{tpu_custom_call.1}
  #allocation0 [shape = 'u32[]', space=smem, size = 0x4, offset = 0x4, fixed_abs, tag = 'smem constant byte address 0x4 - core index']
  #allocation1 [shape = 'u32[144,128]{1,0:T(1,128)}', space=vmem, size = 0x12000, scoped, tag = 'internal scratch']
  %s0 = inlined_call_operand.hbm [shape: bf16[4,16,8,128], index: 0, kind: input, shape index: {}]
  %s1 = inlined_call_operand.hbm [shape: f32[4,8,128], index: 1, kind: input, shape index: {}]
  %s2 = inlined_call_operand.hbm [shape: f32[4,8,128], index: 2, kind: input, shape index: {}]
  %s3 = inlined_call_operand.hbm [shape: f32[2,8,128], index: 3, kind: input, shape index: {}]
  %s4 = inlined_call_operand.hbm [shape: f32[8,128], index: 4, kind: input, shape index: {}]
  %s5 = inlined_call_operand.hbm [shape: f32[1,1,128], index: 5, kind: output, shape index: {}]
  %s6 = sld [smem:[#allocation0]]
  $region50: #{tpu_custom_call.1} parent=0
    _
  %s8 = ssub.s32 1, %s6
  %s9 = scalar_select 0, %s8, %s6
  $region1: #{tpu_custom_call.1} parent=0
    #allocation2 [shape = 'u8[131072]{0}', space=vmem, size = 0x20000, scoped, tag = 'input window, operand 0, single buffered']
    #allocation3 [shape = 's32[1]{0}', space=sflag, size = 0x4, scoped, tag = 'scoped memory for tpu_custom_call.1']
    #allocation4 [shape = 's32[1]{0}', space=sflag, size = 0x4, scoped, tag = 'scoped memory for tpu_custom_call.1']
    #allocation5 [shape = 'u8[16384]{0}', space=vmem, size = 0x4000, scoped, tag = 'input window, operand 1, single buffered']
    #allocation6 [shape = 's32[1]{0}', space=sflag, size = 0x4, scoped, tag = 'scoped memory for tpu_custom_call.1']
    #allocation7 [shape = 'u8[16384]{0}', space=vmem, size = 0x4000, scoped, tag = 'input window, operand 2, single buffered']
    #allocation8 [shape = 'u8[8192]{0}', space=vmem, size = 0x2000, scoped, tag = 'input window, operand 3, single buffered']
    #allocation9 [shape = 's32[1]{0}', space=sflag, size = 0x4, scoped, tag = 'scoped memory for tpu_custom_call.1']
    #allocation10 [shape = 'u8[4096]{0}', space=vmem, size = 0x1000, scoped, tag = 'input window, operand 4, single buffered']
    #allocation11 [shape = 'u8[512]{0}', space=vmem, size = 0x400, scoped, tag = 'output window, operand 0, single buffered']
    %10 = vsyncpa [#allocation3], 0
    %11 = vsyncpa [#allocation6], 0
    %12 = vsyncpa [#allocation9], 0
    %13 = vsyncpa [#allocation4], 0
    // Predicated region
    $region2: #{tpu_custom_call.1} parent=1 // pred_check
      _
    $region3: #{tpu_custom_call.1} parent=1 // pred_check_branch
      %15 = sbr.rel (0) target = $region5
    $region4: #{tpu_custom_call.1} parent=1 // pred_region
      %s17 = ssub.s32 4096, 4096
      %18 = vsyncadd [#allocation3], %s17
      %s19 = sshll.u32 [#allocation2], 4
      %s20 = int_to_ptr.vmem [resolvable:$true] %s19
      %25 = dma.hbm_to_vmem [thread:$0]  %s0, 4096, %s20, [#allocation3], 64, 64, 4
    $region5: #{tpu_custom_call.1} parent=1 // pred_fallthru
      _
    // Predicated region
    $region6: #{tpu_custom_call.1} parent=1 // pred_check
      _
    $region7: #{tpu_custom_call.1} parent=1 // pred_check_branch
      %27 = sbr.rel (0) target = $region9
    $region8: #{tpu_custom_call.1} parent=1 // pred_region
      %s29 = ssub.s32 512, 512
      %30 = vsyncadd [#allocation6], %s29
      %s31 = sshll.u32 [#allocation5], 4
      %s32 = int_to_ptr.vmem [resolvable:$true] %s31
      %37 = dma.hbm_to_vmem [thread:$0]  %s1, 512, %s32, [#allocation6], 128, 128, 8
    $region9: #{tpu_custom_call.1} parent=1 // pred_fallthru
      _
    // Predicated region
    $region10: #{tpu_custom_call.1} parent=1 // pred_check
      _
    $region11: #{tpu_custom_call.1} parent=1 // pred_check_branch
      %39 = sbr.rel (0) target = $region13
    $region12: #{tpu_custom_call.1} parent=1 // pred_region
      %s41 = ssub.s32 512, 512
      %42 = vsyncadd [#allocation6], %s41
      %s43 = sshll.u32 [#allocation7], 4
      %s44 = int_to_ptr.vmem [resolvable:$true] %s43
      %49 = dma.hbm_to_vmem [thread:$0]  %s2, 512, %s44, [#allocation6], 128, 128, 8
    $region13: #{tpu_custom_call.1} parent=1 // pred_fallthru
      _
    // Predicated region
    $region14: #{tpu_custom_call.1} parent=1 // pred_check
      _
    $region15: #{tpu_custom_call.1} parent=1 // pred_check_branch
      %51 = sbr.rel (0) target = $region17
    $region16: #{tpu_custom_call.1} parent=1 // pred_region
      %s53 = ssub.s32 256, 256
      %54 = vsyncadd [#allocation9], %s53
      %s55 = sshll.u32 [#allocation8], 4
      %s56 = int_to_ptr.vmem [resolvable:$true] %s55
      %61 = dma.hbm_to_vmem [thread:$0]  %s3, 256, %s56, [#allocation9], 128, 128, 8
    $region17: #{tpu_custom_call.1} parent=1 // pred_fallthru
      _
    // Predicated region
    $region18: #{tpu_custom_call.1} parent=1 // pred_check
      _
    $region19: #{tpu_custom_call.1} parent=1 // pred_check_branch
      %63 = sbr.rel (0) target = $region21
    $region20: #{tpu_custom_call.1} parent=1 // pred_region
      %s65 = ssub.s32 128, 128
      %66 = vsyncadd [#allocation9], %s65
      %s68 = sshll.u32 [#allocation10], 4
      %s69 = int_to_ptr.vmem [resolvable:$true] %s68
      %71 = dma.hbm_to_vmem [thread:$0]  %s4, 128, %s69, [#allocation9]
    $region21: #{tpu_custom_call.1} parent=1 // pred_fallthru
      _
    // Predicated region
    $region22: #{tpu_custom_call.1} parent=1 // pred_check
      _
    $region23: #{tpu_custom_call.1} parent=1 // pred_check_branch
      %73 = sbr.rel (0) target = $region25
    $region24: #{tpu_custom_call.1} parent=1 // pred_region
      %74 = dma.done [#allocation3], 4096
    $region25: #{tpu_custom_call.1} parent=1 // pred_fallthru
      _
    // Predicated region
    $region26: #{tpu_custom_call.1} parent=1 // pred_check
      _
    $region27: #{tpu_custom_call.1} parent=1 // pred_check_branch
      %76 = sbr.rel (0) target = $region29
    $region28: #{tpu_custom_call.1} parent=1 // pred_region
      %77 = dma.done [#allocation6], 512
    $region29: #{tpu_custom_call.1} parent=1 // pred_fallthru
      _
    // Predicated region
    $region30: #{tpu_custom_call.1} parent=1 // pred_check
      _
    $region31: #{tpu_custom_call.1} parent=1 // pred_check_branch
      %79 = sbr.rel (0) target = $region33
    $region32: #{tpu_custom_call.1} parent=1 // pred_region
      %80 = dma.done [#allocation6], 512
    $region33: #{tpu_custom_call.1} parent=1 // pred_fallthru
      _
    // Predicated region
    $region34: #{tpu_custom_call.1} parent=1 // pred_check
      _
    $region35: #{tpu_custom_call.1} parent=1 // pred_check_branch
      %82 = sbr.rel (0) target = $region37
    $region36: #{tpu_custom_call.1} parent=1 // pred_region
      %83 = dma.done [#allocation9], 256
    $region37: #{tpu_custom_call.1} parent=1 // pred_fallthru
      _
    // Predicated region
    $region38: #{tpu_custom_call.1} parent=1 // pred_check
      _
    $region39: #{tpu_custom_call.1} parent=1 // pred_check_branch
      %85 = sbr.rel (0) target = $region41
    $region40: #{tpu_custom_call.1} parent=1 // pred_region
      %86 = dma.done [#allocation9], 128
    $region41: #{tpu_custom_call.1} parent=1 // pred_fallthru
      _
    %v87 = vld [vmem:[#allocation5] sm:$0xff]
    %s88 = scalar_lea.vmem [#allocation5], 8
    %v89 = vld [vmem:[%s88] sm:$0xff]
    %s90 = scalar_lea.vmem [#allocation5], 16
    %v91 = vld [vmem:[%s90] sm:$0xff]
    %s92 = scalar_lea.vmem [#allocation5], 24
    %v93 = vld [vmem:[%s92] sm:$0xff]
    %v94 = vld [vmem:[#allocation7] sm:$0xff]
    %s95 = scalar_lea.vmem [#allocation7], 8
    %v96 = vld [vmem:[%s95] sm:$0xff]
    %s97 = scalar_lea.vmem [#allocation7], 16
    %v98 = vld [vmem:[%s97] sm:$0xff]
    %s99 = scalar_lea.vmem [#allocation7], 24
    %v100 = vld [vmem:[%s99] sm:$0xff]
    %v101 = vld [vmem:[#allocation8] sm:$0xff]
    %s102 = scalar_lea.vmem [#allocation8], 8
    %v103 = vld [vmem:[%s102] sm:$0xff]
    %v104 = vld [vmem:[#allocation10] sm:$0xff]
    %vm105 = vcmp.gt.f32.partialorder %v104, 0.0
    %v106 = vmin.f32 %v91, %v98
    %v107 = vmax.f32 %v87, %v94
    %v108 = vsub.f32 %v106, %v107
    %v109 = vmax.f32 %v108, 0.0
    %v110 = vmin.f32 %v93, %v100
    %v111 = vmax.f32 %v89, %v96
    %v112 = vsub.f32 %v110, %v111
    %v113 = vmax.f32 %v112, 0.0
    %v114 = vmul.f32 %v109, %v113
    %v115 = vsub.f32 %v91, %v87
    %v116 = vsub.f32 %v93, %v89
    %v117 = vsub.f32 %v98, %v94
    %v118 = vsub.f32 %v100, %v96
    %v119 = vmul.f32 %v115, %v116
    %v120 = vmul.f32 %v117, %v118
    %v121 = vadd.f32 %v119, %v120
    %v122 = vsub.f32 %v121, %v114
    %v123 = vrcp.pop %v122
    %v124 = vmul.f32 %v122, %v123
    %v125 = vsub.f32 2.0, %v124
    %v126 = vmul.f32 %v123, %v125
    %v127 = vmul.f32 %v114, %v126
    %v128 = vmax.f32 %v91, %v98
    %v129 = vmin.f32 %v87, %v94
    %v130 = vsub.f32 %v128, %v129
    %v131 = vmax.f32 %v130, 0.0
    %v132 = vmax.f32 %v93, %v100
    %v133 = vmin.f32 %v89, %v96
    %v134 = vsub.f32 %v132, %v133
    %v135 = vmax.f32 %v134, 0.0
    %v136 = vmul.f32 %v131, %v131
    %v137 = vmul.f32 %v135, %v135
    %v138 = vadd.f32 %v136, %v137
    %v139 = vadd.f32 %v138, 1e-07
    %v140 = vadd.f32 %v87, %v91
    %v141 = vadd.f32 %v94, %v98
    %v142 = vsub.f32 %v140, %v141
    %v143 = vadd.f32 %v89, %v93
    %v144 = vadd.f32 %v96, %v100
    %v145 = vsub.f32 %v143, %v144
    %v146 = vmul.f32 %v142, %v142
    %v147 = vmul.f32 %v145, %v145
    %v148 = vadd.f32 %v146, %v147
    %v149 = vmul.f32 %v148, 0.25
    %v150 = vrcp.pop %v116
    %v151 = vmul.f32 %v116, %v150
    %v152 = vsub.f32 2.0, %v151
    %v153 = vmul.f32 %v150, %v152
    %v154 = vmul.f32 %v115, %v153
    %vm155 = vcmp.lt.f32.partialorder %v154, 0.0
    %v156 = vsel %vm155, -1.0, 1.0
    %v157 = vand.u32 2147483647, %v154
    %vm158 = vcmp.gt.f32.partialorder %v157, 2.4142137
    %vm159 = vcmp.gt.f32.partialorder %v157, 0.41421357
    %vm160 = vmxor %vm158, 1
    %vm161 = vmand %vm159, %vm160
    %v162 = vmax.f32 %v157, 1e-30
    %v163 = vrcp.pop %v162
    %v164 = vmul.f32 %v162, %v163
    %v165 = vsub.f32 2.0, %v164
    %v166 = vmul.f32 %v163, %v165
    %v167 = vsub.f32 0.0, %v166
    %v168 = vsub.f32 %v157, 1.0
    %v169 = vadd.f32 %v157, 1.0
    %v170 = vrcp.pop %v169
    %v171 = vmul.f32 %v169, %v170
    %v172 = vsub.f32 2.0, %v171
    %v173 = vmul.f32 %v170, %v172
    %v174 = vmul.f32 %v168, %v173
    %v175 = vsel %vm161, %v174, %v157
    %v176 = vsel %vm158, %v167, %v175
    %v177 = vsel %vm161, 0.7853982, 0.0
    %v178 = vsel %vm158, 1.5707964, %v177
    %v179 = vmul.f32 %v176, %v176
    %v180 = vmul.f32 %v179, 0.080537446
    %v181 = vsub.f32 %v180, 0.13877685
    %v182 = vmul.f32 %v181, %v179
    %v183 = vadd.f32 %v182, 0.19977711
    %v184 = vmul.f32 %v183, %v179
    %v185 = vsub.f32 %v184, 0.3333295
    %v186 = vmul.f32 %v185, %v179
    %v187 = vmul.f32 %v186, %v176
    %v188 = vadd.f32 %v187, %v176
    %v189 = vadd.f32 %v188, %v178
    %v190 = vmul.f32 %v156, %v189
    %v191 = vrcp.pop %v118
    %v192 = vmul.f32 %v118, %v191
    %v193 = vsub.f32 2.0, %v192
    %v194 = vmul.f32 %v191, %v193
    %v195 = vmul.f32 %v117, %v194
    %vm196 = vcmp.lt.f32.partialorder %v195, 0.0
    %v197 = vsel %vm196, -1.0, 1.0
    %v198 = vand.u32 2147483647, %v195
    %vm199 = vcmp.gt.f32.partialorder %v198, 2.4142137
    %vm200 = vcmp.gt.f32.partialorder %v198, 0.41421357
    %vm201 = vmxor %vm199, 1
    %vm202 = vmand %vm200, %vm201
    %v203 = vmax.f32 %v198, 1e-30
    %v204 = vrcp.pop %v203
    %v205 = vmul.f32 %v203, %v204
    %v206 = vsub.f32 2.0, %v205
    %v207 = vmul.f32 %v204, %v206
    %v208 = vsub.f32 0.0, %v207
    %v209 = vsub.f32 %v198, 1.0
    %v210 = vadd.f32 %v198, 1.0
    %v211 = vrcp.pop %v210
    %v212 = vmul.f32 %v210, %v211
    %v213 = vsub.f32 2.0, %v212
    %v214 = vmul.f32 %v211, %v213
    %v215 = vmul.f32 %v209, %v214
    %v216 = vsel %vm202, %v215, %v198
    %v217 = vsel %vm199, %v208, %v216
    %v218 = vsel %vm202, 0.7853982, 0.0
    %v219 = vsel %vm199, 1.5707964, %v218
    %v220 = vmul.f32 %v217, %v217
    %v221 = vmul.f32 %v220, 0.080537446
    %v222 = vsub.f32 %v221, 0.13877685
    %v223 = vmul.f32 %v222, %v220
    %v224 = vadd.f32 %v223, 0.19977711
    %v225 = vmul.f32 %v224, %v220
    %v226 = vsub.f32 %v225, 0.3333295
    %v227 = vmul.f32 %v226, %v220
    %v228 = vmul.f32 %v227, %v217
    %v229 = vadd.f32 %v228, %v217
    %v230 = vadd.f32 %v229, %v219
    %v231 = vmul.f32 %v197, %v230
    %v232 = vsub.f32 %v190, %v231
    %v233 = vmul.f32 %v232, %v232
    %v234 = vmul.f32 %v233, 0.40528473
    %v235 = vsub.f32 1.0, %v127
    %v236 = vadd.f32 %v235, %v234
    %v237 = vadd.f32 %v236, 1e-07
    %v238 = vrcp.pop %v237
    %v239 = vmul.f32 %v234, %v238
    %v240 = vrcp.pop %v139
    %v241 = vmul.f32 %v139, %v240
    %v242 = vsub.f32 2.0, %v241
    %v243 = vmul.f32 %v240, %v242
    %v244 = vmul.f32 %v149, %v243
    %v245 = vsub.f32 %v127, %v244
    %v246 = vmul.f32 %v239, %v234
    %v247 = vsub.f32 %v245, %v246
    %v248 = vsub.f32 1.0, %v247
    %v249 = vmul.f32 %v248, %v104
    %v250 = vsel %vm105, %v249, 0.0
    %251 = vadd.xlane.f32.xlu0 %v250
    %v252 = vpop.xlane.xlu0 %251
    %v253 = vrot.slane %v252, 4
    %v254 = vadd.f32 %v252, %v253
    %v255 = vrot.slane %v254, 2
    %v256 = vadd.f32 %v254, %v255
    %v257 = vrot.slane %v256, 1
    %v258 = vadd.f32 %v256, %v257
    %s259 = vtos %v258
    %v260 = vsub.f32 %v101, %v94
    %v261 = vmax.f32 %v260, 0.0
    %v262 = vmin.f32 %v261, 14.99
    %v263 = vsub.f32 %v103, %v96
    %v264 = vmax.f32 %v263, 0.0
    %v265 = vmin.f32 %v264, 14.99
    %v266 = vsub.f32 %v98, %v101
    %v267 = vmax.f32 %v266, 0.0
    %v268 = vmin.f32 %v267, 14.99
    %v269 = vsub.f32 %v100, %v103
    %v270 = vmax.f32 %v269, 0.0
    %v271 = vmin.f32 %v270, 14.99
    %v272 = vld [vmem:[#allocation2] sm:$0xf]
    %s273 = scalar_lea.vmem [#allocation2], 4
    %v274 = vld [vmem:[%s273] sm:$0xf]
    %v275 = vmax.bf16 %v272, %v274
    %s276 = scalar_lea.vmem [#allocation2], 8
    %v277 = vld [vmem:[%s276] sm:$0xf]
    %v278 = vmax.bf16 %v275, %v277
    %s279 = scalar_lea.vmem [#allocation2], 12
    %v280 = vld [vmem:[%s279] sm:$0xf]
    %v281 = vmax.bf16 %v278, %v280
    %s282 = scalar_lea.vmem [#allocation2], 16
    %v283 = vld [vmem:[%s282] sm:$0xf]
    %v284 = vmax.bf16 %v281, %v283
    %s285 = scalar_lea.vmem [#allocation2], 20
    %v286 = vld [vmem:[%s285] sm:$0xf]
    %v287 = vmax.bf16 %v284, %v286
    %s288 = scalar_lea.vmem [#allocation2], 24
    %v289 = vld [vmem:[%s288] sm:$0xf]
    %v290 = vmax.bf16 %v287, %v289
    %s291 = scalar_lea.vmem [#allocation2], 28
    %v292 = vld [vmem:[%s291] sm:$0xf]
    %v293 = vmax.bf16 %v290, %v292
    %s294 = scalar_lea.vmem [#allocation2], 32
    %v295 = vld [vmem:[%s294] sm:$0xf]
    %v296 = vmax.bf16 %v293, %v295
    %s297 = scalar_lea.vmem [#allocation2], 36
    %v298 = vld [vmem:[%s297] sm:$0xf]
    %v299 = vmax.bf16 %v296, %v298
    %s300 = scalar_lea.vmem [#allocation2], 40
    %v301 = vld [vmem:[%s300] sm:$0xf]
    %v302 = vmax.bf16 %v299, %v301
    %s303 = scalar_lea.vmem [#allocation2], 44
    %v304 = vld [vmem:[%s303] sm:$0xf]
    %v305 = vmax.bf16 %v302, %v304
    %s306 = scalar_lea.vmem [#allocation2], 48
    %v307 = vld [vmem:[%s306] sm:$0xf]
    %v308 = vmax.bf16 %v305, %v307
    %s309 = scalar_lea.vmem [#allocation2], 52
    %v310 = vld [vmem:[%s309] sm:$0xf]
    %v311 = vmax.bf16 %v308, %v310
    %s312 = scalar_lea.vmem [#allocation2], 56
    %v313 = vld [vmem:[%s312] sm:$0xf]
    %v314 = vmax.bf16 %v311, %v313
    %s315 = scalar_lea.vmem [#allocation2], 60
    %v316 = vld [vmem:[%s315] sm:$0xf]
    %v317 = vmax.bf16 %v314, %v316
    %v318 = vunpack.c.l.bf16 %v317
    %v319 = vunpack.c.l.bf16 %v272
    %v320 = vsub.f32 %v319, %v318
    %v321 = vmul.f32 %v320, 1.442695
    %v322 = vpow.pop %v321
    %v323 = vadd.f32 %v322, 0.0
    %v324 = vand.u32 2147483647, %v262
    %v325 = vsub.f32 1.0, %v324
    %v326 = vmax.f32 %v325, 0.0
    %v327 = vmul.f32 %v319, %v326
    %v328 = vadd.f32 %v327, 0.0
    %v329 = vunpack.c.l.bf16 %v274
    %v330 = vsub.f32 %v329, %v318
    %v331 = vmul.f32 %v330, 1.442695
    %v332 = vpow.pop %v331
    %v333 = vadd.f32 %v323, %v332
    %v334 = vsub.f32 %v262, 1.0
    %v335 = vand.u32 2147483647, %v334
    %v336 = vsub.f32 1.0, %v335
    %v337 = vmax.f32 %v336, 0.0
    %v338 = vmul.f32 %v329, %v337
    %v339 = vadd.f32 %v328, %v338
    %v340 = vunpack.c.l.bf16 %v277
    %v341 = vsub.f32 %v340, %v318
    %v342 = vmul.f32 %v341, 1.442695
    %v343 = vpow.pop %v342
    %v344 = vadd.f32 %v333, %v343
    %v345 = vsub.f32 %v262, 2.0
    %v346 = vand.u32 2147483647, %v345
    %v347 = vsub.f32 1.0, %v346
    %v348 = vmax.f32 %v347, 0.0
    %v349 = vmul.f32 %v340, %v348
    %v350 = vadd.f32 %v339, %v349
    %v351 = vunpack.c.l.bf16 %v280
    %v352 = vsub.f32 %v351, %v318
    %v353 = vmul.f32 %v352, 1.442695
    %v354 = vpow.pop %v353
    %v355 = vadd.f32 %v344, %v354
    %v356 = vsub.f32 %v262, 3.0
    %v357 = vand.u32 2147483647, %v356
    %v358 = vsub.f32 1.0, %v357
    %v359 = vmax.f32 %v358, 0.0
    %v360 = vmul.f32 %v351, %v359
    %v361 = vadd.f32 %v350, %v360
    %v362 = vunpack.c.l.bf16 %v283
    %v363 = vsub.f32 %v362, %v318
    %v364 = vmul.f32 %v363, 1.442695
    %v365 = vpow.pop %v364
    %v366 = vadd.f32 %v355, %v365
    %v367 = vsub.f32 %v262, 4.0
    %v368 = vand.u32 2147483647, %v367
    %v369 = vsub.f32 1.0, %v368
    %v370 = vmax.f32 %v369, 0.0
    %v371 = vmul.f32 %v362, %v370
    %v372 = vadd.f32 %v361, %v371
    %v373 = vunpack.c.l.bf16 %v286
    %v374 = vsub.f32 %v373, %v318
    %v375 = vmul.f32 %v374, 1.442695
    %v376 = vpow.pop %v375
    %v377 = vadd.f32 %v366, %v376
    %v378 = vsub.f32 %v262, 5.0
    %v379 = vand.u32 2147483647, %v378
    %v380 = vsub.f32 1.0, %v379
    %v381 = vmax.f32 %v380, 0.0
    %v382 = vmul.f32 %v373, %v381
    %v383 = vadd.f32 %v372, %v382
    %v384 = vunpack.c.l.bf16 %v289
    %v385 = vsub.f32 %v384, %v318
    %v386 = vmul.f32 %v385, 1.442695
    %v387 = vpow.pop %v386
    %v388 = vadd.f32 %v377, %v387
    %v389 = vsub.f32 %v262, 6.0
    %v390 = vand.u32 2147483647, %v389
    %v391 = vsub.f32 1.0, %v390
    %v392 = vmax.f32 %v391, 0.0
    %v393 = vmul.f32 %v384, %v392
    %v394 = vadd.f32 %v383, %v393
    %v395 = vunpack.c.l.bf16 %v292
    %v396 = vsub.f32 %v395, %v318
    %v397 = vmul.f32 %v396, 1.442695
    %v398 = vpow.pop %v397
    %v399 = vadd.f32 %v388, %v398
    %v400 = vsub.f32 %v262, 7.0
    %v401 = vand.u32 2147483647, %v400
    %v402 = vsub.f32 1.0, %v401
    %v403 = vmax.f32 %v402, 0.0
    %v404 = vmul.f32 %v395, %v403
    %v405 = vadd.f32 %v394, %v404
    %v406 = vunpack.c.l.bf16 %v295
    %v407 = vsub.f32 %v406, %v318
    %v408 = vmul.f32 %v407, 1.442695
    %v409 = vpow.pop %v408
    %v410 = vadd.f32 %v399, %v409
    %v411 = vsub.f32 %v262, 8.0
    %v412 = vand.u32 2147483647, %v411
    %v413 = vsub.f32 1.0, %v412
    %v414 = vmax.f32 %v413, 0.0
    %v415 = vmul.f32 %v406, %v414
    %v416 = vadd.f32 %v405, %v415
    %v417 = vunpack.c.l.bf16 %v298
    %v418 = vsub.f32 %v417, %v318
    %v419 = vmul.f32 %v418, 1.442695
    %v420 = vpow.pop %v419
    %v421 = vadd.f32 %v410, %v420
    %v422 = vsub.f32 %v262, 9.0
    %v423 = vand.u32 2147483647, %v422
    %v424 = vsub.f32 1.0, %v423
    %v425 = vmax.f32 %v424, 0.0
    %v426 = vmul.f32 %v417, %v425
    %v427 = vadd.f32 %v416, %v426
    %v428 = vunpack.c.l.bf16 %v301
    %v429 = vsub.f32 %v428, %v318
    %v430 = vmul.f32 %v429, 1.442695
    %v431 = vpow.pop %v430
    %v432 = vadd.f32 %v421, %v431
    %v433 = vsub.f32 %v262, 10.0
    %v434 = vand.u32 2147483647, %v433
    %v435 = vsub.f32 1.0, %v434
    %v436 = vmax.f32 %v435, 0.0
    %v437 = vmul.f32 %v428, %v436
    %v438 = vadd.f32 %v427, %v437
    %v439 = vunpack.c.l.bf16 %v304
    %v440 = vsub.f32 %v439, %v318
    %v441 = vmul.f32 %v440, 1.442695
    %v442 = vpow.pop %v441
    %v443 = vadd.f32 %v432, %v442
    %v444 = vsub.f32 %v262, 11.0
    %v445 = vand.u32 2147483647, %v444
    %v446 = vsub.f32 1.0, %v445
    %v447 = vmax.f32 %v446, 0.0
    %v448 = vmul.f32 %v439, %v447
    %v449 = vadd.f32 %v438, %v448
    %v450 = vunpack.c.l.bf16 %v307
    %v451 = vsub.f32 %v450, %v318
    %v452 = vmul.f32 %v451, 1.442695
    %v453 = vpow.pop %v452
    %v454 = vadd.f32 %v443, %v453
    %v455 = vsub.f32 %v262, 12.0
    %v456 = vand.u32 2147483647, %v455
    %v457 = vsub.f32 1.0, %v456
    %v458 = vmax.f32 %v457, 0.0
    %v459 = vmul.f32 %v450, %v458
    %v460 = vadd.f32 %v449, %v459
    %v461 = vunpack.c.l.bf16 %v310
    %v462 = vsub.f32 %v461, %v318
    %v463 = vmul.f32 %v462, 1.442695
    %v464 = vpow.pop %v463
    %v465 = vadd.f32 %v454, %v464
    %v466 = vsub.f32 %v262, 13.0
    %v467 = vand.u32 2147483647, %v466
    %v468 = vsub.f32 1.0, %v467
    %v469 = vmax.f32 %v468, 0.0
    %v470 = vmul.f32 %v461, %v469
    %v471 = vadd.f32 %v460, %v470
    %v472 = vunpack.c.l.bf16 %v313
    %v473 = vsub.f32 %v472, %v318
    %v474 = vmul.f32 %v473, 1.442695
    %v475 = vpow.pop %v474
    %v476 = vadd.f32 %v465, %v475
    %v477 = vsub.f32 %v262, 14.0
    %v478 = vand.u32 2147483647, %v477
    %v479 = vsub.f32 1.0, %v478
    %v480 = vmax.f32 %v479, 0.0
    %v481 = vmul.f32 %v472, %v480
    %v482 = vadd.f32 %v471, %v481
    %v483 = vunpack.c.l.bf16 %v316
    %v484 = vsub.f32 %v483, %v318
    %v485 = vmul.f32 %v484, 1.442695
    %v486 = vpow.pop %v485
    %v487 = vadd.f32 %v476, %v486
    %v488 = vsub.f32 %v262, 15.0
    %v489 = vand.u32 2147483647, %v488
    %v490 = vsub.f32 1.0, %v489
    %v491 = vmax.f32 %v490, 0.0
    %v492 = vmul.f32 %v483, %v491
    %v493 = vadd.f32 %v482, %v492
    %v494 = vlog2.pop %v487
    %v495 = vmul.f32 %v494, 0.6931472
    %v496 = vadd.f32 %v495, %v318
    %v497 = vsub.f32 %v496, %v493
    %v498 = vadd.f32 %v497, 0.0
    %s499 = scalar_lea.vmem [#allocation2], 64
    %v500 = vld [vmem:[%s499] sm:$0xf]
    %s501 = scalar_lea.vmem [#allocation2], 68
    %v502 = vld [vmem:[%s501] sm:$0xf]
    %v503 = vmax.bf16 %v500, %v502
    %s504 = scalar_lea.vmem [#allocation2], 72
    %v505 = vld [vmem:[%s504] sm:$0xf]
    %v506 = vmax.bf16 %v503, %v505
    %s507 = scalar_lea.vmem [#allocation2], 76
    %v508 = vld [vmem:[%s507] sm:$0xf]
    %v509 = vmax.bf16 %v506, %v508
    %s510 = scalar_lea.vmem [#allocation2], 80
    %v511 = vld [vmem:[%s510] sm:$0xf]
    %v512 = vmax.bf16 %v509, %v511
    %s513 = scalar_lea.vmem [#allocation2], 84
    %v514 = vld [vmem:[%s513] sm:$0xf]
    %v515 = vmax.bf16 %v512, %v514
    %s516 = scalar_lea.vmem [#allocation2], 88
    %v517 = vld [vmem:[%s516] sm:$0xf]
    %v518 = vmax.bf16 %v515, %v517
    %s519 = scalar_lea.vmem [#allocation2], 92
    %v520 = vld [vmem:[%s519] sm:$0xf]
    %v521 = vmax.bf16 %v518, %v520
    %s522 = scalar_lea.vmem [#allocation2], 96
    %v523 = vld [vmem:[%s522] sm:$0xf]
    %v524 = vmax.bf16 %v521, %v523
    %s525 = scalar_lea.vmem [#allocation2], 100
    %v526 = vld [vmem:[%s525] sm:$0xf]
    %v527 = vmax.bf16 %v524, %v526
    %s528 = scalar_lea.vmem [#allocation2], 104
    %v529 = vld [vmem:[%s528] sm:$0xf]
    %v530 = vmax.bf16 %v527, %v529
    %s531 = scalar_lea.vmem [#allocation2], 108
    %v532 = vld [vmem:[%s531] sm:$0xf]
    %v533 = vmax.bf16 %v530, %v532
    %s534 = scalar_lea.vmem [#allocation2], 112
    %v535 = vld [vmem:[%s534] sm:$0xf]
    %v536 = vmax.bf16 %v533, %v535
    %s537 = scalar_lea.vmem [#allocation2], 116
    %v538 = vld [vmem:[%s537] sm:$0xf]
    %v539 = vmax.bf16 %v536, %v538
    %s540 = scalar_lea.vmem [#allocation2], 120
    %v541 = vld [vmem:[%s540] sm:$0xf]
    %v542 = vmax.bf16 %v539, %v541
    %s543 = scalar_lea.vmem [#allocation2], 124
    %v544 = vld [vmem:[%s543] sm:$0xf]
    %v545 = vmax.bf16 %v542, %v544
    %v546 = vunpack.c.l.bf16 %v545
    %v547 = vunpack.c.l.bf16 %v500
    %v548 = vsub.f32 %v547, %v546
    %v549 = vmul.f32 %v548, 1.442695
    %v550 = vpow.pop %v549
    %v551 = vadd.f32 %v550, 0.0
    %v552 = vand.u32 2147483647, %v265
    %v553 = vsub.f32 1.0, %v552
    %v554 = vmax.f32 %v553, 0.0
    %v555 = vmul.f32 %v547, %v554
    %v556 = vadd.f32 %v555, 0.0
    %v557 = vunpack.c.l.bf16 %v502
    %v558 = vsub.f32 %v557, %v546
    %v559 = vmul.f32 %v558, 1.442695
    %v560 = vpow.pop %v559
    %v561 = vadd.f32 %v551, %v560
    %v562 = vsub.f32 %v265, 1.0
    %v563 = vand.u32 2147483647, %v562
    %v564 = vsub.f32 1.0, %v563
    %v565 = vmax.f32 %v564, 0.0
    %v566 = vmul.f32 %v557, %v565
    %v567 = vadd.f32 %v556, %v566
    %v568 = vunpack.c.l.bf16 %v505
    %v569 = vsub.f32 %v568, %v546
    %v570 = vmul.f32 %v569, 1.442695
    %v571 = vpow.pop %v570
    %v572 = vadd.f32 %v561, %v571
    %v573 = vsub.f32 %v265, 2.0
    %v574 = vand.u32 2147483647, %v573
    %v575 = vsub.f32 1.0, %v574
    %v576 = vmax.f32 %v575, 0.0
    %v577 = vmul.f32 %v568, %v576
    %v578 = vadd.f32 %v567, %v577
    %v579 = vunpack.c.l.bf16 %v508
    %v580 = vsub.f32 %v579, %v546
    %v581 = vmul.f32 %v580, 1.442695
    %v582 = vpow.pop %v581
    %v583 = vadd.f32 %v572, %v582
    %v584 = vsub.f32 %v265, 3.0
    %v585 = vand.u32 2147483647, %v584
    %v586 = vsub.f32 1.0, %v585
    %v587 = vmax.f32 %v586, 0.0
    %v588 = vmul.f32 %v579, %v587
    %v589 = vadd.f32 %v578, %v588
    %v590 = vunpack.c.l.bf16 %v511
    %v591 = vsub.f32 %v590, %v546
    %v592 = vmul.f32 %v591, 1.442695
    %v593 = vpow.pop %v592
    %v594 = vadd.f32 %v583, %v593
    %v595 = vsub.f32 %v265, 4.0
    %v596 = vand.u32 2147483647, %v595
    %v597 = vsub.f32 1.0, %v596
    %v598 = vmax.f32 %v597, 0.0
    %v599 = vmul.f32 %v590, %v598
    %v600 = vadd.f32 %v589, %v599
    %v601 = vunpack.c.l.bf16 %v514
    %v602 = vsub.f32 %v601, %v546
    %v603 = vmul.f32 %v602, 1.442695
    %v604 = vpow.pop %v603
    %v605 = vadd.f32 %v594, %v604
    %v606 = vsub.f32 %v265, 5.0
    %v607 = vand.u32 2147483647, %v606
    %v608 = vsub.f32 1.0, %v607
    %v609 = vmax.f32 %v608, 0.0
    %v610 = vmul.f32 %v601, %v609
    %v611 = vadd.f32 %v600, %v610
    %v612 = vunpack.c.l.bf16 %v517
    %v613 = vsub.f32 %v612, %v546
    %v614 = vmul.f32 %v613, 1.442695
    %v615 = vpow.pop %v614
    %v616 = vadd.f32 %v605, %v615
    %v617 = vsub.f32 %v265, 6.0
    %v618 = vand.u32 2147483647, %v617
    %v619 = vsub.f32 1.0, %v618
    %v620 = vmax.f32 %v619, 0.0
    %v621 = vmul.f32 %v612, %v620
    %v622 = vadd.f32 %v611, %v621
    %v623 = vunpack.c.l.bf16 %v520
    %v624 = vsub.f32 %v623, %v546
    %v625 = vmul.f32 %v624, 1.442695
    %v626 = vpow.pop %v625
    %v627 = vadd.f32 %v616, %v626
    %v628 = vsub.f32 %v265, 7.0
    %v629 = vand.u32 2147483647, %v628
    %v630 = vsub.f32 1.0, %v629
    %v631 = vmax.f32 %v630, 0.0
    %v632 = vmul.f32 %v623, %v631
    %v633 = vadd.f32 %v622, %v632
    %v634 = vunpack.c.l.bf16 %v523
    %v635 = vsub.f32 %v634, %v546
    %v636 = vmul.f32 %v635, 1.442695
    %v637 = vpow.pop %v636
    %v638 = vadd.f32 %v627, %v637
    %v639 = vsub.f32 %v265, 8.0
    %v640 = vand.u32 2147483647, %v639
    %v641 = vsub.f32 1.0, %v640
    %v642 = vmax.f32 %v641, 0.0
    %v643 = vmul.f32 %v634, %v642
    %v644 = vadd.f32 %v633, %v643
    %v645 = vunpack.c.l.bf16 %v526
    %v646 = vsub.f32 %v645, %v546
    %v647 = vmul.f32 %v646, 1.442695
    %v648 = vpow.pop %v647
    %v649 = vadd.f32 %v638, %v648
    %v650 = vsub.f32 %v265, 9.0
    %v651 = vand.u32 2147483647, %v650
    %v652 = vsub.f32 1.0, %v651
    %v653 = vmax.f32 %v652, 0.0
    %v654 = vmul.f32 %v645, %v653
    %v655 = vadd.f32 %v644, %v654
    %v656 = vunpack.c.l.bf16 %v529
    %v657 = vsub.f32 %v656, %v546
    %v658 = vmul.f32 %v657, 1.442695
    %v659 = vpow.pop %v658
    %v660 = vadd.f32 %v649, %v659
    %v661 = vsub.f32 %v265, 10.0
    %v662 = vand.u32 2147483647, %v661
    %v663 = vsub.f32 1.0, %v662
    %v664 = vmax.f32 %v663, 0.0
    %v665 = vmul.f32 %v656, %v664
    %v666 = vadd.f32 %v655, %v665
    %v667 = vunpack.c.l.bf16 %v532
    %v668 = vsub.f32 %v667, %v546
    %v669 = vmul.f32 %v668, 1.442695
    %v670 = vpow.pop %v669
    %v671 = vadd.f32 %v660, %v670
    %v672 = vsub.f32 %v265, 11.0
    %v673 = vand.u32 2147483647, %v672
    %v674 = vsub.f32 1.0, %v673
    %v675 = vmax.f32 %v674, 0.0
    %v676 = vmul.f32 %v667, %v675
    %v677 = vadd.f32 %v666, %v676
    %v678 = vunpack.c.l.bf16 %v535
    %v679 = vsub.f32 %v678, %v546
    %v680 = vmul.f32 %v679, 1.442695
    %v681 = vpow.pop %v680
    %v682 = vadd.f32 %v671, %v681
    %v683 = vsub.f32 %v265, 12.0
    %v684 = vand.u32 2147483647, %v683
    %v685 = vsub.f32 1.0, %v684
    %v686 = vmax.f32 %v685, 0.0
    %v687 = vmul.f32 %v678, %v686
    %v688 = vadd.f32 %v677, %v687
    %v689 = vunpack.c.l.bf16 %v538
    %v690 = vsub.f32 %v689, %v546
    %v691 = vmul.f32 %v690, 1.442695
    %v692 = vpow.pop %v691
    %v693 = vadd.f32 %v682, %v692
    %v694 = vsub.f32 %v265, 13.0
    %v695 = vand.u32 2147483647, %v694
    %v696 = vsub.f32 1.0, %v695
    %v697 = vmax.f32 %v696, 0.0
    %v698 = vmul.f32 %v689, %v697
    %v699 = vadd.f32 %v688, %v698
    %v700 = vunpack.c.l.bf16 %v541
    %v701 = vsub.f32 %v700, %v546
    %v702 = vmul.f32 %v701, 1.442695
    %v703 = vpow.pop %v702
    %v704 = vadd.f32 %v693, %v703
    %v705 = vsub.f32 %v265, 14.0
    %v706 = vand.u32 2147483647, %v705
    %v707 = vsub.f32 1.0, %v706
    %v708 = vmax.f32 %v707, 0.0
    %v709 = vmul.f32 %v700, %v708
    %v710 = vadd.f32 %v699, %v709
    %v711 = vunpack.c.l.bf16 %v544
    %v712 = vsub.f32 %v711, %v546
    %v713 = vmul.f32 %v712, 1.442695
    %v714 = vpow.pop %v713
    %v715 = vadd.f32 %v704, %v714
    %v716 = vsub.f32 %v265, 15.0
    %v717 = vand.u32 2147483647, %v716
    %v718 = vsub.f32 1.0, %v717
    %v719 = vmax.f32 %v718, 0.0
    %v720 = vmul.f32 %v711, %v719
    %v721 = vadd.f32 %v710, %v720
    %v722 = vlog2.pop %v715
    %v723 = vmul.f32 %v722, 0.6931472
    %v724 = vadd.f32 %v723, %v546
    %v725 = vsub.f32 %v724, %v721
    %v726 = vadd.f32 %v498, %v725
    %s727 = scalar_lea.vmem [#allocation2], 128
    %v728 = vld [vmem:[%s727] sm:$0xf]
    %s729 = scalar_lea.vmem [#allocation2], 132
    %v730 = vld [vmem:[%s729] sm:$0xf]
    %v731 = vmax.bf16 %v728, %v730
    %s732 = scalar_lea.vmem [#allocation2], 136
    %v733 = vld [vmem:[%s732] sm:$0xf]
    %v734 = vmax.bf16 %v731, %v733
    %s735 = scalar_lea.vmem [#allocation2], 140
    %v736 = vld [vmem:[%s735] sm:$0xf]
    %v737 = vmax.bf16 %v734, %v736
    %s738 = scalar_lea.vmem [#allocation2], 144
    %v739 = vld [vmem:[%s738] sm:$0xf]
    %v740 = vmax.bf16 %v737, %v739
    %s741 = scalar_lea.vmem [#allocation2], 148
    %v742 = vld [vmem:[%s741] sm:$0xf]
    %v743 = vmax.bf16 %v740, %v742
    %s744 = scalar_lea.vmem [#allocation2], 152
    %v745 = vld [vmem:[%s744] sm:$0xf]
    %v746 = vmax.bf16 %v743, %v745
    %s747 = scalar_lea.vmem [#allocation2], 156
    %v748 = vld [vmem:[%s747] sm:$0xf]
    %v749 = vmax.bf16 %v746, %v748
    %s750 = scalar_lea.vmem [#allocation2], 160
    %v751 = vld [vmem:[%s750] sm:$0xf]
    %v752 = vmax.bf16 %v749, %v751
    %s753 = scalar_lea.vmem [#allocation2], 164
    %v754 = vld [vmem:[%s753] sm:$0xf]
    %v755 = vmax.bf16 %v752, %v754
    %s756 = scalar_lea.vmem [#allocation2], 168
    %v757 = vld [vmem:[%s756] sm:$0xf]
    %v758 = vmax.bf16 %v755, %v757
    %s759 = scalar_lea.vmem [#allocation2], 172
    %v760 = vld [vmem:[%s759] sm:$0xf]
    %v761 = vmax.bf16 %v758, %v760
    %s762 = scalar_lea.vmem [#allocation2], 176
    %v763 = vld [vmem:[%s762] sm:$0xf]
    %v764 = vmax.bf16 %v761, %v763
    %s765 = scalar_lea.vmem [#allocation2], 180
    %v766 = vld [vmem:[%s765] sm:$0xf]
    %v767 = vmax.bf16 %v764, %v766
    %s768 = scalar_lea.vmem [#allocation2], 184
    %v769 = vld [vmem:[%s768] sm:$0xf]
    %v770 = vmax.bf16 %v767, %v769
    %s771 = scalar_lea.vmem [#allocation2], 188
    %v772 = vld [vmem:[%s771] sm:$0xf]
    %v773 = vmax.bf16 %v770, %v772
    %v774 = vunpack.c.l.bf16 %v773
    %v775 = vunpack.c.l.bf16 %v728
    %v776 = vsub.f32 %v775, %v774
    %v777 = vmul.f32 %v776, 1.442695
    %v778 = vpow.pop %v777
    %v779 = vadd.f32 %v778, 0.0
    %v780 = vand.u32 2147483647, %v268
    %v781 = vsub.f32 1.0, %v780
    %v782 = vmax.f32 %v781, 0.0
    %v783 = vmul.f32 %v775, %v782
    %v784 = vadd.f32 %v783, 0.0
    %v785 = vunpack.c.l.bf16 %v730
    %v786 = vsub.f32 %v785, %v774
    %v787 = vmul.f32 %v786, 1.442695
    %v788 = vpow.pop %v787
    %v789 = vadd.f32 %v779, %v788
    %v790 = vsub.f32 %v268, 1.0
    %v791 = vand.u32 2147483647, %v790
    %v792 = vsub.f32 1.0, %v791
    %v793 = vmax.f32 %v792, 0.0
    %v794 = vmul.f32 %v785, %v793
    %v795 = vadd.f32 %v784, %v794
    %v796 = vunpack.c.l.bf16 %v733
    %v797 = vsub.f32 %v796, %v774
    %v798 = vmul.f32 %v797, 1.442695
    %v799 = vpow.pop %v798
    %v800 = vadd.f32 %v789, %v799
    %v801 = vsub.f32 %v268, 2.0
    %v802 = vand.u32 2147483647, %v801
    %v803 = vsub.f32 1.0, %v802
    %v804 = vmax.f32 %v803, 0.0
    %v805 = vmul.f32 %v796, %v804
    %v806 = vadd.f32 %v795, %v805
    %v807 = vunpack.c.l.bf16 %v736
    %v808 = vsub.f32 %v807, %v774
    %v809 = vmul.f32 %v808, 1.442695
    %v810 = vpow.pop %v809
    %v811 = vadd.f32 %v800, %v810
    %v812 = vsub.f32 %v268, 3.0
    %v813 = vand.u32 2147483647, %v812
    %v814 = vsub.f32 1.0, %v813
    %v815 = vmax.f32 %v814, 0.0
    %v816 = vmul.f32 %v807, %v815
    %v817 = vadd.f32 %v806, %v816
    %v818 = vunpack.c.l.bf16 %v739
    %v819 = vsub.f32 %v818, %v774
    %v820 = vmul.f32 %v819, 1.442695
    %v821 = vpow.pop %v820
    %v822 = vadd.f32 %v811, %v821
    %v823 = vsub.f32 %v268, 4.0
    %v824 = vand.u32 2147483647, %v823
    %v825 = vsub.f32 1.0, %v824
    %v826 = vmax.f32 %v825, 0.0
    %v827 = vmul.f32 %v818, %v826
    %v828 = vadd.f32 %v817, %v827
    %v829 = vunpack.c.l.bf16 %v742
    %v830 = vsub.f32 %v829, %v774
    %v831 = vmul.f32 %v830, 1.442695
    %v832 = vpow.pop %v831
    %v833 = vadd.f32 %v822, %v832
    %v834 = vsub.f32 %v268, 5.0
    %v835 = vand.u32 2147483647, %v834
    %v836 = vsub.f32 1.0, %v835
    %v837 = vmax.f32 %v836, 0.0
    %v838 = vmul.f32 %v829, %v837
    %v839 = vadd.f32 %v828, %v838
    %v840 = vunpack.c.l.bf16 %v745
    %v841 = vsub.f32 %v840, %v774
    %v842 = vmul.f32 %v841, 1.442695
    %v843 = vpow.pop %v842
    %v844 = vadd.f32 %v833, %v843
    %v845 = vsub.f32 %v268, 6.0
    %v846 = vand.u32 2147483647, %v845
    %v847 = vsub.f32 1.0, %v846
    %v848 = vmax.f32 %v847, 0.0
    %v849 = vmul.f32 %v840, %v848
    %v850 = vadd.f32 %v839, %v849
    %v851 = vunpack.c.l.bf16 %v748
    %v852 = vsub.f32 %v851, %v774
    %v853 = vmul.f32 %v852, 1.442695
    %v854 = vpow.pop %v853
    %v855 = vadd.f32 %v844, %v854
    %v856 = vsub.f32 %v268, 7.0
    %v857 = vand.u32 2147483647, %v856
    %v858 = vsub.f32 1.0, %v857
    %v859 = vmax.f32 %v858, 0.0
    %v860 = vmul.f32 %v851, %v859
    %v861 = vadd.f32 %v850, %v860
    %v862 = vunpack.c.l.bf16 %v751
    %v863 = vsub.f32 %v862, %v774
    %v864 = vmul.f32 %v863, 1.442695
    %v865 = vpow.pop %v864
    %v866 = vadd.f32 %v855, %v865
    %v867 = vsub.f32 %v268, 8.0
    %v868 = vand.u32 2147483647, %v867
    %v869 = vsub.f32 1.0, %v868
    %v870 = vmax.f32 %v869, 0.0
    %v871 = vmul.f32 %v862, %v870
    %v872 = vadd.f32 %v861, %v871
    %v873 = vunpack.c.l.bf16 %v754
    %v874 = vsub.f32 %v873, %v774
    %v875 = vmul.f32 %v874, 1.442695
    %v876 = vpow.pop %v875
    %v877 = vadd.f32 %v866, %v876
    %v878 = vsub.f32 %v268, 9.0
    %v879 = vand.u32 2147483647, %v878
    %v880 = vsub.f32 1.0, %v879
    %v881 = vmax.f32 %v880, 0.0
    %v882 = vmul.f32 %v873, %v881
    %v883 = vadd.f32 %v872, %v882
    %v884 = vunpack.c.l.bf16 %v757
    %v885 = vsub.f32 %v884, %v774
    %v886 = vmul.f32 %v885, 1.442695
    %v887 = vpow.pop %v886
    %v888 = vadd.f32 %v877, %v887
    %v889 = vsub.f32 %v268, 10.0
    %v890 = vand.u32 2147483647, %v889
    %v891 = vsub.f32 1.0, %v890
    %v892 = vmax.f32 %v891, 0.0
    %v893 = vmul.f32 %v884, %v892
    %v894 = vadd.f32 %v883, %v893
    %v895 = vunpack.c.l.bf16 %v760
    %v896 = vsub.f32 %v895, %v774
    %v897 = vmul.f32 %v896, 1.442695
    %v898 = vpow.pop %v897
    %v899 = vadd.f32 %v888, %v898
    %v900 = vsub.f32 %v268, 11.0
    %v901 = vand.u32 2147483647, %v900
    %v902 = vsub.f32 1.0, %v901
    %v903 = vmax.f32 %v902, 0.0
    %v904 = vmul.f32 %v895, %v903
    %v905 = vadd.f32 %v894, %v904
    %v906 = vunpack.c.l.bf16 %v763
    %v907 = vsub.f32 %v906, %v774
    %v908 = vmul.f32 %v907, 1.442695
    %v909 = vpow.pop %v908
    %v910 = vadd.f32 %v899, %v909
    %v911 = vsub.f32 %v268, 12.0
    %v912 = vand.u32 2147483647, %v911
    %v913 = vsub.f32 1.0, %v912
    %v914 = vmax.f32 %v913, 0.0
    %v915 = vmul.f32 %v906, %v914
    %v916 = vadd.f32 %v905, %v915
    %v917 = vunpack.c.l.bf16 %v766
    %v918 = vsub.f32 %v917, %v774
    %v919 = vmul.f32 %v918, 1.442695
    %v920 = vpow.pop %v919
    %v921 = vadd.f32 %v910, %v920
    %v922 = vsub.f32 %v268, 13.0
    %v923 = vand.u32 2147483647, %v922
    %v924 = vsub.f32 1.0, %v923
    %v925 = vmax.f32 %v924, 0.0
    %v926 = vmul.f32 %v917, %v925
    %v927 = vadd.f32 %v916, %v926
    %v928 = vunpack.c.l.bf16 %v769
    %v929 = vsub.f32 %v928, %v774
    %v930 = vmul.f32 %v929, 1.442695
    %v931 = vpow.pop %v930
    %v932 = vadd.f32 %v921, %v931
    %v933 = vsub.f32 %v268, 14.0
    %v934 = vand.u32 2147483647, %v933
    %v935 = vsub.f32 1.0, %v934
    %v936 = vmax.f32 %v935, 0.0
    %v937 = vmul.f32 %v928, %v936
    %v938 = vadd.f32 %v927, %v937
    %v939 = vunpack.c.l.bf16 %v772
    %v940 = vsub.f32 %v939, %v774
    %v941 = vmul.f32 %v940, 1.442695
    %v942 = vpow.pop %v941
    %v943 = vadd.f32 %v932, %v942
    %v944 = vsub.f32 %v268, 15.0
    %v945 = vand.u32 2147483647, %v944
    %v946 = vsub.f32 1.0, %v945
    %v947 = vmax.f32 %v946, 0.0
    %v948 = vmul.f32 %v939, %v947
    %v949 = vadd.f32 %v938, %v948
    %v950 = vlog2.pop %v943
    %v951 = vmul.f32 %v950, 0.6931472
    %v952 = vadd.f32 %v951, %v774
    %v953 = vsub.f32 %v952, %v949
    %v954 = vadd.f32 %v726, %v953
    %s955 = scalar_lea.vmem [#allocation2], 192
    %v956 = vld [vmem:[%s955] sm:$0xf]
    %s957 = scalar_lea.vmem [#allocation2], 196
    %v958 = vld [vmem:[%s957] sm:$0xf]
    %v959 = vmax.bf16 %v956, %v958
    %s960 = scalar_lea.vmem [#allocation2], 200
    %v961 = vld [vmem:[%s960] sm:$0xf]
    %v962 = vmax.bf16 %v959, %v961
    %s963 = scalar_lea.vmem [#allocation2], 204
    %v964 = vld [vmem:[%s963] sm:$0xf]
    %v965 = vmax.bf16 %v962, %v964
    %s966 = scalar_lea.vmem [#allocation2], 208
    %v967 = vld [vmem:[%s966] sm:$0xf]
    %v968 = vmax.bf16 %v965, %v967
    %s969 = scalar_lea.vmem [#allocation2], 212
    %v970 = vld [vmem:[%s969] sm:$0xf]
    %v971 = vmax.bf16 %v968, %v970
    %s972 = scalar_lea.vmem [#allocation2], 216
    %v973 = vld [vmem:[%s972] sm:$0xf]
    %v974 = vmax.bf16 %v971, %v973
    %s975 = scalar_lea.vmem [#allocation2], 220
    %v976 = vld [vmem:[%s975] sm:$0xf]
    %v977 = vmax.bf16 %v974, %v976
    %s978 = scalar_lea.vmem [#allocation2], 224
    %v979 = vld [vmem:[%s978] sm:$0xf]
    %v980 = vmax.bf16 %v977, %v979
    %s981 = scalar_lea.vmem [#allocation2], 228
    %v982 = vld [vmem:[%s981] sm:$0xf]
    %v983 = vmax.bf16 %v980, %v982
    %s984 = scalar_lea.vmem [#allocation2], 232
    %v985 = vld [vmem:[%s984] sm:$0xf]
    %v986 = vmax.bf16 %v983, %v985
    %s987 = scalar_lea.vmem [#allocation2], 236
    %v988 = vld [vmem:[%s987] sm:$0xf]
    %v989 = vmax.bf16 %v986, %v988
    %s990 = scalar_lea.vmem [#allocation2], 240
    %v991 = vld [vmem:[%s990] sm:$0xf]
    %v992 = vmax.bf16 %v989, %v991
    %s993 = scalar_lea.vmem [#allocation2], 244
    %v994 = vld [vmem:[%s993] sm:$0xf]
    %v995 = vmax.bf16 %v992, %v994
    %s996 = scalar_lea.vmem [#allocation2], 248
    %v997 = vld [vmem:[%s996] sm:$0xf]
    %v998 = vmax.bf16 %v995, %v997
    %s999 = scalar_lea.vmem [#allocation2], 252
    %v1000 = vld [vmem:[%s999] sm:$0xf]
    %v1001 = vmax.bf16 %v998, %v1000
    %v1002 = vunpack.c.l.bf16 %v1001
    %v1003 = vunpack.c.l.bf16 %v956
    %v1004 = vsub.f32 %v1003, %v1002
    %v1005 = vmul.f32 %v1004, 1.442695
    %v1006 = vpow.pop %v1005
    %v1007 = vadd.f32 %v1006, 0.0
    %v1008 = vand.u32 2147483647, %v271
    %v1009 = vsub.f32 1.0, %v1008
    %v1010 = vmax.f32 %v1009, 0.0
    %v1011 = vmul.f32 %v1003, %v1010
    %v1012 = vadd.f32 %v1011, 0.0
    %v1013 = vunpack.c.l.bf16 %v958
    %v1014 = vsub.f32 %v1013, %v1002
    %v1015 = vmul.f32 %v1014, 1.442695
    %v1016 = vpow.pop %v1015
    %v1017 = vadd.f32 %v1007, %v1016
    %v1018 = vsub.f32 %v271, 1.0
    %v1019 = vand.u32 2147483647, %v1018
    %v1020 = vsub.f32 1.0, %v1019
    %v1021 = vmax.f32 %v1020, 0.0
    %v1022 = vmul.f32 %v1013, %v1021
    %v1023 = vadd.f32 %v1012, %v1022
    %v1024 = vunpack.c.l.bf16 %v961
    %v1025 = vsub.f32 %v1024, %v1002
    %v1026 = vmul.f32 %v1025, 1.442695
    %v1027 = vpow.pop %v1026
    %v1028 = vadd.f32 %v1017, %v1027
    %v1029 = vsub.f32 %v271, 2.0
    %v1030 = vand.u32 2147483647, %v1029
    %v1031 = vsub.f32 1.0, %v1030
    %v1032 = vmax.f32 %v1031, 0.0
    %v1033 = vmul.f32 %v1024, %v1032
    %v1034 = vadd.f32 %v1023, %v1033
    %v1035 = vunpack.c.l.bf16 %v964
    %v1036 = vsub.f32 %v1035, %v1002
    %v1037 = vmul.f32 %v1036, 1.442695
    %v1038 = vpow.pop %v1037
    %v1039 = vadd.f32 %v1028, %v1038
    %v1040 = vsub.f32 %v271, 3.0
    %v1041 = vand.u32 2147483647, %v1040
    %v1042 = vsub.f32 1.0, %v1041
    %v1043 = vmax.f32 %v1042, 0.0
    %v1044 = vmul.f32 %v1035, %v1043
    %v1045 = vadd.f32 %v1034, %v1044
    %v1046 = vunpack.c.l.bf16 %v967
    %v1047 = vsub.f32 %v1046, %v1002
    %v1048 = vmul.f32 %v1047, 1.442695
    %v1049 = vpow.pop %v1048
    %v1050 = vadd.f32 %v1039, %v1049
    %v1051 = vsub.f32 %v271, 4.0
    %v1052 = vand.u32 2147483647, %v1051
    %v1053 = vsub.f32 1.0, %v1052
    %v1054 = vmax.f32 %v1053, 0.0
    %v1055 = vmul.f32 %v1046, %v1054
    %v1056 = vadd.f32 %v1045, %v1055
    %v1057 = vunpack.c.l.bf16 %v970
    %v1058 = vsub.f32 %v1057, %v1002
    %v1059 = vmul.f32 %v1058, 1.442695
    %v1060 = vpow.pop %v1059
    %v1061 = vadd.f32 %v1050, %v1060
    %v1062 = vsub.f32 %v271, 5.0
    %v1063 = vand.u32 2147483647, %v1062
    %v1064 = vsub.f32 1.0, %v1063
    %v1065 = vmax.f32 %v1064, 0.0
    %v1066 = vmul.f32 %v1057, %v1065
    %v1067 = vadd.f32 %v1056, %v1066
    %v1068 = vunpack.c.l.bf16 %v973
    %v1069 = vsub.f32 %v1068, %v1002
    %v1070 = vmul.f32 %v1069, 1.442695
    %v1071 = vpow.pop %v1070
    %v1072 = vadd.f32 %v1061, %v1071
    %v1073 = vsub.f32 %v271, 6.0
    %v1074 = vand.u32 2147483647, %v1073
    %v1075 = vsub.f32 1.0, %v1074
    %v1076 = vmax.f32 %v1075, 0.0
    %v1077 = vmul.f32 %v1068, %v1076
    %v1078 = vadd.f32 %v1067, %v1077
    %v1079 = vunpack.c.l.bf16 %v976
    %v1080 = vsub.f32 %v1079, %v1002
    %v1081 = vmul.f32 %v1080, 1.442695
    %v1082 = vpow.pop %v1081
    %v1083 = vadd.f32 %v1072, %v1082
    %v1084 = vsub.f32 %v271, 7.0
    %v1085 = vand.u32 2147483647, %v1084
    %v1086 = vsub.f32 1.0, %v1085
    %v1087 = vmax.f32 %v1086, 0.0
    %v1088 = vmul.f32 %v1079, %v1087
    %v1089 = vadd.f32 %v1078, %v1088
    %v1090 = vunpack.c.l.bf16 %v979
    %v1091 = vsub.f32 %v1090, %v1002
    %v1092 = vmul.f32 %v1091, 1.442695
    %v1093 = vpow.pop %v1092
    %v1094 = vadd.f32 %v1083, %v1093
    %v1095 = vsub.f32 %v271, 8.0
    %v1096 = vand.u32 2147483647, %v1095
    %v1097 = vsub.f32 1.0, %v1096
    %v1098 = vmax.f32 %v1097, 0.0
    %v1099 = vmul.f32 %v1090, %v1098
    %v1100 = vadd.f32 %v1089, %v1099
    %v1101 = vunpack.c.l.bf16 %v982
    %v1102 = vsub.f32 %v1101, %v1002
    %v1103 = vmul.f32 %v1102, 1.442695
    %v1104 = vpow.pop %v1103
    %v1105 = vadd.f32 %v1094, %v1104
    %v1106 = vsub.f32 %v271, 9.0
    %v1107 = vand.u32 2147483647, %v1106
    %v1108 = vsub.f32 1.0, %v1107
    %v1109 = vmax.f32 %v1108, 0.0
    %v1110 = vmul.f32 %v1101, %v1109
    %v1111 = vadd.f32 %v1100, %v1110
    %v1112 = vunpack.c.l.bf16 %v985
    %v1113 = vsub.f32 %v1112, %v1002
    %v1114 = vmul.f32 %v1113, 1.442695
    %v1115 = vpow.pop %v1114
    %v1116 = vadd.f32 %v1105, %v1115
    %v1117 = vsub.f32 %v271, 10.0
    %v1118 = vand.u32 2147483647, %v1117
    %v1119 = vsub.f32 1.0, %v1118
    %v1120 = vmax.f32 %v1119, 0.0
    %v1121 = vmul.f32 %v1112, %v1120
    %v1122 = vadd.f32 %v1111, %v1121
    %v1123 = vunpack.c.l.bf16 %v988
    %v1124 = vsub.f32 %v1123, %v1002
    %v1125 = vmul.f32 %v1124, 1.442695
    %v1126 = vpow.pop %v1125
    %v1127 = vadd.f32 %v1116, %v1126
    %v1128 = vsub.f32 %v271, 11.0
    %v1129 = vand.u32 2147483647, %v1128
    %v1130 = vsub.f32 1.0, %v1129
    %v1131 = vmax.f32 %v1130, 0.0
    %v1132 = vmul.f32 %v1123, %v1131
    %v1133 = vadd.f32 %v1122, %v1132
    %v1134 = vunpack.c.l.bf16 %v991
    %v1135 = vsub.f32 %v1134, %v1002
    %v1136 = vmul.f32 %v1135, 1.442695
    %v1137 = vpow.pop %v1136
    %v1138 = vadd.f32 %v1127, %v1137
    %v1139 = vsub.f32 %v271, 12.0
    %v1140 = vand.u32 2147483647, %v1139
    %v1141 = vsub.f32 1.0, %v1140
    %v1142 = vmax.f32 %v1141, 0.0
    %v1143 = vmul.f32 %v1134, %v1142
    %v1144 = vadd.f32 %v1133, %v1143
    %v1145 = vunpack.c.l.bf16 %v994
    %v1146 = vsub.f32 %v1145, %v1002
    %v1147 = vmul.f32 %v1146, 1.442695
    %v1148 = vpow.pop %v1147
    %v1149 = vadd.f32 %v1138, %v1148
    %v1150 = vsub.f32 %v271, 13.0
    %v1151 = vand.u32 2147483647, %v1150
    %v1152 = vsub.f32 1.0, %v1151
    %v1153 = vmax.f32 %v1152, 0.0
    %v1154 = vmul.f32 %v1145, %v1153
    %v1155 = vadd.f32 %v1144, %v1154
    %v1156 = vunpack.c.l.bf16 %v997
    %v1157 = vsub.f32 %v1156, %v1002
    %v1158 = vmul.f32 %v1157, 1.442695
    %v1159 = vpow.pop %v1158
    %v1160 = vadd.f32 %v1149, %v1159
    %v1161 = vsub.f32 %v271, 14.0
    %v1162 = vand.u32 2147483647, %v1161
    %v1163 = vsub.f32 1.0, %v1162
    %v1164 = vmax.f32 %v1163, 0.0
    %v1165 = vmul.f32 %v1156, %v1164
    %v1166 = vadd.f32 %v1155, %v1165
    %v1167 = vunpack.c.l.bf16 %v1000
    %v1168 = vsub.f32 %v1167, %v1002
    %v1169 = vmul.f32 %v1168, 1.442695
    %v1170 = vpow.pop %v1169
    %v1171 = vadd.f32 %v1160, %v1170
    %v1172 = vsub.f32 %v271, 15.0
    %v1173 = vand.u32 2147483647, %v1172
    %v1174 = vsub.f32 1.0, %v1173
    %v1175 = vmax.f32 %v1174, 0.0
    %v1176 = vmul.f32 %v1167, %v1175
    %v1177 = vadd.f32 %v1166, %v1176
    %v1178 = vlog2.pop %v1171
    %v1179 = vmul.f32 %v1178, 0.6931472
    %v1180 = vadd.f32 %v1179, %v1002
    %v1181 = vsub.f32 %v1180, %v1177
    %v1182 = vadd.f32 %v954, %v1181
    %v1183 = vmul.f32 %v104, 0.25
    %v1184 = vmul.f32 %v1182, %v1183
    %v1185 = vsel %vm105, %v1184, 0.0
    %1186 = vadd.xlane.f32.xlu0 %v1185
    %v1187 = vpop.xlane.xlu0 %1186
    %v1188 = vrot.slane %v1187, 4
    %v1189 = vadd.f32 %v1187, %v1188
    %v1190 = vrot.slane %v1189, 2
    %v1191 = vadd.f32 %v1189, %v1190
    %v1192 = vrot.slane %v1191, 1
    %v1193 = vadd.f32 %v1191, %v1192
    %s1194 = vtos %v1193
    %v1195 = vlaneseq
    %v1196 = vand.u32 %v1195, 127
    %vm1197 = vcmp.eq.s32.totalorder %v1196, 0
    %vm1198 = vcmp.eq.s32.totalorder %v1196, 1
    %v1199 = vstv %s1194
    %v1200 = vsel %vm1198, %v1199, 0.0
    %v1201 = vstv %s259
    %v1202 = vsel %vm1197, %v1201, %v1200
    %1203 = vst [vmem:[#allocation11] sm:$0x1] %v1202
    // Predicated region
    $region42: #{tpu_custom_call.1} parent=1 // pred_check
      _
    $region43: #{tpu_custom_call.1} parent=1 // pred_check_branch
      %1205 = sbr.rel (0) target = $region45
    $region44: #{tpu_custom_call.1} parent=1 // pred_region
      %s1207 = ssub.s32 16, 16
      %1208 = vsyncadd [#allocation4], %s1207
      %s1210 = sshll.u32 [#allocation11], 4
      %s1211 = int_to_ptr.vmem [resolvable:$true] %s1210
      %1213 = dma.vmem_to_hbm [thread:$0]  %s1211, 16, %s5, [#allocation4]
    $region45: #{tpu_custom_call.1} parent=1 // pred_fallthru
      _
    // Predicated region
    $region46: #{tpu_custom_call.1} parent=1 // pred_check
      _
    $region47: #{tpu_custom_call.1} parent=1 // pred_check_branch
      %1215 = sbr.rel (0) target = $region49
    $region48: #{tpu_custom_call.1} parent=1 // pred_region
      %1216 = dma.done [#allocation4], 16
    $region49: #{tpu_custom_call.1} parent=1 // pred_fallthru
      _
    %1217 = vsyncpa [#allocation3], 1
    %1218 = vsyncpa [#allocation6], 1
    %1219 = vsyncpa [#allocation9], 1
    %1220 = vsyncpa [#allocation4], 1

</llo_original>
